<compile_context>
chip_gen: v7x
topology: tpu7x:2x2x1
jax: 0.10.0
libtpu: 0.0.40
codegen_flags: <defaults>
</compile_context>

<pallas_src>
import jax
import jax.numpy as jnp
from jax import lax
from jax.experimental import pallas as pl
from jax.experimental.pallas import tpu as pltpu  # noqa: F401  (TPU backend assumed)

# ---------------- configuration (small, deterministic) ----------------
B = 2            # batch
E = 32           # controller input size
N_MEM = 32       # memory_size
W_WORD = 16      # word_size
R_READS = 2      # num_reads
NW = 1           # num_writes
NUM_READ_MODES = 1 + 2 * NW
EPS = 1e-6
F32 = jnp.float32

# Controller-projection column layout (shared by kernel and pure-JAX reference).
_CTRL_DIMS = (
    ('write_vectors', NW * W_WORD),
    ('erase_vectors', NW * W_WORD),
    ('free_gate', R_READS),
    ('alloc_gate', NW),
    ('write_gate', NW),
    ('read_mode', R_READS * NUM_READ_MODES),
    ('write_keys', NW * W_WORD),
    ('write_strengths', NW),
    ('read_keys', R_READS * W_WORD),
    ('read_strengths', R_READS),
)
_OFF = {}
_cursor = 0
for _name, _d in _CTRL_DIMS:
    _OFF[_name] = _cursor
    _cursor += _d
CTRL_WIDTH = _cursor             # 93
CTRL_WIDTH_PAD = 128             # lane-dense controller projection width


# ---------------- the single fused Pallas kernel ----------------
def _dnc_step_kernel(x_ref, w_ref, b_ref,
                     mem_ref, rw_ref, ww_ref, link_ref, prec_ref, usage_ref,
                     read_words_ref, mem_out_ref, rw_out_ref, ww_out_ref,
                     link_out_ref, prec_out_ref, usage_out_ref):
    def sig(v):
        return 1.0 / (1.0 + jnp.exp(-v))

    def softplus(v):
        return jnp.maximum(v, 0.0) + jnp.log(1.0 + jnp.exp(-jnp.abs(v)))

    # ---- fused controller projection: one lane-dense (E x 128) MXU matmul ----
    ctrl = jnp.dot(x_ref[...], w_ref[...], preferred_element_type=F32) + b_ref[...]

    # ---- usage / freeness update (batched over B, pure VPU) ----
    prev_usage = usage_ref[...]                                            # (B, N)
    fg = sig(ctrl[:, _OFF['free_gate']:_OFF['free_gate'] + R_READS])       # (B, R)
    prod_w = jnp.ones_like(prev_usage)
    for w in range(NW):
        prod_w = prod_w * (1.0 - ww_ref[:, w, :])
    usage = prev_usage + (1.0 - prev_usage) * (1.0 - prod_w)               # after write
    phi = jnp.ones_like(prev_usage)
    for r in range(R_READS):
        phi = phi * (1.0 - fg[:, r:r + 1] * rw_ref[:, r, :])
    usage = usage * phi                                                    # after free
    usage_out_ref[...] = usage

    # ---- constants shared by linkage & allocation (hoisted out of loops) ----
    row = lax.broadcasted_iota(jnp.int32, (N_MEM, N_MEM), 0)   # j index (sublane)
    col = lax.broadcasted_iota(jnp.int32, (N_MEM, N_MEM), 1)   # i index (lane)
    diag = row == col
    j_lt_i = row < col

    def content_weights(mem, key, s_raw):
        # mem (N, W), key (1, W), s_raw (1, 1) -> softmaxed weights (1, N)
        dot = lax.dot_general(key, mem, (((1,), (1,)), ((), ())),
                              preferred_element_type=F32)                  # (1, N)
        mem_norm = jnp.sqrt(jnp.sum(mem * mem, axis=-1, keepdims=True) + EPS)   # (N, 1)
        key_norm = jnp.sqrt(jnp.sum(key * key, axis=-1, keepdims=True) + EPS)   # (1, 1)
        sim = dot / (key_norm * mem_norm.T + EPS)
        scores = sim * softplus(s_raw)
        scores = scores - jnp.max(scores, axis=-1, keepdims=True)
        e = jnp.exp(scores)
        return e / jnp.sum(e, axis=-1, keepdims=True)

    def allocation(u_row):
        # Sort-free freeness allocation for N=32: rank matrix + masked log-sum.
        # alloc_i = (1 - u_i) * prod_{j ranked before i} u_j, rank = ascending
        # usage with ties broken by lower index (matches lax.top_k ordering).
        u = EPS + (1.0 - EPS) * u_row                                     # (1, N)
        u_col = u.T                                                       # (N, 1)
        before = jnp.logical_or(u_col < u, jnp.logical_and(u_col == u, j_lt_i))
        before_f = jnp.where(before, 1.0, 0.0)                            # (N, N)
        masked_log = before_f * jnp.log(u_col)                            # (N, N)
        logprod = jnp.sum(masked_log, axis=0, keepdims=True)              # (1, N)
        return (1.0 - u) * jnp.exp(logprod)

    # ---- per-batch body (B=2, statically unrolled), everything stays in VMEM ----
    for b in range(B):
        cb = ctrl[b:b + 1, :]                                             # (1, 128)

        def seg(name, extra, width):
            lo = _OFF[name] + extra
            return cb[:, lo:lo + width]

        mem_prev = mem_ref[b]                                             # (N, W)
        prw = rw_ref[b]                                                   # (R, N)
        prec_prev = prec_ref[b]                                           # (NW, N)
        usage_b = usage[b:b + 1, :]                                       # (1, N)

        # -------- write weights: content lookup + allocation blend --------
        u_alloc = usage_b
        write_heads = []
        for w in range(NW):
            ag = sig(seg('alloc_gate', w, 1))                             # (1, 1)
            wg = sig(seg('write_gate', w, 1))                             # (1, 1)
            a_w = allocation(u_alloc)                                     # (1, N)
            u_alloc = u_alloc + (1.0 - u_alloc) * (ag * wg) * a_w
            wcw = content_weights(mem_prev,
                                  seg('write_keys', w * W_WORD, W_WORD),
                                  seg('write_strengths', w, 1))           # (1, N)
            ww_w = wg * (ag * a_w + (1.0 - ag) * wcw)                     # (1, N)
            write_heads.append(ww_w)
            ww_out_ref[b, w:w + 1, :] = ww_w

        # -------- erase and write --------
        reset = jnp.ones_like(mem_prev)                                   # (N, W)
        add = jnp.zeros_like(mem_prev)
        for w in range(NW):
            a_col = write_heads[w].T                                      # (N, 1)
            erase_w = sig(seg('erase_vectors', w * W_WORD, W_WORD))       # (1, W)
            write_vec_w = seg('write_vectors', w * W_WORD, W_WORD)        # (1, W)
            reset = reset * (1.0 - a_col * erase_w)
            add = add + a_col * write_vec_w                               # outer product
        new_mem = mem_prev * reset + add
        mem_out_ref[b] = new_mem

        # -------- temporal linkage + precedence --------
        new_links = []
        for w in range(NW):
            ww_row = write_heads[w]                                       # (1, N)
            pp_row = prec_prev[w:w + 1, :]                                # (1, N)
            plink = link_ref[b, w]                                        # (N, N)
            wi = ww_row.T                                                 # (N, 1)
            new_link = (1.0 - wi - ww_row) * plink + wi * pp_row
            new_link = jnp.where(diag, 0.0, new_link)
            link_out_ref[b, w] = new_link
            new_links.append(new_link)
            wsum = jnp.sum(ww_row, axis=-1, keepdims=True)                # (1, 1)
            prec_out_ref[b, w:w + 1, :] = (1.0 - wsum) * pp_row + ww_row

        # -------- read weights (content + forward/backward) + read words --------
        for r in range(R_READS):
            rm = seg('read_mode', r * NUM_READ_MODES, NUM_READ_MODES)     # (1, 1+2*NW)
            rm = rm - jnp.max(rm, axis=-1, keepdims=True)
            rm = jnp.exp(rm)
            rm = rm / jnp.sum(rm, axis=-1, keepdims=True)

            rcw = content_weights(new_mem,
                                  seg('read_keys', r * W_WORD, W_WORD),
                                  seg('read_strengths', r, 1))            # (1, N)
            prw_r = prw[r:r + 1, :]                                       # (1, N)
            acc = rm[:, 2 * NW:2 * NW + 1] * rcw
            for w in range(NW):
                L = new_links[w]
                fwd = lax.dot_general(prw_r, L, (((1,), (1,)), ((), ())),
                                      preferred_element_type=F32)         # prw @ L^T
                bwd = jnp.dot(prw_r, L, preferred_element_type=F32)       # prw @ L
                acc = acc + rm[:, NW + w:NW + w + 1] * fwd + rm[:, w:w + 1] * bwd
            rw_out_ref[b, r:r + 1, :] = acc
            read_words_ref[b, r:r + 1, :] = jnp.dot(acc, new_mem,
                                                    preferred_element_type=F32)


def memory_access_forward(x, prev_state, params):
    big_w, big_b, _ = params
    out_shape = (
        jax.ShapeDtypeStruct((B, R_READS, W_WORD), F32),     # read_words
        jax.ShapeDtypeStruct((B, N_MEM, W_WORD), F32),       # memory
        jax.ShapeDtypeStruct((B, R_READS, N_MEM), F32),      # read_weights
        jax.ShapeDtypeStruct((B, NW, N_MEM), F32),           # write_weights
        jax.ShapeDtypeStruct((B, NW, N_MEM, N_MEM), F32),    # link
        jax.ShapeDtypeStruct((B, NW, N_MEM), F32),           # precedence
        jax.ShapeDtypeStruct((B, N_MEM), F32),               # usage
    )
    (read_words, memory, read_weights, write_weights,
     link, precedence, usage) = pl.pallas_call(
        _dnc_step_kernel,
        out_shape=out_shape,
    )(x, big_w, big_b,
      prev_state['memory'], prev_state['read_weights'],
      prev_state['write_weights'], prev_state['link'],
      prev_state['precedence'], prev_state['usage'])
    next_state = dict(memory=memory, read_weights=read_weights,
                      write_weights=write_weights, link=link,
                      precedence=precedence, usage=usage)
    return read_words, next_state


# ---------------- parameters ----------------
def init_params(key):
    keys = jax.random.split(key, 2 * len(_CTRL_DIMS))
    ws, bs, slices = [], [], {}
    for i, (name, d) in enumerate(_CTRL_DIMS):
        w = jax.random.normal(keys[2 * i], (E, d), F32) / jnp.sqrt(float(E))
        b = jax.random.normal(keys[2 * i + 1], (d,), F32) * 0.01
        ws.append(w)
        bs.append(b)
        slices[name] = (_OFF[name], _OFF[name] + d)
    big_w = jnp.concatenate(ws, axis=1)
    big_b = jnp.concatenate(bs)[None, :]
    pad = CTRL_WIDTH_PAD - CTRL_WIDTH
    big_w = jnp.pad(big_w, ((0, 0), (0, pad)))      # zero-padded -> lane-dense matmul
    big_b = jnp.pad(big_b, ((0, 0), (0, pad)))
    return big_w, big_b, slices


# ---------------- pure-JAX reference (for validation only) ----------------
def split_controls(out, slices):
    def seg(name):
        lo, hi = slices[name]
        return out[:, lo:hi]
    ctrl = {
        'write_vectors': seg('write_vectors').reshape(B, NW, W_WORD),
        'erase_vectors': jax.nn.sigmoid(seg('erase_vectors')).reshape(B, NW, W_WORD),
        'free_gate': jax.nn.sigmoid(seg('free_gate')),
        'allocation_gate': jax.nn.sigmoid(seg('alloc_gate')),
        'write_gate': jax.nn.sigmoid(seg('write_gate')),
        'read_mode': jax.nn.softmax(
            seg('read_mode').reshape(B, R_READS, NUM_READ_MODES), axis=-1),
        'write_content_keys': seg('write_keys').reshape(B, NW, W_WORD),
        'write_content_strengths': seg('write_strengths'),
        'read_content_keys': seg('read_keys').reshape(B, R_READS, W_WORD),
        'read_content_strengths': seg('read_strengths'),
    }
    return ctrl


def _allocation(usage):
    usage = EPS + (1.0 - EPS) * usage
    nonusage = 1.0 - usage
    sorted_nonusage, indices = lax.top_k(nonusage, N_MEM)
    sorted_usage = 1.0 - sorted_nonusage
    shifted = jnp.concatenate(
        [jnp.ones_like(sorted_usage[:, :1]), sorted_usage[:, :-1]], axis=-1)
    prod_sorted = jnp.cumprod(shifted, axis=-1)
    sorted_alloc = sorted_nonusage * prod_sorted
    inv = jnp.argsort(indices, axis=-1)
    return jnp.take_along_axis(sorted_alloc, inv, axis=-1)


def write_allocation_weights(usage, write_gates):
    allocs = []
    for i in range(NW):
        a = _allocation(usage)
        allocs.append(a)
        usage = usage + (1.0 - usage) * write_gates[:, i:i + 1] * a
    return jnp.stack(allocs, axis=1)


def ref_forward(x, prev, params):
    big_w, big_b, slices = params
    ctrl = split_controls(x @ big_w + big_b, slices)

    pu = prev['usage']
    write_w = 1.0 - jnp.prod(1.0 - prev['write_weights'], axis=1)
    usage = pu + (1.0 - pu) * write_w
    phi = jnp.prod(1.0 - ctrl['free_gate'][..., None] * prev['read_weights'], axis=1)
    usage = usage * phi

    def cos(memory, keys, strengths):
        dot = jnp.einsum('bhw,bnw->bhn', keys, memory)
        mn = jnp.sqrt(jnp.sum(memory ** 2, -1) + EPS)
        kn = jnp.sqrt(jnp.sum(keys ** 2, -1) + EPS)
        sim = dot / (kn[:, :, None] * mn[:, None, :] + EPS)
        return jax.nn.softmax(sim * jax.nn.softplus(strengths)[..., None], axis=-1)

    wcw = cos(prev['memory'], ctrl['write_content_keys'],
              ctrl['write_content_strengths'])
    alloc_w = write_allocation_weights(usage,
                                       ctrl['allocation_gate'] * ctrl['write_gate'])
    ag = ctrl['allocation_gate'][..., None]
    wg = ctrl['write_gate'][..., None]
    write_weights = wg * (ag * alloc_w + (1.0 - ag) * wcw)

    weighted_resets = write_weights[..., None] * ctrl['erase_vectors'][:, :, None, :]
    reset_gate = jnp.prod(1.0 - weighted_resets, axis=1)
    memory = prev['memory'] * reset_gate + jnp.einsum(
        'bwn,bwk->bnk', write_weights, ctrl['write_vectors'])

    wi = write_weights[..., :, None]
    wj = write_weights[..., None, :]
    ppj = prev['precedence'][..., None, :]
    link = (1.0 - wi - wj) * prev['link'] + wi * ppj
    link = link * (1.0 - jnp.eye(N_MEM, dtype=F32))[None, None]
    wsum = jnp.sum(write_weights, axis=-1, keepdims=True)
    precedence = (1.0 - wsum) * prev['precedence'] + write_weights

    rcw = cos(memory, ctrl['read_content_keys'], ctrl['read_content_strengths'])
    prw = prev['read_weights']
    fwd = jnp.einsum('brn,bwmn->brwm', prw, link)
    bwd = jnp.einsum('brn,bwnm->brwm', prw, link)
    rm = ctrl['read_mode']
    read_weights = (rm[:, :, None, 2 * NW] * rcw
                    + jnp.sum(rm[:, :, NW:2 * NW, None] * fwd, axis=2)
                    + jnp.sum(rm[:, :, :NW, None] * bwd, axis=2))
    read_words = jnp.einsum('brn,bnw->brw', read_weights, memory)
    return read_words, dict(memory=memory, read_weights=read_weights,
                            write_weights=write_weights, link=link,
                            precedence=precedence, usage=usage)


if __name__ == "__main__":
    key = jax.random.PRNGKey(0)
    (k_param, k_x, k_mem, k_rw, k_ww,
     k_link, k_prec, k_usage) = jax.random.split(key, 8)
    params = init_params(k_param)

    x = jax.random.normal(k_x, (B, E), F32)
    eye = jnp.eye(N_MEM, dtype=F32)
    prev_state = dict(
        memory=jax.random.normal(k_mem, (B, N_MEM, W_WORD), F32) * 0.1,
        read_weights=jax.nn.softmax(
            jax.random.normal(k_rw, (B, R_READS, N_MEM), F32), axis=-1),
        write_weights=jax.nn.softmax(
            jax.random.normal(k_ww, (B, NW, N_MEM), F32), axis=-1),
        link=jax.nn.softmax(
            jax.random.normal(k_link, (B, NW, N_MEM, N_MEM), F32), axis=-1)
        * (1.0 - eye),
        precedence=jax.nn.softmax(
            jax.random.normal(k_prec, (B, NW, N_MEM), F32), axis=-1),
        usage=jax.random.uniform(k_usage, (B, N_MEM), F32, 0.0, 0.9),
    )

    read_words, next_state = memory_access_forward(x, prev_state, params)
    jax.block_until_ready(read_words)

    ref_words, ref_state = ref_forward(x, prev_state, params)
    checks = [("read_words", read_words, ref_words),
              ("memory", next_state["memory"], ref_state["memory"]),
              ("read_weights", next_state["read_weights"], ref_state["read_weights"]),
              ("write_weights", next_state["write_weights"], ref_state["write_weights"]),
              ("precedence", next_state["precedence"], ref_state["precedence"]),
              ("usage", next_state["usage"], ref_state["usage"]),
              ("link", next_state["link"], ref_state["link"])]
    for name, got, want in checks:
        assert got.shape == want.shape, (name, got.shape, want.shape)
        if not bool(jnp.allclose(got, want, atol=1e-4, rtol=1e-4)):
            raise AssertionError(f"mismatch in {name}")

    print("KERNEL_OK")
</pallas_src>

<mosaic_0001>
module attributes {stable_mosaic.version = 11 : i64} {
  func.func @_dnc_step_kernel(%arg0: memref<2x32xf32, #tpu.memory_space<vmem>>, %arg1: memref<32x128xf32, #tpu.memory_space<vmem>>, %arg2: memref<1x128xf32, #tpu.memory_space<vmem>>, %arg3: memref<2x32x16xf32, #tpu.memory_space<vmem>>, %arg4: memref<2x2x32xf32, #tpu.memory_space<vmem>>, %arg5: memref<2x1x32xf32, #tpu.memory_space<vmem>>, %arg6: memref<2x1x32x32xf32, #tpu.memory_space<vmem>>, %arg7: memref<2x1x32xf32, #tpu.memory_space<vmem>>, %arg8: memref<2x32xf32, #tpu.memory_space<vmem>>, %arg9: memref<2x2x16xf32, #tpu.memory_space<vmem>>, %arg10: memref<2x32x16xf32, #tpu.memory_space<vmem>>, %arg11: memref<2x2x32xf32, #tpu.memory_space<vmem>>, %arg12: memref<2x1x32xf32, #tpu.memory_space<vmem>>, %arg13: memref<2x1x32x32xf32, #tpu.memory_space<vmem>>, %arg14: memref<2x1x32xf32, #tpu.memory_space<vmem>>, %arg15: memref<2x32xf32, #tpu.memory_space<vmem>>) attributes {dimension_semantics = [], scalar_prefetch = 0 : i64, scratch_operands = 0 : i64, tpu.core_type = #tpu.core_type<tc>} {
    %c0 = arith.constant 0 : index
    %c0_0 = arith.constant 0 : index
    %0 = vector.load %arg0[%c0, %c0_0] : memref<2x32xf32, #tpu.memory_space<vmem>>, vector<2x32xf32>
    %c0_1 = arith.constant 0 : index
    %c0_2 = arith.constant 0 : index
    %1 = vector.load %arg1[%c0_1, %c0_2] : memref<32x128xf32, #tpu.memory_space<vmem>>, vector<32x128xf32>
    %cst = arith.constant dense<0.000000e+00> : vector<2x128xf32>
    %2 = tpu.matmul %0, %1, %cst {dimension_numbers = #tpu.dot_dimension_numbers<[1], [0], [0], [1], [0, 0, 1, 1], [], []>} : vector<2x32xf32>, vector<32x128xf32>, vector<2x128xf32> -> vector<2x128xf32>
    %c0_3 = arith.constant 0 : index
    %c0_4 = arith.constant 0 : index
    %3 = vector.load %arg2[%c0_3, %c0_4] : memref<1x128xf32, #tpu.memory_space<vmem>>, vector<1x128xf32>
    %4 = vector.broadcast %3 : vector<1x128xf32> to vector<2x128xf32>
    %5 = arith.addf %2, %4 : vector<2x128xf32>
    %c0_5 = arith.constant 0 : index
    %c0_6 = arith.constant 0 : index
    %6 = vector.load %arg8[%c0_5, %c0_6] : memref<2x32xf32, #tpu.memory_space<vmem>>, vector<2x32xf32>
    %7 = vector.extract_strided_slice %5 {offsets = [0, 32], sizes = [2, 2], strides = [1, 1]} : vector<2x128xf32> to vector<2x2xf32>
    %cst_7 = arith.constant 0.000000e+00 : f32
    %8 = vector.broadcast %cst_7 : f32 to vector<2x2xf32>
    %9 = arith.subf %8, %7 : vector<2x2xf32>
    %10 = math.exp %9 : vector<2x2xf32>
    %cst_8 = arith.constant 1.000000e+00 : f32
    %11 = vector.broadcast %cst_8 : f32 to vector<2x2xf32>
    %12 = arith.addf %11, %10 : vector<2x2xf32>
    %cst_9 = arith.constant 1.000000e+00 : f32
    %13 = vector.broadcast %cst_9 : f32 to vector<2x2xf32>
    %14 = arith.divf %13, %12 : vector<2x2xf32>
    %cst_10 = arith.constant 1.000000e+00 : f32
    %15 = vector.broadcast %cst_10 : f32 to vector<2x32xf32>
    %c0_11 = arith.constant 0 : index
    %c0_12 = arith.constant 0 : index
    %c0_13 = arith.constant 0 : index
    %16 = vector.load %arg5[%c0_11, %c0_12, %c0_13] : memref<2x1x32xf32, #tpu.memory_space<vmem>>, vector<2x1x32xf32>
    %17 = vector.shape_cast %16 : vector<2x1x32xf32> to vector<2x32xf32>
    %cst_14 = arith.constant 1.000000e+00 : f32
    %18 = vector.broadcast %cst_14 : f32 to vector<2x32xf32>
    %19 = arith.subf %18, %17 : vector<2x32xf32>
    %20 = arith.mulf %15, %19 : vector<2x32xf32>
    %cst_15 = arith.constant 1.000000e+00 : f32
    %21 = vector.broadcast %cst_15 : f32 to vector<2x32xf32>
    %22 = arith.subf %21, %6 : vector<2x32xf32>
    %cst_16 = arith.constant 1.000000e+00 : f32
    %23 = vector.broadcast %cst_16 : f32 to vector<2x32xf32>
    %24 = arith.subf %23, %20 : vector<2x32xf32>
    %25 = arith.mulf %22, %24 : vector<2x32xf32>
    %26 = arith.addf %6, %25 : vector<2x32xf32>
    %cst_17 = arith.constant 1.000000e+00 : f32
    %27 = vector.broadcast %cst_17 : f32 to vector<2x32xf32>
    %28 = vector.extract_strided_slice %14 {offsets = [0, 0], sizes = [2, 1], strides = [1, 1]} : vector<2x2xf32> to vector<2x1xf32>
    %c0_18 = arith.constant 0 : index
    %c0_19 = arith.constant 0 : index
    %c0_20 = arith.constant 0 : index
    %29 = vector.load %arg4[%c0_18, %c0_19, %c0_20] : memref<2x2x32xf32, #tpu.memory_space<vmem>>, vector<2x1x32xf32>
    %30 = vector.shape_cast %29 : vector<2x1x32xf32> to vector<2x32xf32>
    %31 = vector.broadcast %28 : vector<2x1xf32> to vector<2x32xf32>
    %32 = arith.mulf %31, %30 : vector<2x32xf32>
    %cst_21 = arith.constant 1.000000e+00 : f32
    %33 = vector.broadcast %cst_21 : f32 to vector<2x32xf32>
    %34 = arith.subf %33, %32 : vector<2x32xf32>
    %35 = arith.mulf %27, %34 : vector<2x32xf32>
    %36 = vector.extract_strided_slice %14 {offsets = [0, 1], sizes = [2, 1], strides = [1, 1]} : vector<2x2xf32> to vector<2x1xf32>
    %c0_22 = arith.constant 0 : index
    %c1 = arith.constant 1 : index
    %c0_23 = arith.constant 0 : index
    %37 = vector.load %arg4[%c0_22, %c1, %c0_23] : memref<2x2x32xf32, #tpu.memory_space<vmem>>, vector<2x1x32xf32>
    %38 = vector.shape_cast %37 : vector<2x1x32xf32> to vector<2x32xf32>
    %39 = vector.broadcast %36 : vector<2x1xf32> to vector<2x32xf32>
    %40 = arith.mulf %39, %38 : vector<2x32xf32>
    %cst_24 = arith.constant 1.000000e+00 : f32
    %41 = vector.broadcast %cst_24 : f32 to vector<2x32xf32>
    %42 = arith.subf %41, %40 : vector<2x32xf32>
    %43 = arith.mulf %35, %42 : vector<2x32xf32>
    %44 = arith.mulf %26, %43 : vector<2x32xf32>
    %c0_25 = arith.constant 0 : index
    %c0_26 = arith.constant 0 : index
    %45 = vector.load %arg15[%c0_25, %c0_26] : memref<2x32xf32, #tpu.memory_space<vmem>>, vector<2x32xf32>
    tpu.vector_store %arg15[%c0_25, %c0_26], %44 {strides = array<i32>} : memref<2x32xf32, #tpu.memory_space<vmem>>, vector<2x32xf32>,
    %46 = tpu.iota {dimensions = array<i32: 0>} : vector<32x32xi32>
    %47 = tpu.iota {dimensions = array<i32: 1>} : vector<32x32xi32>
    %48 = arith.cmpi eq, %46, %47 : vector<32x32xi32>
    %49 = arith.cmpi slt, %46, %47 : vector<32x32xi32>
    %50 = vector.extract_strided_slice %5 {offsets = [0, 0], sizes = [1, 128], strides = [1, 1]} : vector<2x128xf32> to vector<1x128xf32>
    %c0_27 = arith.constant 0 : index
    %c0_28 = arith.constant 0 : index
    %c0_29 = arith.constant 0 : index
    %51 = vector.load %arg3[%c0_27, %c0_28, %c0_29] : memref<2x32x16xf32, #tpu.memory_space<vmem>>, vector<1x32x16xf32>
    %52 = vector.shape_cast %51 : vector<1x32x16xf32> to vector<32x16xf32>
    %c0_30 = arith.constant 0 : index
    %c0_31 = arith.constant 0 : index
    %c0_32 = arith.constant 0 : index
    %53 = vector.load %arg4[%c0_30, %c0_31, %c0_32] : memref<2x2x32xf32, #tpu.memory_space<vmem>>, vector<1x2x32xf32>
    %54 = vector.shape_cast %53 : vector<1x2x32xf32> to vector<2x32xf32>
    %c0_33 = arith.constant 0 : index
    %c0_34 = arith.constant 0 : index
    %c0_35 = arith.constant 0 : index
    %55 = vector.load %arg7[%c0_33, %c0_34, %c0_35] : memref<2x1x32xf32, #tpu.memory_space<vmem>>, vector<1x1x32xf32>
    %56 = vector.shape_cast %55 : vector<1x1x32xf32> to vector<1x32xf32>
    %57 = vector.extract_strided_slice %44 {offsets = [0, 0], sizes = [1, 32], strides = [1, 1]} : vector<2x32xf32> to vector<1x32xf32>
    %58 = vector.extract_strided_slice %50 {offsets = [0, 34], sizes = [1, 1], strides = [1, 1]} : vector<1x128xf32> to vector<1x1xf32>
    %cst_36 = arith.constant 0.000000e+00 : f32
    %59 = vector.broadcast %cst_36 : f32 to vector<1x1xf32>
    %60 = arith.subf %59, %58 : vector<1x1xf32>
    %61 = math.exp %60 : vector<1x1xf32>
    %cst_37 = arith.constant 1.000000e+00 : f32
    %62 = vector.broadcast %cst_37 : f32 to vector<1x1xf32>
    %63 = arith.addf %62, %61 : vector<1x1xf32>
    %cst_38 = arith.constant 1.000000e+00 : f32
    %64 = vector.broadcast %cst_38 : f32 to vector<1x1xf32>
    %65 = arith.divf %64, %63 : vector<1x1xf32>
    %66 = vector.extract_strided_slice %50 {offsets = [0, 35], sizes = [1, 1], strides = [1, 1]} : vector<1x128xf32> to vector<1x1xf32>
    %cst_39 = arith.constant 0.000000e+00 : f32
    %67 = vector.broadcast %cst_39 : f32 to vector<1x1xf32>
    %68 = arith.subf %67, %66 : vector<1x1xf32>
    %69 = math.exp %68 : vector<1x1xf32>
    %cst_40 = arith.constant 1.000000e+00 : f32
    %70 = vector.broadcast %cst_40 : f32 to vector<1x1xf32>
    %71 = arith.addf %70, %69 : vector<1x1xf32>
    %cst_41 = arith.constant 1.000000e+00 : f32
    %72 = vector.broadcast %cst_41 : f32 to vector<1x1xf32>
    %73 = arith.divf %72, %71 : vector<1x1xf32>
    %cst_42 = arith.constant 0.999998986 : f32
    %74 = vector.broadcast %cst_42 : f32 to vector<1x32xf32>
    %75 = arith.mulf %74, %57 : vector<1x32xf32>
    %cst_43 = arith.constant 9.99999997E-7 : f32
    %76 = vector.broadcast %cst_43 : f32 to vector<1x32xf32>
    %77 = arith.addf %76, %75 : vector<1x32xf32>
    %78 = tpu.transpose %77, [1, 0] : vector<1x32xf32> -> vector<32x1xf32>
    %79 = vector.broadcast %78 : vector<32x1xf32> to vector<32x32xf32>
    %80 = vector.broadcast %77 : vector<1x32xf32> to vector<32x32xf32>
    %81 = arith.cmpf olt, %79, %80 : vector<32x32xf32>
    %82 = vector.broadcast %78 : vector<32x1xf32> to vector<32x32xf32>
    %83 = vector.broadcast %77 : vector<1x32xf32> to vector<32x32xf32>
    %84 = arith.cmpf oeq, %82, %83 : vector<32x32xf32>
    %85 = arith.andi %84, %49 : vector<32x32xi1>
    %86 = arith.ori %81, %85 : vector<32x32xi1>
    %cst_44 = arith.constant 1.000000e+00 : f32
    %cst_45 = arith.constant 0.000000e+00 : f32
    %87 = vector.broadcast %cst_44 : f32 to vector<32x32xf32>
    %88 = vector.broadcast %cst_45 : f32 to vector<32x32xf32>
    %89 = arith.select %86, %87, %88 : vector<32x32xi1>, vector<32x32xf32>
    %90 = math.log %78 : vector<32x1xf32>
    %91 = vector.broadcast %90 : vector<32x1xf32> to vector<32x32xf32>
    %92 = arith.mulf %89, %91 : vector<32x32xf32>
    %cst_46 = arith.constant dense<0.000000e+00> : vector<32xf32>
    %93 = vector.multi_reduction <add>, %92, %cst_46 [0] : vector<32x32xf32> to vector<32xf32>
    %94 = vector.shape_cast %93 : vector<32xf32> to vector<1x32xf32>
    %cst_47 = arith.constant 1.000000e+00 : f32
    %95 = vector.broadcast %cst_47 : f32 to vector<1x32xf32>
    %96 = arith.subf %95, %77 : vector<1x32xf32>
    %97 = math.exp %94 : vector<1x32xf32>
    %98 = arith.mulf %96, %97 : vector<1x32xf32>
    %99 = vector.extract_strided_slice %50 {offsets = [0, 42], sizes = [1, 16], strides = [1, 1]} : vector<1x128xf32> to vector<1x16xf32>
    %100 = vector.extract_strided_slice %50 {offsets = [0, 58], sizes = [1, 1], strides = [1, 1]} : vector<1x128xf32> to vector<1x1xf32>
    %cst_48 = arith.constant dense<0.000000e+00> : vector<1x32xf32>
    %101 = tpu.matmul %99, %52, %cst_48 {dimension_numbers = #tpu.dot_dimension_numbers<[1], [1], [0], [0], [0, 0, 1, 0], [], []>} : vector<1x16xf32>, vector<32x16xf32>, vector<1x32xf32> -> vector<1x32xf32>
    %102 = arith.mulf %52, %52 : vector<32x16xf32>
    %cst_49 = arith.constant dense<0.000000e+00> : vector<32xf32>
    %103 = vector.multi_reduction <add>, %102, %cst_49 [1] : vector<32x16xf32> to vector<32xf32>
    %104 = vector.shape_cast %103 : vector<32xf32> to vector<32x1xf32>
    %cst_50 = arith.constant 9.99999997E-7 : f32
    %105 = vector.broadcast %cst_50 : f32 to vector<32x1xf32>
    %106 = arith.addf %104, %105 : vector<32x1xf32>
    %107 = math.sqrt %106 : vector<32x1xf32>
    %108 = arith.mulf %99, %99 : vector<1x16xf32>
    %cst_51 = arith.constant dense<0.000000e+00> : vector<1xf32>
    %109 = vector.multi_reduction <add>, %108, %cst_51 [1] : vector<1x16xf32> to vector<1xf32>
    %110 = vector.shape_cast %109 : vector<1xf32> to vector<1x1xf32>
    %cst_52 = arith.constant 9.99999997E-7 : f32
    %111 = vector.broadcast %cst_52 : f32 to vector<1x1xf32>
    %112 = arith.addf %110, %111 : vector<1x1xf32>
    %113 = math.sqrt %112 : vector<1x1xf32>
    %114 = tpu.transpose %107, [1, 0] : vector<32x1xf32> -> vector<1x32xf32>
    %115 = vector.broadcast %113 : vector<1x1xf32> to vector<1x32xf32>
    %116 = arith.mulf %115, %114 : vector<1x32xf32>
    %cst_53 = arith.constant 9.99999997E-7 : f32
    %117 = vector.broadcast %cst_53 : f32 to vector<1x32xf32>
    %118 = arith.addf %116, %117 : vector<1x32xf32>
    %119 = arith.divf %101, %118 : vector<1x32xf32>
    %cst_54 = arith.constant 0.000000e+00 : f32
    %120 = vector.broadcast %cst_54 : f32 to vector<1x1xf32>
    %121 = arith.maximumf %100, %120 : vector<1x1xf32>
    %122 = math.absf %100 : vector<1x1xf32>
    %cst_55 = arith.constant 0.000000e+00 : f32
    %123 = vector.broadcast %cst_55 : f32 to vector<1x1xf32>
    %124 = arith.subf %123, %122 : vector<1x1xf32>
    %125 = math.exp %124 : vector<1x1xf32>
    %cst_56 = arith.constant 1.000000e+00 : f32
    %126 = vector.broadcast %cst_56 : f32 to vector<1x1xf32>
    %127 = arith.addf %126, %125 : vector<1x1xf32>
    %128 = math.log %127 : vector<1x1xf32>
    %129 = arith.addf %121, %128 : vector<1x1xf32>
    %130 = vector.broadcast %129 : vector<1x1xf32> to vector<1x32xf32>
    %131 = arith.mulf %119, %130 : vector<1x32xf32>
    %cst_57 = arith.constant dense<0xFF800000> : vector<1xf32>
    %132 = vector.multi_reduction <maximumf>, %131, %cst_57 [1] : vector<1x32xf32> to vector<1xf32>
    %133 = vector.shape_cast %132 : vector<1xf32> to vector<1x1xf32>
    %134 = vector.broadcast %133 : vector<1x1xf32> to vector<1x32xf32>
    %135 = arith.subf %131, %134 : vector<1x32xf32>
    %136 = math.exp %135 : vector<1x32xf32>
    %cst_58 = arith.constant dense<0.000000e+00> : vector<1xf32>
    %137 = vector.multi_reduction <add>, %136, %cst_58 [1] : vector<1x32xf32> to vector<1xf32>
    %138 = vector.shape_cast %137 : vector<1xf32> to vector<1x1xf32>
    %139 = vector.broadcast %138 : vector<1x1xf32> to vector<1x32xf32>
    %140 = arith.divf %136, %139 : vector<1x32xf32>
    %141 = vector.broadcast %65 : vector<1x1xf32> to vector<1x32xf32>
    %142 = arith.mulf %141, %98 : vector<1x32xf32>
    %cst_59 = arith.constant 1.000000e+00 : f32
    %143 = vector.broadcast %cst_59 : f32 to vector<1x1xf32>
    %144 = arith.subf %143, %65 : vector<1x1xf32>
    %145 = vector.broadcast %144 : vector<1x1xf32> to vector<1x32xf32>
    %146 = arith.mulf %145, %140 : vector<1x32xf32>
    %147 = arith.addf %142, %146 : vector<1x32xf32>
    %148 = vector.broadcast %73 : vector<1x1xf32> to vector<1x32xf32>
    %149 = arith.mulf %148, %147 : vector<1x32xf32>
    %c0_60 = arith.constant 0 : index
    %c0_61 = arith.constant 0 : index
    %c0_62 = arith.constant 0 : index
    %150 = vector.load %arg12[%c0_60, %c0_61, %c0_62] : memref<2x1x32xf32, #tpu.memory_space<vmem>>, vector<1x1x32xf32>
    %151 = vector.shape_cast %150 : vector<1x1x32xf32> to vector<1x32xf32>
    %152 = vector.shape_cast %149 : vector<1x32xf32> to vector<1x1x32xf32>
    tpu.vector_store %arg12[%c0_60, %c0_61, %c0_62], %152 {strides = array<i32>} : memref<2x1x32xf32, #tpu.memory_space<vmem>>, vector<1x1x32xf32>,
    %cst_63 = arith.constant 1.000000e+00 : f32
    %153 = vector.broadcast %cst_63 : f32 to vector<32x16xf32>
    %cst_64 = arith.constant 0.000000e+00 : f32
    %154 = vector.broadcast %cst_64 : f32 to vector<32x16xf32>
    %155 = tpu.transpose %149, [1, 0] : vector<1x32xf32> -> vector<32x1xf32>
    %156 = vector.extract_strided_slice %50 {offsets = [0, 16], sizes = [1, 16], strides = [1, 1]} : vector<1x128xf32> to vector<1x16xf32>
    %cst_65 = arith.constant 0.000000e+00 : f32
    %157 = vector.broadcast %cst_65 : f32 to vector<1x16xf32>
    %158 = arith.subf %157, %156 : vector<1x16xf32>
    %159 = math.exp %158 : vector<1x16xf32>
    %cst_66 = arith.constant 1.000000e+00 : f32
    %160 = vector.broadcast %cst_66 : f32 to vector<1x16xf32>
    %161 = arith.addf %160, %159 : vector<1x16xf32>
    %cst_67 = arith.constant 1.000000e+00 : f32
    %162 = vector.broadcast %cst_67 : f32 to vector<1x16xf32>
    %163 = arith.divf %162, %161 : vector<1x16xf32>
    %164 = vector.extract_strided_slice %50 {offsets = [0, 0], sizes = [1, 16], strides = [1, 1]} : vector<1x128xf32> to vector<1x16xf32>
    %165 = vector.broadcast %155 : vector<32x1xf32> to vector<32x16xf32>
    %166 = vector.broadcast %163 : vector<1x16xf32> to vector<32x16xf32>
    %167 = arith.mulf %165, %166 : vector<32x16xf32>
    %cst_68 = arith.constant 1.000000e+00 : f32
    %168 = vector.broadcast %cst_68 : f32 to vector<32x16xf32>
    %169 = arith.subf %168, %167 : vector<32x16xf32>
    %170 = arith.mulf %153, %169 : vector<32x16xf32>
    %171 = vector.broadcast %155 : vector<32x1xf32> to vector<32x16xf32>
    %172 = vector.broadcast %164 : vector<1x16xf32> to vector<32x16xf32>
    %173 = arith.mulf %171, %172 : vector<32x16xf32>
    %174 = arith.addf %154, %173 : vector<32x16xf32>
    %175 = arith.mulf %52, %170 : vector<32x16xf32>
    %176 = arith.addf %175, %174 : vector<32x16xf32>
    %c0_69 = arith.constant 0 : index
    %c0_70 = arith.constant 0 : index
    %c0_71 = arith.constant 0 : index
    %177 = vector.load %arg10[%c0_69, %c0_70, %c0_71] : memref<2x32x16xf32, #tpu.memory_space<vmem>>, vector<1x32x16xf32>
    %178 = vector.shape_cast %177 : vector<1x32x16xf32> to vector<32x16xf32>
    %179 = vector.shape_cast %176 : vector<32x16xf32> to vector<1x32x16xf32>
    tpu.vector_store %arg10[%c0_69, %c0_70, %c0_71], %179 {strides = array<i32>} : memref<2x32x16xf32, #tpu.memory_space<vmem>>, vector<1x32x16xf32>,
    %c0_72 = arith.constant 0 : index
    %c0_73 = arith.constant 0 : index
    %c0_74 = arith.constant 0 : index
    %c0_75 = arith.constant 0 : index
    %180 = vector.load %arg6[%c0_72, %c0_73, %c0_74, %c0_75] : memref<2x1x32x32xf32, #tpu.memory_space<vmem>>, vector<1x1x32x32xf32>
    %181 = vector.shape_cast %180 : vector<1x1x32x32xf32> to vector<32x32xf32>
    %182 = tpu.transpose %149, [1, 0] : vector<1x32xf32> -> vector<32x1xf32>
    %cst_76 = arith.constant 1.000000e+00 : f32
    %183 = vector.broadcast %cst_76 : f32 to vector<32x1xf32>
    %184 = arith.subf %183, %182 : vector<32x1xf32>
    %185 = vector.broadcast %184 : vector<32x1xf32> to vector<32x32xf32>
    %186 = vector.broadcast %149 : vector<1x32xf32> to vector<32x32xf32>
    %187 = arith.subf %185, %186 : vector<32x32xf32>
    %188 = arith.mulf %187, %181 : vector<32x32xf32>
    %189 = vector.broadcast %182 : vector<32x1xf32> to vector<32x32xf32>
    %190 = vector.broadcast %56 : vector<1x32xf32> to vector<32x32xf32>
    %191 = arith.mulf %189, %190 : vector<32x32xf32>
    %192 = arith.addf %188, %191 : vector<32x32xf32>
    %cst_77 = arith.constant 0.000000e+00 : f32
    %193 = vector.broadcast %cst_77 : f32 to vector<32x32xf32>
    %194 = arith.select %48, %193, %192 : vector<32x32xi1>, vector<32x32xf32>
    %c0_78 = arith.constant 0 : index
    %c0_79 = arith.constant 0 : index
    %c0_80 = arith.constant 0 : index
    %c0_81 = arith.constant 0 : index
    %195 = vector.load %arg13[%c0_78, %c0_79, %c0_80, %c0_81] : memref<2x1x32x32xf32, #tpu.memory_space<vmem>>, vector<1x1x32x32xf32>
    %196 = vector.shape_cast %195 : vector<1x1x32x32xf32> to vector<32x32xf32>
    %197 = vector.shape_cast %194 : vector<32x32xf32> to vector<1x1x32x32xf32>
    tpu.vector_store %arg13[%c0_78, %c0_79, %c0_80, %c0_81], %197 {strides = array<i32>} : memref<2x1x32x32xf32, #tpu.memory_space<vmem>>, vector<1x1x32x32xf32>,
    %cst_82 = arith.constant dense<0.000000e+00> : vector<1xf32>
    %198 = vector.multi_reduction <add>, %149, %cst_82 [1] : vector<1x32xf32> to vector<1xf32>
    %199 = vector.shape_cast %198 : vector<1xf32> to vector<1x1xf32>
    %cst_83 = arith.constant 1.000000e+00 : f32
    %200 = vector.broadcast %cst_83 : f32 to vector<1x1xf32>
    %201 = arith.subf %200, %199 : vector<1x1xf32>
    %202 = vector.broadcast %201 : vector<1x1xf32> to vector<1x32xf32>
    %203 = arith.mulf %202, %56 : vector<1x32xf32>
    %204 = arith.addf %203, %149 : vector<1x32xf32>
    %c0_84 = arith.constant 0 : index
    %c0_85 = arith.constant 0 : index
    %c0_86 = arith.constant 0 : index
    %205 = vector.load %arg14[%c0_84, %c0_85, %c0_86] : memref<2x1x32xf32, #tpu.memory_space<vmem>>, vector<1x1x32xf32>
    %206 = vector.shape_cast %205 : vector<1x1x32xf32> to vector<1x32xf32>
    %207 = vector.shape_cast %204 : vector<1x32xf32> to vector<1x1x32xf32>
    tpu.vector_store %arg14[%c0_84, %c0_85, %c0_86], %207 {strides = array<i32>} : memref<2x1x32xf32, #tpu.memory_space<vmem>>, vector<1x1x32xf32>,
    %208 = vector.extract_strided_slice %50 {offsets = [0, 36], sizes = [1, 3], strides = [1, 1]} : vector<1x128xf32> to vector<1x3xf32>
    %cst_87 = arith.constant dense<0xFF800000> : vector<1xf32>
    %209 = vector.multi_reduction <maximumf>, %208, %cst_87 [1] : vector<1x3xf32> to vector<1xf32>
    %210 = vector.shape_cast %209 : vector<1xf32> to vector<1x1xf32>
    %211 = vector.broadcast %210 : vector<1x1xf32> to vector<1x3xf32>
    %212 = arith.subf %208, %211 : vector<1x3xf32>
    %213 = math.exp %212 : vector<1x3xf32>
    %cst_88 = arith.constant dense<0.000000e+00> : vector<1xf32>
    %214 = vector.multi_reduction <add>, %213, %cst_88 [1] : vector<1x3xf32> to vector<1xf32>
    %215 = vector.shape_cast %214 : vector<1xf32> to vector<1x1xf32>
    %216 = vector.broadcast %215 : vector<1x1xf32> to vector<1x3xf32>
    %217 = arith.divf %213, %216 : vector<1x3xf32>
    %218 = vector.extract_strided_slice %50 {offsets = [0, 59], sizes = [1, 16], strides = [1, 1]} : vector<1x128xf32> to vector<1x16xf32>
    %219 = vector.extract_strided_slice %50 {offsets = [0, 91], sizes = [1, 1], strides = [1, 1]} : vector<1x128xf32> to vector<1x1xf32>
    %cst_89 = arith.constant dense<0.000000e+00> : vector<1x32xf32>
    %220 = tpu.matmul %218, %176, %cst_89 {dimension_numbers = #tpu.dot_dimension_numbers<[1], [1], [0], [0], [0, 0, 1, 0], [], []>} : vector<1x16xf32>, vector<32x16xf32>, vector<1x32xf32> -> vector<1x32xf32>
    %221 = arith.mulf %176, %176 : vector<32x16xf32>
    %cst_90 = arith.constant dense<0.000000e+00> : vector<32xf32>
    %222 = vector.multi_reduction <add>, %221, %cst_90 [1] : vector<32x16xf32> to vector<32xf32>
    %223 = vector.shape_cast %222 : vector<32xf32> to vector<32x1xf32>
    %cst_91 = arith.constant 9.99999997E-7 : f32
    %224 = vector.broadcast %cst_91 : f32 to vector<32x1xf32>
    %225 = arith.addf %223, %224 : vector<32x1xf32>
    %226 = math.sqrt %225 : vector<32x1xf32>
    %227 = arith.mulf %218, %218 : vector<1x16xf32>
    %cst_92 = arith.constant dense<0.000000e+00> : vector<1xf32>
    %228 = vector.multi_reduction <add>, %227, %cst_92 [1] : vector<1x16xf32> to vector<1xf32>
    %229 = vector.shape_cast %228 : vector<1xf32> to vector<1x1xf32>
    %cst_93 = arith.constant 9.99999997E-7 : f32
    %230 = vector.broadcast %cst_93 : f32 to vector<1x1xf32>
    %231 = arith.addf %229, %230 : vector<1x1xf32>
    %232 = math.sqrt %231 : vector<1x1xf32>
    %233 = tpu.transpose %226, [1, 0] : vector<32x1xf32> -> vector<1x32xf32>
    %234 = vector.broadcast %232 : vector<1x1xf32> to vector<1x32xf32>
    %235 = arith.mulf %234, %233 : vector<1x32xf32>
    %cst_94 = arith.constant 9.99999997E-7 : f32
    %236 = vector.broadcast %cst_94 : f32 to vector<1x32xf32>
    %237 = arith.addf %235, %236 : vector<1x32xf32>
    %238 = arith.divf %220, %237 : vector<1x32xf32>
    %cst_95 = arith.constant 0.000000e+00 : f32
    %239 = vector.broadcast %cst_95 : f32 to vector<1x1xf32>
    %240 = arith.maximumf %219, %239 : vector<1x1xf32>
    %241 = math.absf %219 : vector<1x1xf32>
    %cst_96 = arith.constant 0.000000e+00 : f32
    %242 = vector.broadcast %cst_96 : f32 to vector<1x1xf32>
    %243 = arith.subf %242, %241 : vector<1x1xf32>
    %244 = math.exp %243 : vector<1x1xf32>
    %cst_97 = arith.constant 1.000000e+00 : f32
    %245 = vector.broadcast %cst_97 : f32 to vector<1x1xf32>
    %246 = arith.addf %245, %244 : vector<1x1xf32>
    %247 = math.log %246 : vector<1x1xf32>
    %248 = arith.addf %240, %247 : vector<1x1xf32>
    %249 = vector.broadcast %248 : vector<1x1xf32> to vector<1x32xf32>
    %250 = arith.mulf %238, %249 : vector<1x32xf32>
    %cst_98 = arith.constant dense<0xFF800000> : vector<1xf32>
    %251 = vector.multi_reduction <maximumf>, %250, %cst_98 [1] : vector<1x32xf32> to vector<1xf32>
    %252 = vector.shape_cast %251 : vector<1xf32> to vector<1x1xf32>
    %253 = vector.broadcast %252 : vector<1x1xf32> to vector<1x32xf32>
    %254 = arith.subf %250, %253 : vector<1x32xf32>
    %255 = math.exp %254 : vector<1x32xf32>
    %cst_99 = arith.constant dense<0.000000e+00> : vector<1xf32>
    %256 = vector.multi_reduction <add>, %255, %cst_99 [1] : vector<1x32xf32> to vector<1xf32>
    %257 = vector.shape_cast %256 : vector<1xf32> to vector<1x1xf32>
    %258 = vector.broadcast %257 : vector<1x1xf32> to vector<1x32xf32>
    %259 = arith.divf %255, %258 : vector<1x32xf32>
    %260 = vector.extract_strided_slice %54 {offsets = [0, 0], sizes = [1, 32], strides = [1, 1]} : vector<2x32xf32> to vector<1x32xf32>
    %261 = vector.extract_strided_slice %217 {offsets = [0, 2], sizes = [1, 1], strides = [1, 1]} : vector<1x3xf32> to vector<1x1xf32>
    %262 = vector.broadcast %261 : vector<1x1xf32> to vector<1x32xf32>
    %263 = arith.mulf %262, %259 : vector<1x32xf32>
    %cst_100 = arith.constant dense<0.000000e+00> : vector<1x32xf32>
    %264 = tpu.matmul %260, %194, %cst_100 {dimension_numbers = #tpu.dot_dimension_numbers<[1], [1], [0], [0], [0, 0, 1, 0], [], []>} : vector<1x32xf32>, vector<32x32xf32>, vector<1x32xf32> -> vector<1x32xf32>
    %cst_101 = arith.constant dense<0.000000e+00> : vector<1x32xf32>
    %265 = tpu.matmul %260, %194, %cst_101 {dimension_numbers = #tpu.dot_dimension_numbers<[1], [0], [0], [1], [0, 0, 1, 1], [], []>} : vector<1x32xf32>, vector<32x32xf32>, vector<1x32xf32> -> vector<1x32xf32>
    %266 = vector.extract_strided_slice %217 {offsets = [0, 1], sizes = [1, 1], strides = [1, 1]} : vector<1x3xf32> to vector<1x1xf32>
    %267 = vector.broadcast %266 : vector<1x1xf32> to vector<1x32xf32>
    %268 = arith.mulf %267, %264 : vector<1x32xf32>
    %269 = arith.addf %263, %268 : vector<1x32xf32>
    %270 = vector.extract_strided_slice %217 {offsets = [0, 0], sizes = [1, 1], strides = [1, 1]} : vector<1x3xf32> to vector<1x1xf32>
    %271 = vector.broadcast %270 : vector<1x1xf32> to vector<1x32xf32>
    %272 = arith.mulf %271, %265 : vector<1x32xf32>
    %273 = arith.addf %269, %272 : vector<1x32xf32>
    %c0_102 = arith.constant 0 : index
    %c0_103 = arith.constant 0 : index
    %c0_104 = arith.constant 0 : index
    %274 = vector.load %arg11[%c0_102, %c0_103, %c0_104] : memref<2x2x32xf32, #tpu.memory_space<vmem>>, vector<1x1x32xf32>
    %275 = vector.shape_cast %274 : vector<1x1x32xf32> to vector<1x32xf32>
    %276 = vector.shape_cast %273 : vector<1x32xf32> to vector<1x1x32xf32>
    tpu.vector_store %arg11[%c0_102, %c0_103, %c0_104], %276 {strides = array<i32>} : memref<2x2x32xf32, #tpu.memory_space<vmem>>, vector<1x1x32xf32>,
    %cst_105 = arith.constant dense<0.000000e+00> : vector<1x16xf32>
    %277 = tpu.matmul %273, %176, %cst_105 {dimension_numbers = #tpu.dot_dimension_numbers<[1], [0], [0], [1], [0, 0, 1, 1], [], []>} : vector<1x32xf32>, vector<32x16xf32>, vector<1x16xf32> -> vector<1x16xf32>
    %c0_106 = arith.constant 0 : index
    %c0_107 = arith.constant 0 : index
    %c0_108 = arith.constant 0 : index
    %278 = vector.load %arg9[%c0_106, %c0_107, %c0_108] : memref<2x2x16xf32, #tpu.memory_space<vmem>>, vector<1x1x16xf32>
    %279 = vector.shape_cast %278 : vector<1x1x16xf32> to vector<1x16xf32>
    %280 = vector.shape_cast %277 : vector<1x16xf32> to vector<1x1x16xf32>
    tpu.vector_store %arg9[%c0_106, %c0_107, %c0_108], %280 {strides = array<i32>} : memref<2x2x16xf32, #tpu.memory_space<vmem>>, vector<1x1x16xf32>,
    %281 = vector.extract_strided_slice %50 {offsets = [0, 39], sizes = [1, 3], strides = [1, 1]} : vector<1x128xf32> to vector<1x3xf32>
    %cst_109 = arith.constant dense<0xFF800000> : vector<1xf32>
    %282 = vector.multi_reduction <maximumf>, %281, %cst_109 [1] : vector<1x3xf32> to vector<1xf32>
    %283 = vector.shape_cast %282 : vector<1xf32> to vector<1x1xf32>
    %284 = vector.broadcast %283 : vector<1x1xf32> to vector<1x3xf32>
    %285 = arith.subf %281, %284 : vector<1x3xf32>
    %286 = math.exp %285 : vector<1x3xf32>
    %cst_110 = arith.constant dense<0.000000e+00> : vector<1xf32>
    %287 = vector.multi_reduction <add>, %286, %cst_110 [1] : vector<1x3xf32> to vector<1xf32>
    %288 = vector.shape_cast %287 : vector<1xf32> to vector<1x1xf32>
    %289 = vector.broadcast %288 : vector<1x1xf32> to vector<1x3xf32>
    %290 = arith.divf %286, %289 : vector<1x3xf32>
    %291 = vector.extract_strided_slice %50 {offsets = [0, 75], sizes = [1, 16], strides = [1, 1]} : vector<1x128xf32> to vector<1x16xf32>
    %292 = vector.extract_strided_slice %50 {offsets = [0, 92], sizes = [1, 1], strides = [1, 1]} : vector<1x128xf32> to vector<1x1xf32>
    %cst_111 = arith.constant dense<0.000000e+00> : vector<1x32xf32>
    %293 = tpu.matmul %291, %176, %cst_111 {dimension_numbers = #tpu.dot_dimension_numbers<[1], [1], [0], [0], [0, 0, 1, 0], [], []>} : vector<1x16xf32>, vector<32x16xf32>, vector<1x32xf32> -> vector<1x32xf32>
    %294 = arith.mulf %176, %176 : vector<32x16xf32>
    %cst_112 = arith.constant dense<0.000000e+00> : vector<32xf32>
    %295 = vector.multi_reduction <add>, %294, %cst_112 [1] : vector<32x16xf32> to vector<32xf32>
    %296 = vector.shape_cast %295 : vector<32xf32> to vector<32x1xf32>
    %cst_113 = arith.constant 9.99999997E-7 : f32
    %297 = vector.broadcast %cst_113 : f32 to vector<32x1xf32>
    %298 = arith.addf %296, %297 : vector<32x1xf32>
    %299 = math.sqrt %298 : vector<32x1xf32>
    %300 = arith.mulf %291, %291 : vector<1x16xf32>
    %cst_114 = arith.constant dense<0.000000e+00> : vector<1xf32>
    %301 = vector.multi_reduction <add>, %300, %cst_114 [1] : vector<1x16xf32> to vector<1xf32>
    %302 = vector.shape_cast %301 : vector<1xf32> to vector<1x1xf32>
    %cst_115 = arith.constant 9.99999997E-7 : f32
    %303 = vector.broadcast %cst_115 : f32 to vector<1x1xf32>
    %304 = arith.addf %302, %303 : vector<1x1xf32>
    %305 = math.sqrt %304 : vector<1x1xf32>
    %306 = tpu.transpose %299, [1, 0] : vector<32x1xf32> -> vector<1x32xf32>
    %307 = vector.broadcast %305 : vector<1x1xf32> to vector<1x32xf32>
    %308 = arith.mulf %307, %306 : vector<1x32xf32>
    %cst_116 = arith.constant 9.99999997E-7 : f32
    %309 = vector.broadcast %cst_116 : f32 to vector<1x32xf32>
    %310 = arith.addf %308, %309 : vector<1x32xf32>
    %311 = arith.divf %293, %310 : vector<1x32xf32>
    %cst_117 = arith.constant 0.000000e+00 : f32
    %312 = vector.broadcast %cst_117 : f32 to vector<1x1xf32>
    %313 = arith.maximumf %292, %312 : vector<1x1xf32>
    %314 = math.absf %292 : vector<1x1xf32>
    %cst_118 = arith.constant 0.000000e+00 : f32
    %315 = vector.broadcast %cst_118 : f32 to vector<1x1xf32>
    %316 = arith.subf %315, %314 : vector<1x1xf32>
    %317 = math.exp %316 : vector<1x1xf32>
    %cst_119 = arith.constant 1.000000e+00 : f32
    %318 = vector.broadcast %cst_119 : f32 to vector<1x1xf32>
    %319 = arith.addf %318, %317 : vector<1x1xf32>
    %320 = math.log %319 : vector<1x1xf32>
    %321 = arith.addf %313, %320 : vector<1x1xf32>
    %322 = vector.broadcast %321 : vector<1x1xf32> to vector<1x32xf32>
    %323 = arith.mulf %311, %322 : vector<1x32xf32>
    %cst_120 = arith.constant dense<0xFF800000> : vector<1xf32>
    %324 = vector.multi_reduction <maximumf>, %323, %cst_120 [1] : vector<1x32xf32> to vector<1xf32>
    %325 = vector.shape_cast %324 : vector<1xf32> to vector<1x1xf32>
    %326 = vector.broadcast %325 : vector<1x1xf32> to vector<1x32xf32>
    %327 = arith.subf %323, %326 : vector<1x32xf32>
    %328 = math.exp %327 : vector<1x32xf32>
    %cst_121 = arith.constant dense<0.000000e+00> : vector<1xf32>
    %329 = vector.multi_reduction <add>, %328, %cst_121 [1] : vector<1x32xf32> to vector<1xf32>
    %330 = vector.shape_cast %329 : vector<1xf32> to vector<1x1xf32>
    %331 = vector.broadcast %330 : vector<1x1xf32> to vector<1x32xf32>
    %332 = arith.divf %328, %331 : vector<1x32xf32>
    %333 = vector.extract_strided_slice %54 {offsets = [1, 0], sizes = [1, 32], strides = [1, 1]} : vector<2x32xf32> to vector<1x32xf32>
    %334 = vector.extract_strided_slice %290 {offsets = [0, 2], sizes = [1, 1], strides = [1, 1]} : vector<1x3xf32> to vector<1x1xf32>
    %335 = vector.broadcast %334 : vector<1x1xf32> to vector<1x32xf32>
    %336 = arith.mulf %335, %332 : vector<1x32xf32>
    %cst_122 = arith.constant dense<0.000000e+00> : vector<1x32xf32>
    %337 = tpu.matmul %333, %194, %cst_122 {dimension_numbers = #tpu.dot_dimension_numbers<[1], [1], [0], [0], [0, 0, 1, 0], [], []>} : vector<1x32xf32>, vector<32x32xf32>, vector<1x32xf32> -> vector<1x32xf32>
    %cst_123 = arith.constant dense<0.000000e+00> : vector<1x32xf32>
    %338 = tpu.matmul %333, %194, %cst_123 {dimension_numbers = #tpu.dot_dimension_numbers<[1], [0], [0], [1], [0, 0, 1, 1], [], []>} : vector<1x32xf32>, vector<32x32xf32>, vector<1x32xf32> -> vector<1x32xf32>
    %339 = vector.extract_strided_slice %290 {offsets = [0, 1], sizes = [1, 1], strides = [1, 1]} : vector<1x3xf32> to vector<1x1xf32>
    %340 = vector.broadcast %339 : vector<1x1xf32> to vector<1x32xf32>
    %341 = arith.mulf %340, %337 : vector<1x32xf32>
    %342 = arith.addf %336, %341 : vector<1x32xf32>
    %343 = vector.extract_strided_slice %290 {offsets = [0, 0], sizes = [1, 1], strides = [1, 1]} : vector<1x3xf32> to vector<1x1xf32>
    %344 = vector.broadcast %343 : vector<1x1xf32> to vector<1x32xf32>
    %345 = arith.mulf %344, %338 : vector<1x32xf32>
    %346 = arith.addf %342, %345 : vector<1x32xf32>
    %c0_124 = arith.constant 0 : index
    %c1_125 = arith.constant 1 : index
    %c0_126 = arith.constant 0 : index
    %347 = vector.load %arg11[%c0_124, %c1_125, %c0_126] : memref<2x2x32xf32, #tpu.memory_space<vmem>>, vector<1x1x32xf32>
    %348 = vector.shape_cast %347 : vector<1x1x32xf32> to vector<1x32xf32>
    %349 = vector.shape_cast %346 : vector<1x32xf32> to vector<1x1x32xf32>
    tpu.vector_store %arg11[%c0_124, %c1_125, %c0_126], %349 {strides = array<i32>} : memref<2x2x32xf32, #tpu.memory_space<vmem>>, vector<1x1x32xf32>,
    %cst_127 = arith.constant dense<0.000000e+00> : vector<1x16xf32>
    %350 = tpu.matmul %346, %176, %cst_127 {dimension_numbers = #tpu.dot_dimension_numbers<[1], [0], [0], [1], [0, 0, 1, 1], [], []>} : vector<1x32xf32>, vector<32x16xf32>, vector<1x16xf32> -> vector<1x16xf32>
    %c0_128 = arith.constant 0 : index
    %c1_129 = arith.constant 1 : index
    %c0_130 = arith.constant 0 : index
    %351 = vector.load %arg9[%c0_128, %c1_129, %c0_130] : memref<2x2x16xf32, #tpu.memory_space<vmem>>, vector<1x1x16xf32>
    %352 = vector.shape_cast %351 : vector<1x1x16xf32> to vector<1x16xf32>
    %353 = vector.shape_cast %350 : vector<1x16xf32> to vector<1x1x16xf32>
    tpu.vector_store %arg9[%c0_128, %c1_129, %c0_130], %353 {strides = array<i32>} : memref<2x2x16xf32, #tpu.memory_space<vmem>>, vector<1x1x16xf32>,
    %354 = vector.extract_strided_slice %5 {offsets = [1, 0], sizes = [1, 128], strides = [1, 1]} : vector<2x128xf32> to vector<1x128xf32>
    %c1_131 = arith.constant 1 : index
    %c0_132 = arith.constant 0 : index
    %c0_133 = arith.constant 0 : index
    %355 = vector.load %arg3[%c1_131, %c0_132, %c0_133] : memref<2x32x16xf32, #tpu.memory_space<vmem>>, vector<1x32x16xf32>
    %356 = vector.shape_cast %355 : vector<1x32x16xf32> to vector<32x16xf32>
    %c1_134 = arith.constant 1 : index
    %c0_135 = arith.constant 0 : index
    %c0_136 = arith.constant 0 : index
    %357 = vector.load %arg4[%c1_134, %c0_135, %c0_136] : memref<2x2x32xf32, #tpu.memory_space<vmem>>, vector<1x2x32xf32>
    %358 = vector.shape_cast %357 : vector<1x2x32xf32> to vector<2x32xf32>
    %c1_137 = arith.constant 1 : index
    %c0_138 = arith.constant 0 : index
    %c0_139 = arith.constant 0 : index
    %359 = vector.load %arg7[%c1_137, %c0_138, %c0_139] : memref<2x1x32xf32, #tpu.memory_space<vmem>>, vector<1x1x32xf32>
    %360 = vector.shape_cast %359 : vector<1x1x32xf32> to vector<1x32xf32>
    %361 = vector.extract_strided_slice %44 {offsets = [1, 0], sizes = [1, 32], strides = [1, 1]} : vector<2x32xf32> to vector<1x32xf32>
    %362 = vector.extract_strided_slice %354 {offsets = [0, 34], sizes = [1, 1], strides = [1, 1]} : vector<1x128xf32> to vector<1x1xf32>
    %cst_140 = arith.constant 0.000000e+00 : f32
    %363 = vector.broadcast %cst_140 : f32 to vector<1x1xf32>
    %364 = arith.subf %363, %362 : vector<1x1xf32>
    %365 = math.exp %364 : vector<1x1xf32>
    %cst_141 = arith.constant 1.000000e+00 : f32
    %366 = vector.broadcast %cst_141 : f32 to vector<1x1xf32>
    %367 = arith.addf %366, %365 : vector<1x1xf32>
    %cst_142 = arith.constant 1.000000e+00 : f32
    %368 = vector.broadcast %cst_142 : f32 to vector<1x1xf32>
    %369 = arith.divf %368, %367 : vector<1x1xf32>
    %370 = vector.extract_strided_slice %354 {offsets = [0, 35], sizes = [1, 1], strides = [1, 1]} : vector<1x128xf32> to vector<1x1xf32>
    %cst_143 = arith.constant 0.000000e+00 : f32
    %371 = vector.broadcast %cst_143 : f32 to vector<1x1xf32>
    %372 = arith.subf %371, %370 : vector<1x1xf32>
    %373 = math.exp %372 : vector<1x1xf32>
    %cst_144 = arith.constant 1.000000e+00 : f32
    %374 = vector.broadcast %cst_144 : f32 to vector<1x1xf32>
    %375 = arith.addf %374, %373 : vector<1x1xf32>
    %cst_145 = arith.constant 1.000000e+00 : f32
    %376 = vector.broadcast %cst_145 : f32 to vector<1x1xf32>
    %377 = arith.divf %376, %375 : vector<1x1xf32>
    %cst_146 = arith.constant 0.999998986 : f32
    %378 = vector.broadcast %cst_146 : f32 to vector<1x32xf32>
    %379 = arith.mulf %378, %361 : vector<1x32xf32>
    %cst_147 = arith.constant 9.99999997E-7 : f32
    %380 = vector.broadcast %cst_147 : f32 to vector<1x32xf32>
    %381 = arith.addf %380, %379 : vector<1x32xf32>
    %382 = tpu.transpose %381, [1, 0] : vector<1x32xf32> -> vector<32x1xf32>
    %383 = vector.broadcast %382 : vector<32x1xf32> to vector<32x32xf32>
    %384 = vector.broadcast %381 : vector<1x32xf32> to vector<32x32xf32>
    %385 = arith.cmpf olt, %383, %384 : vector<32x32xf32>
    %386 = vector.broadcast %382 : vector<32x1xf32> to vector<32x32xf32>
    %387 = vector.broadcast %381 : vector<1x32xf32> to vector<32x32xf32>
    %388 = arith.cmpf oeq, %386, %387 : vector<32x32xf32>
    %389 = arith.andi %388, %49 : vector<32x32xi1>
    %390 = arith.ori %385, %389 : vector<32x32xi1>
    %cst_148 = arith.constant 1.000000e+00 : f32
    %cst_149 = arith.constant 0.000000e+00 : f32
    %391 = vector.broadcast %cst_148 : f32 to vector<32x32xf32>
    %392 = vector.broadcast %cst_149 : f32 to vector<32x32xf32>
    %393 = arith.select %390, %391, %392 : vector<32x32xi1>, vector<32x32xf32>
    %394 = math.log %382 : vector<32x1xf32>
    %395 = vector.broadcast %394 : vector<32x1xf32> to vector<32x32xf32>
    %396 = arith.mulf %393, %395 : vector<32x32xf32>
    %cst_150 = arith.constant dense<0.000000e+00> : vector<32xf32>
    %397 = vector.multi_reduction <add>, %396, %cst_150 [0] : vector<32x32xf32> to vector<32xf32>
    %398 = vector.shape_cast %397 : vector<32xf32> to vector<1x32xf32>
    %cst_151 = arith.constant 1.000000e+00 : f32
    %399 = vector.broadcast %cst_151 : f32 to vector<1x32xf32>
    %400 = arith.subf %399, %381 : vector<1x32xf32>
    %401 = math.exp %398 : vector<1x32xf32>
    %402 = arith.mulf %400, %401 : vector<1x32xf32>
    %403 = vector.extract_strided_slice %354 {offsets = [0, 42], sizes = [1, 16], strides = [1, 1]} : vector<1x128xf32> to vector<1x16xf32>
    %404 = vector.extract_strided_slice %354 {offsets = [0, 58], sizes = [1, 1], strides = [1, 1]} : vector<1x128xf32> to vector<1x1xf32>
    %cst_152 = arith.constant dense<0.000000e+00> : vector<1x32xf32>
    %405 = tpu.matmul %403, %356, %cst_152 {dimension_numbers = #tpu.dot_dimension_numbers<[1], [1], [0], [0], [0, 0, 1, 0], [], []>} : vector<1x16xf32>, vector<32x16xf32>, vector<1x32xf32> -> vector<1x32xf32>
    %406 = arith.mulf %356, %356 : vector<32x16xf32>
    %cst_153 = arith.constant dense<0.000000e+00> : vector<32xf32>
    %407 = vector.multi_reduction <add>, %406, %cst_153 [1] : vector<32x16xf32> to vector<32xf32>
    %408 = vector.shape_cast %407 : vector<32xf32> to vector<32x1xf32>
    %cst_154 = arith.constant 9.99999997E-7 : f32
    %409 = vector.broadcast %cst_154 : f32 to vector<32x1xf32>
    %410 = arith.addf %408, %409 : vector<32x1xf32>
    %411 = math.sqrt %410 : vector<32x1xf32>
    %412 = arith.mulf %403, %403 : vector<1x16xf32>
    %cst_155 = arith.constant dense<0.000000e+00> : vector<1xf32>
    %413 = vector.multi_reduction <add>, %412, %cst_155 [1] : vector<1x16xf32> to vector<1xf32>
    %414 = vector.shape_cast %413 : vector<1xf32> to vector<1x1xf32>
    %cst_156 = arith.constant 9.99999997E-7 : f32
    %415 = vector.broadcast %cst_156 : f32 to vector<1x1xf32>
    %416 = arith.addf %414, %415 : vector<1x1xf32>
    %417 = math.sqrt %416 : vector<1x1xf32>
    %418 = tpu.transpose %411, [1, 0] : vector<32x1xf32> -> vector<1x32xf32>
    %419 = vector.broadcast %417 : vector<1x1xf32> to vector<1x32xf32>
    %420 = arith.mulf %419, %418 : vector<1x32xf32>
    %cst_157 = arith.constant 9.99999997E-7 : f32
    %421 = vector.broadcast %cst_157 : f32 to vector<1x32xf32>
    %422 = arith.addf %420, %421 : vector<1x32xf32>
    %423 = arith.divf %405, %422 : vector<1x32xf32>
    %cst_158 = arith.constant 0.000000e+00 : f32
    %424 = vector.broadcast %cst_158 : f32 to vector<1x1xf32>
    %425 = arith.maximumf %404, %424 : vector<1x1xf32>
    %426 = math.absf %404 : vector<1x1xf32>
    %cst_159 = arith.constant 0.000000e+00 : f32
    %427 = vector.broadcast %cst_159 : f32 to vector<1x1xf32>
    %428 = arith.subf %427, %426 : vector<1x1xf32>
    %429 = math.exp %428 : vector<1x1xf32>
    %cst_160 = arith.constant 1.000000e+00 : f32
    %430 = vector.broadcast %cst_160 : f32 to vector<1x1xf32>
    %431 = arith.addf %430, %429 : vector<1x1xf32>
    %432 = math.log %431 : vector<1x1xf32>
    %433 = arith.addf %425, %432 : vector<1x1xf32>
    %434 = vector.broadcast %433 : vector<1x1xf32> to vector<1x32xf32>
    %435 = arith.mulf %423, %434 : vector<1x32xf32>
    %cst_161 = arith.constant dense<0xFF800000> : vector<1xf32>
    %436 = vector.multi_reduction <maximumf>, %435, %cst_161 [1] : vector<1x32xf32> to vector<1xf32>
    %437 = vector.shape_cast %436 : vector<1xf32> to vector<1x1xf32>
    %438 = vector.broadcast %437 : vector<1x1xf32> to vector<1x32xf32>
    %439 = arith.subf %435, %438 : vector<1x32xf32>
    %440 = math.exp %439 : vector<1x32xf32>
    %cst_162 = arith.constant dense<0.000000e+00> : vector<1xf32>
    %441 = vector.multi_reduction <add>, %440, %cst_162 [1] : vector<1x32xf32> to vector<1xf32>
    %442 = vector.shape_cast %441 : vector<1xf32> to vector<1x1xf32>
    %443 = vector.broadcast %442 : vector<1x1xf32> to vector<1x32xf32>
    %444 = arith.divf %440, %443 : vector<1x32xf32>
    %445 = vector.broadcast %369 : vector<1x1xf32> to vector<1x32xf32>
    %446 = arith.mulf %445, %402 : vector<1x32xf32>
    %cst_163 = arith.constant 1.000000e+00 : f32
    %447 = vector.broadcast %cst_163 : f32 to vector<1x1xf32>
    %448 = arith.subf %447, %369 : vector<1x1xf32>
    %449 = vector.broadcast %448 : vector<1x1xf32> to vector<1x32xf32>
    %450 = arith.mulf %449, %444 : vector<1x32xf32>
    %451 = arith.addf %446, %450 : vector<1x32xf32>
    %452 = vector.broadcast %377 : vector<1x1xf32> to vector<1x32xf32>
    %453 = arith.mulf %452, %451 : vector<1x32xf32>
    %c1_164 = arith.constant 1 : index
    %c0_165 = arith.constant 0 : index
    %c0_166 = arith.constant 0 : index
    %454 = vector.load %arg12[%c1_164, %c0_165, %c0_166] : memref<2x1x32xf32, #tpu.memory_space<vmem>>, vector<1x1x32xf32>
    %455 = vector.shape_cast %454 : vector<1x1x32xf32> to vector<1x32xf32>
    %456 = vector.shape_cast %453 : vector<1x32xf32> to vector<1x1x32xf32>
    tpu.vector_store %arg12[%c1_164, %c0_165, %c0_166], %456 {strides = array<i32>} : memref<2x1x32xf32, #tpu.memory_space<vmem>>, vector<1x1x32xf32>,
    %cst_167 = arith.constant 1.000000e+00 : f32
    %457 = vector.broadcast %cst_167 : f32 to vector<32x16xf32>
    %cst_168 = arith.constant 0.000000e+00 : f32
    %458 = vector.broadcast %cst_168 : f32 to vector<32x16xf32>
    %459 = tpu.transpose %453, [1, 0] : vector<1x32xf32> -> vector<32x1xf32>
    %460 = vector.extract_strided_slice %354 {offsets = [0, 16], sizes = [1, 16], strides = [1, 1]} : vector<1x128xf32> to vector<1x16xf32>
    %cst_169 = arith.constant 0.000000e+00 : f32
    %461 = vector.broadcast %cst_169 : f32 to vector<1x16xf32>
    %462 = arith.subf %461, %460 : vector<1x16xf32>
    %463 = math.exp %462 : vector<1x16xf32>
    %cst_170 = arith.constant 1.000000e+00 : f32
    %464 = vector.broadcast %cst_170 : f32 to vector<1x16xf32>
    %465 = arith.addf %464, %463 : vector<1x16xf32>
    %cst_171 = arith.constant 1.000000e+00 : f32
    %466 = vector.broadcast %cst_171 : f32 to vector<1x16xf32>
    %467 = arith.divf %466, %465 : vector<1x16xf32>
    %468 = vector.extract_strided_slice %354 {offsets = [0, 0], sizes = [1, 16], strides = [1, 1]} : vector<1x128xf32> to vector<1x16xf32>
    %469 = vector.broadcast %459 : vector<32x1xf32> to vector<32x16xf32>
    %470 = vector.broadcast %467 : vector<1x16xf32> to vector<32x16xf32>
    %471 = arith.mulf %469, %470 : vector<32x16xf32>
    %cst_172 = arith.constant 1.000000e+00 : f32
    %472 = vector.broadcast %cst_172 : f32 to vector<32x16xf32>
    %473 = arith.subf %472, %471 : vector<32x16xf32>
    %474 = arith.mulf %457, %473 : vector<32x16xf32>
    %475 = vector.broadcast %459 : vector<32x1xf32> to vector<32x16xf32>
    %476 = vector.broadcast %468 : vector<1x16xf32> to vector<32x16xf32>
    %477 = arith.mulf %475, %476 : vector<32x16xf32>
    %478 = arith.addf %458, %477 : vector<32x16xf32>
    %479 = arith.mulf %356, %474 : vector<32x16xf32>
    %480 = arith.addf %479, %478 : vector<32x16xf32>
    %c1_173 = arith.constant 1 : index
    %c0_174 = arith.constant 0 : index
    %c0_175 = arith.constant 0 : index
    %481 = vector.load %arg10[%c1_173, %c0_174, %c0_175] : memref<2x32x16xf32, #tpu.memory_space<vmem>>, vector<1x32x16xf32>
    %482 = vector.shape_cast %481 : vector<1x32x16xf32> to vector<32x16xf32>
    %483 = vector.shape_cast %480 : vector<32x16xf32> to vector<1x32x16xf32>
    tpu.vector_store %arg10[%c1_173, %c0_174, %c0_175], %483 {strides = array<i32>} : memref<2x32x16xf32, #tpu.memory_space<vmem>>, vector<1x32x16xf32>,
    %c1_176 = arith.constant 1 : index
    %c0_177 = arith.constant 0 : index
    %c0_178 = arith.constant 0 : index
    %c0_179 = arith.constant 0 : index
    %484 = vector.load %arg6[%c1_176, %c0_177, %c0_178, %c0_179] : memref<2x1x32x32xf32, #tpu.memory_space<vmem>>, vector<1x1x32x32xf32>
    %485 = vector.shape_cast %484 : vector<1x1x32x32xf32> to vector<32x32xf32>
    %486 = tpu.transpose %453, [1, 0] : vector<1x32xf32> -> vector<32x1xf32>
    %cst_180 = arith.constant 1.000000e+00 : f32
    %487 = vector.broadcast %cst_180 : f32 to vector<32x1xf32>
    %488 = arith.subf %487, %486 : vector<32x1xf32>
    %489 = vector.broadcast %488 : vector<32x1xf32> to vector<32x32xf32>
    %490 = vector.broadcast %453 : vector<1x32xf32> to vector<32x32xf32>
    %491 = arith.subf %489, %490 : vector<32x32xf32>
    %492 = arith.mulf %491, %485 : vector<32x32xf32>
    %493 = vector.broadcast %486 : vector<32x1xf32> to vector<32x32xf32>
    %494 = vector.broadcast %360 : vector<1x32xf32> to vector<32x32xf32>
    %495 = arith.mulf %493, %494 : vector<32x32xf32>
    %496 = arith.addf %492, %495 : vector<32x32xf32>
    %cst_181 = arith.constant 0.000000e+00 : f32
    %497 = vector.broadcast %cst_181 : f32 to vector<32x32xf32>
    %498 = arith.select %48, %497, %496 : vector<32x32xi1>, vector<32x32xf32>
    %c1_182 = arith.constant 1 : index
    %c0_183 = arith.constant 0 : index
    %c0_184 = arith.constant 0 : index
    %c0_185 = arith.constant 0 : index
    %499 = vector.load %arg13[%c1_182, %c0_183, %c0_184, %c0_185] : memref<2x1x32x32xf32, #tpu.memory_space<vmem>>, vector<1x1x32x32xf32>
    %500 = vector.shape_cast %499 : vector<1x1x32x32xf32> to vector<32x32xf32>
    %501 = vector.shape_cast %498 : vector<32x32xf32> to vector<1x1x32x32xf32>
    tpu.vector_store %arg13[%c1_182, %c0_183, %c0_184, %c0_185], %501 {strides = array<i32>} : memref<2x1x32x32xf32, #tpu.memory_space<vmem>>, vector<1x1x32x32xf32>,
    %cst_186 = arith.constant dense<0.000000e+00> : vector<1xf32>
    %502 = vector.multi_reduction <add>, %453, %cst_186 [1] : vector<1x32xf32> to vector<1xf32>
    %503 = vector.shape_cast %502 : vector<1xf32> to vector<1x1xf32>
    %cst_187 = arith.constant 1.000000e+00 : f32
    %504 = vector.broadcast %cst_187 : f32 to vector<1x1xf32>
    %505 = arith.subf %504, %503 : vector<1x1xf32>
    %506 = vector.broadcast %505 : vector<1x1xf32> to vector<1x32xf32>
    %507 = arith.mulf %506, %360 : vector<1x32xf32>
    %508 = arith.addf %507, %453 : vector<1x32xf32>
    %c1_188 = arith.constant 1 : index
    %c0_189 = arith.constant 0 : index
    %c0_190 = arith.constant 0 : index
    %509 = vector.load %arg14[%c1_188, %c0_189, %c0_190] : memref<2x1x32xf32, #tpu.memory_space<vmem>>, vector<1x1x32xf32>
    %510 = vector.shape_cast %509 : vector<1x1x32xf32> to vector<1x32xf32>
    %511 = vector.shape_cast %508 : vector<1x32xf32> to vector<1x1x32xf32>
    tpu.vector_store %arg14[%c1_188, %c0_189, %c0_190], %511 {strides = array<i32>} : memref<2x1x32xf32, #tpu.memory_space<vmem>>, vector<1x1x32xf32>,
    %512 = vector.extract_strided_slice %354 {offsets = [0, 36], sizes = [1, 3], strides = [1, 1]} : vector<1x128xf32> to vector<1x3xf32>
    %cst_191 = arith.constant dense<0xFF800000> : vector<1xf32>
    %513 = vector.multi_reduction <maximumf>, %512, %cst_191 [1] : vector<1x3xf32> to vector<1xf32>
    %514 = vector.shape_cast %513 : vector<1xf32> to vector<1x1xf32>
    %515 = vector.broadcast %514 : vector<1x1xf32> to vector<1x3xf32>
    %516 = arith.subf %512, %515 : vector<1x3xf32>
    %517 = math.exp %516 : vector<1x3xf32>
    %cst_192 = arith.constant dense<0.000000e+00> : vector<1xf32>
    %518 = vector.multi_reduction <add>, %517, %cst_192 [1] : vector<1x3xf32> to vector<1xf32>
    %519 = vector.shape_cast %518 : vector<1xf32> to vector<1x1xf32>
    %520 = vector.broadcast %519 : vector<1x1xf32> to vector<1x3xf32>
    %521 = arith.divf %517, %520 : vector<1x3xf32>
    %522 = vector.extract_strided_slice %354 {offsets = [0, 59], sizes = [1, 16], strides = [1, 1]} : vector<1x128xf32> to vector<1x16xf32>
    %523 = vector.extract_strided_slice %354 {offsets = [0, 91], sizes = [1, 1], strides = [1, 1]} : vector<1x128xf32> to vector<1x1xf32>
    %cst_193 = arith.constant dense<0.000000e+00> : vector<1x32xf32>
    %524 = tpu.matmul %522, %480, %cst_193 {dimension_numbers = #tpu.dot_dimension_numbers<[1], [1], [0], [0], [0, 0, 1, 0], [], []>} : vector<1x16xf32>, vector<32x16xf32>, vector<1x32xf32> -> vector<1x32xf32>
    %525 = arith.mulf %480, %480 : vector<32x16xf32>
    %cst_194 = arith.constant dense<0.000000e+00> : vector<32xf32>
    %526 = vector.multi_reduction <add>, %525, %cst_194 [1] : vector<32x16xf32> to vector<32xf32>
    %527 = vector.shape_cast %526 : vector<32xf32> to vector<32x1xf32>
    %cst_195 = arith.constant 9.99999997E-7 : f32
    %528 = vector.broadcast %cst_195 : f32 to vector<32x1xf32>
    %529 = arith.addf %527, %528 : vector<32x1xf32>
    %530 = math.sqrt %529 : vector<32x1xf32>
    %531 = arith.mulf %522, %522 : vector<1x16xf32>
    %cst_196 = arith.constant dense<0.000000e+00> : vector<1xf32>
    %532 = vector.multi_reduction <add>, %531, %cst_196 [1] : vector<1x16xf32> to vector<1xf32>
    %533 = vector.shape_cast %532 : vector<1xf32> to vector<1x1xf32>
    %cst_197 = arith.constant 9.99999997E-7 : f32
    %534 = vector.broadcast %cst_197 : f32 to vector<1x1xf32>
    %535 = arith.addf %533, %534 : vector<1x1xf32>
    %536 = math.sqrt %535 : vector<1x1xf32>
    %537 = tpu.transpose %530, [1, 0] : vector<32x1xf32> -> vector<1x32xf32>
    %538 = vector.broadcast %536 : vector<1x1xf32> to vector<1x32xf32>
    %539 = arith.mulf %538, %537 : vector<1x32xf32>
    %cst_198 = arith.constant 9.99999997E-7 : f32
    %540 = vector.broadcast %cst_198 : f32 to vector<1x32xf32>
    %541 = arith.addf %539, %540 : vector<1x32xf32>
    %542 = arith.divf %524, %541 : vector<1x32xf32>
    %cst_199 = arith.constant 0.000000e+00 : f32
    %543 = vector.broadcast %cst_199 : f32 to vector<1x1xf32>
    %544 = arith.maximumf %523, %543 : vector<1x1xf32>
    %545 = math.absf %523 : vector<1x1xf32>
    %cst_200 = arith.constant 0.000000e+00 : f32
    %546 = vector.broadcast %cst_200 : f32 to vector<1x1xf32>
    %547 = arith.subf %546, %545 : vector<1x1xf32>
    %548 = math.exp %547 : vector<1x1xf32>
    %cst_201 = arith.constant 1.000000e+00 : f32
    %549 = vector.broadcast %cst_201 : f32 to vector<1x1xf32>
    %550 = arith.addf %549, %548 : vector<1x1xf32>
    %551 = math.log %550 : vector<1x1xf32>
    %552 = arith.addf %544, %551 : vector<1x1xf32>
    %553 = vector.broadcast %552 : vector<1x1xf32> to vector<1x32xf32>
    %554 = arith.mulf %542, %553 : vector<1x32xf32>
    %cst_202 = arith.constant dense<0xFF800000> : vector<1xf32>
    %555 = vector.multi_reduction <maximumf>, %554, %cst_202 [1] : vector<1x32xf32> to vector<1xf32>
    %556 = vector.shape_cast %555 : vector<1xf32> to vector<1x1xf32>
    %557 = vector.broadcast %556 : vector<1x1xf32> to vector<1x32xf32>
    %558 = arith.subf %554, %557 : vector<1x32xf32>
    %559 = math.exp %558 : vector<1x32xf32>
    %cst_203 = arith.constant dense<0.000000e+00> : vector<1xf32>
    %560 = vector.multi_reduction <add>, %559, %cst_203 [1] : vector<1x32xf32> to vector<1xf32>
    %561 = vector.shape_cast %560 : vector<1xf32> to vector<1x1xf32>
    %562 = vector.broadcast %561 : vector<1x1xf32> to vector<1x32xf32>
    %563 = arith.divf %559, %562 : vector<1x32xf32>
    %564 = vector.extract_strided_slice %358 {offsets = [0, 0], sizes = [1, 32], strides = [1, 1]} : vector<2x32xf32> to vector<1x32xf32>
    %565 = vector.extract_strided_slice %521 {offsets = [0, 2], sizes = [1, 1], strides = [1, 1]} : vector<1x3xf32> to vector<1x1xf32>
    %566 = vector.broadcast %565 : vector<1x1xf32> to vector<1x32xf32>
    %567 = arith.mulf %566, %563 : vector<1x32xf32>
    %cst_204 = arith.constant dense<0.000000e+00> : vector<1x32xf32>
    %568 = tpu.matmul %564, %498, %cst_204 {dimension_numbers = #tpu.dot_dimension_numbers<[1], [1], [0], [0], [0, 0, 1, 0], [], []>} : vector<1x32xf32>, vector<32x32xf32>, vector<1x32xf32> -> vector<1x32xf32>
    %cst_205 = arith.constant dense<0.000000e+00> : vector<1x32xf32>
    %569 = tpu.matmul %564, %498, %cst_205 {dimension_numbers = #tpu.dot_dimension_numbers<[1], [0], [0], [1], [0, 0, 1, 1], [], []>} : vector<1x32xf32>, vector<32x32xf32>, vector<1x32xf32> -> vector<1x32xf32>
    %570 = vector.extract_strided_slice %521 {offsets = [0, 1], sizes = [1, 1], strides = [1, 1]} : vector<1x3xf32> to vector<1x1xf32>
    %571 = vector.broadcast %570 : vector<1x1xf32> to vector<1x32xf32>
    %572 = arith.mulf %571, %568 : vector<1x32xf32>
    %573 = arith.addf %567, %572 : vector<1x32xf32>
    %574 = vector.extract_strided_slice %521 {offsets = [0, 0], sizes = [1, 1], strides = [1, 1]} : vector<1x3xf32> to vector<1x1xf32>
    %575 = vector.broadcast %574 : vector<1x1xf32> to vector<1x32xf32>
    %576 = arith.mulf %575, %569 : vector<1x32xf32>
    %577 = arith.addf %573, %576 : vector<1x32xf32>
    %c1_206 = arith.constant 1 : index
    %c0_207 = arith.constant 0 : index
    %c0_208 = arith.constant 0 : index
    %578 = vector.load %arg11[%c1_206, %c0_207, %c0_208] : memref<2x2x32xf32, #tpu.memory_space<vmem>>, vector<1x1x32xf32>
    %579 = vector.shape_cast %578 : vector<1x1x32xf32> to vector<1x32xf32>
    %580 = vector.shape_cast %577 : vector<1x32xf32> to vector<1x1x32xf32>
    tpu.vector_store %arg11[%c1_206, %c0_207, %c0_208], %580 {strides = array<i32>} : memref<2x2x32xf32, #tpu.memory_space<vmem>>, vector<1x1x32xf32>,
    %cst_209 = arith.constant dense<0.000000e+00> : vector<1x16xf32>
    %581 = tpu.matmul %577, %480, %cst_209 {dimension_numbers = #tpu.dot_dimension_numbers<[1], [0], [0], [1], [0, 0, 1, 1], [], []>} : vector<1x32xf32>, vector<32x16xf32>, vector<1x16xf32> -> vector<1x16xf32>
    %c1_210 = arith.constant 1 : index
    %c0_211 = arith.constant 0 : index
    %c0_212 = arith.constant 0 : index
    %582 = vector.load %arg9[%c1_210, %c0_211, %c0_212] : memref<2x2x16xf32, #tpu.memory_space<vmem>>, vector<1x1x16xf32>
    %583 = vector.shape_cast %582 : vector<1x1x16xf32> to vector<1x16xf32>
    %584 = vector.shape_cast %581 : vector<1x16xf32> to vector<1x1x16xf32>
    tpu.vector_store %arg9[%c1_210, %c0_211, %c0_212], %584 {strides = array<i32>} : memref<2x2x16xf32, #tpu.memory_space<vmem>>, vector<1x1x16xf32>,
    %585 = vector.extract_strided_slice %354 {offsets = [0, 39], sizes = [1, 3], strides = [1, 1]} : vector<1x128xf32> to vector<1x3xf32>
    %cst_213 = arith.constant dense<0xFF800000> : vector<1xf32>
    %586 = vector.multi_reduction <maximumf>, %585, %cst_213 [1] : vector<1x3xf32> to vector<1xf32>
    %587 = vector.shape_cast %586 : vector<1xf32> to vector<1x1xf32>
    %588 = vector.broadcast %587 : vector<1x1xf32> to vector<1x3xf32>
    %589 = arith.subf %585, %588 : vector<1x3xf32>
    %590 = math.exp %589 : vector<1x3xf32>
    %cst_214 = arith.constant dense<0.000000e+00> : vector<1xf32>
    %591 = vector.multi_reduction <add>, %590, %cst_214 [1] : vector<1x3xf32> to vector<1xf32>
    %592 = vector.shape_cast %591 : vector<1xf32> to vector<1x1xf32>
    %593 = vector.broadcast %592 : vector<1x1xf32> to vector<1x3xf32>
    %594 = arith.divf %590, %593 : vector<1x3xf32>
    %595 = vector.extract_strided_slice %354 {offsets = [0, 75], sizes = [1, 16], strides = [1, 1]} : vector<1x128xf32> to vector<1x16xf32>
    %596 = vector.extract_strided_slice %354 {offsets = [0, 92], sizes = [1, 1], strides = [1, 1]} : vector<1x128xf32> to vector<1x1xf32>
    %cst_215 = arith.constant dense<0.000000e+00> : vector<1x32xf32>
    %597 = tpu.matmul %595, %480, %cst_215 {dimension_numbers = #tpu.dot_dimension_numbers<[1], [1], [0], [0], [0, 0, 1, 0], [], []>} : vector<1x16xf32>, vector<32x16xf32>, vector<1x32xf32> -> vector<1x32xf32>
    %598 = arith.mulf %480, %480 : vector<32x16xf32>
    %cst_216 = arith.constant dense<0.000000e+00> : vector<32xf32>
    %599 = vector.multi_reduction <add>, %598, %cst_216 [1] : vector<32x16xf32> to vector<32xf32>
    %600 = vector.shape_cast %599 : vector<32xf32> to vector<32x1xf32>
    %cst_217 = arith.constant 9.99999997E-7 : f32
    %601 = vector.broadcast %cst_217 : f32 to vector<32x1xf32>
    %602 = arith.addf %600, %601 : vector<32x1xf32>
    %603 = math.sqrt %602 : vector<32x1xf32>
    %604 = arith.mulf %595, %595 : vector<1x16xf32>
    %cst_218 = arith.constant dense<0.000000e+00> : vector<1xf32>
    %605 = vector.multi_reduction <add>, %604, %cst_218 [1] : vector<1x16xf32> to vector<1xf32>
    %606 = vector.shape_cast %605 : vector<1xf32> to vector<1x1xf32>
    %cst_219 = arith.constant 9.99999997E-7 : f32
    %607 = vector.broadcast %cst_219 : f32 to vector<1x1xf32>
    %608 = arith.addf %606, %607 : vector<1x1xf32>
    %609 = math.sqrt %608 : vector<1x1xf32>
    %610 = tpu.transpose %603, [1, 0] : vector<32x1xf32> -> vector<1x32xf32>
    %611 = vector.broadcast %609 : vector<1x1xf32> to vector<1x32xf32>
    %612 = arith.mulf %611, %610 : vector<1x32xf32>
    %cst_220 = arith.constant 9.99999997E-7 : f32
    %613 = vector.broadcast %cst_220 : f32 to vector<1x32xf32>
    %614 = arith.addf %612, %613 : vector<1x32xf32>
    %615 = arith.divf %597, %614 : vector<1x32xf32>
    %cst_221 = arith.constant 0.000000e+00 : f32
    %616 = vector.broadcast %cst_221 : f32 to vector<1x1xf32>
    %617 = arith.maximumf %596, %616 : vector<1x1xf32>
    %618 = math.absf %596 : vector<1x1xf32>
    %cst_222 = arith.constant 0.000000e+00 : f32
    %619 = vector.broadcast %cst_222 : f32 to vector<1x1xf32>
    %620 = arith.subf %619, %618 : vector<1x1xf32>
    %621 = math.exp %620 : vector<1x1xf32>
    %cst_223 = arith.constant 1.000000e+00 : f32
    %622 = vector.broadcast %cst_223 : f32 to vector<1x1xf32>
    %623 = arith.addf %622, %621 : vector<1x1xf32>
    %624 = math.log %623 : vector<1x1xf32>
    %625 = arith.addf %617, %624 : vector<1x1xf32>
    %626 = vector.broadcast %625 : vector<1x1xf32> to vector<1x32xf32>
    %627 = arith.mulf %615, %626 : vector<1x32xf32>
    %cst_224 = arith.constant dense<0xFF800000> : vector<1xf32>
    %628 = vector.multi_reduction <maximumf>, %627, %cst_224 [1] : vector<1x32xf32> to vector<1xf32>
    %629 = vector.shape_cast %628 : vector<1xf32> to vector<1x1xf32>
    %630 = vector.broadcast %629 : vector<1x1xf32> to vector<1x32xf32>
    %631 = arith.subf %627, %630 : vector<1x32xf32>
    %632 = math.exp %631 : vector<1x32xf32>
    %cst_225 = arith.constant dense<0.000000e+00> : vector<1xf32>
    %633 = vector.multi_reduction <add>, %632, %cst_225 [1] : vector<1x32xf32> to vector<1xf32>
    %634 = vector.shape_cast %633 : vector<1xf32> to vector<1x1xf32>
    %635 = vector.broadcast %634 : vector<1x1xf32> to vector<1x32xf32>
    %636 = arith.divf %632, %635 : vector<1x32xf32>
    %637 = vector.extract_strided_slice %358 {offsets = [1, 0], sizes = [1, 32], strides = [1, 1]} : vector<2x32xf32> to vector<1x32xf32>
    %638 = vector.extract_strided_slice %594 {offsets = [0, 2], sizes = [1, 1], strides = [1, 1]} : vector<1x3xf32> to vector<1x1xf32>
    %639 = vector.broadcast %638 : vector<1x1xf32> to vector<1x32xf32>
    %640 = arith.mulf %639, %636 : vector<1x32xf32>
    %cst_226 = arith.constant dense<0.000000e+00> : vector<1x32xf32>
    %641 = tpu.matmul %637, %498, %cst_226 {dimension_numbers = #tpu.dot_dimension_numbers<[1], [1], [0], [0], [0, 0, 1, 0], [], []>} : vector<1x32xf32>, vector<32x32xf32>, vector<1x32xf32> -> vector<1x32xf32>
    %cst_227 = arith.constant dense<0.000000e+00> : vector<1x32xf32>
    %642 = tpu.matmul %637, %498, %cst_227 {dimension_numbers = #tpu.dot_dimension_numbers<[1], [0], [0], [1], [0, 0, 1, 1], [], []>} : vector<1x32xf32>, vector<32x32xf32>, vector<1x32xf32> -> vector<1x32xf32>
    %643 = vector.extract_strided_slice %594 {offsets = [0, 1], sizes = [1, 1], strides = [1, 1]} : vector<1x3xf32> to vector<1x1xf32>
    %644 = vector.broadcast %643 : vector<1x1xf32> to vector<1x32xf32>
    %645 = arith.mulf %644, %641 : vector<1x32xf32>
    %646 = arith.addf %640, %645 : vector<1x32xf32>
    %647 = vector.extract_strided_slice %594 {offsets = [0, 0], sizes = [1, 1], strides = [1, 1]} : vector<1x3xf32> to vector<1x1xf32>
    %648 = vector.broadcast %647 : vector<1x1xf32> to vector<1x32xf32>
    %649 = arith.mulf %648, %642 : vector<1x32xf32>
    %650 = arith.addf %646, %649 : vector<1x32xf32>
    %c1_228 = arith.constant 1 : index
    %c1_229 = arith.constant 1 : index
    %c0_230 = arith.constant 0 : index
    %651 = vector.load %arg11[%c1_228, %c1_229, %c0_230] : memref<2x2x32xf32, #tpu.memory_space<vmem>>, vector<1x1x32xf32>
    %652 = vector.shape_cast %651 : vector<1x1x32xf32> to vector<1x32xf32>
    %653 = vector.shape_cast %650 : vector<1x32xf32> to vector<1x1x32xf32>
    tpu.vector_store %arg11[%c1_228, %c1_229, %c0_230], %653 {strides = array<i32>} : memref<2x2x32xf32, #tpu.memory_space<vmem>>, vector<1x1x32xf32>,
    %cst_231 = arith.constant dense<0.000000e+00> : vector<1x16xf32>
    %654 = tpu.matmul %650, %480, %cst_231 {dimension_numbers = #tpu.dot_dimension_numbers<[1], [0], [0], [1], [0, 0, 1, 1], [], []>} : vector<1x32xf32>, vector<32x16xf32>, vector<1x16xf32> -> vector<1x16xf32>
    %c1_232 = arith.constant 1 : index
    %c1_233 = arith.constant 1 : index
    %c0_234 = arith.constant 0 : index
    %655 = vector.load %arg9[%c1_232, %c1_233, %c0_234] : memref<2x2x16xf32, #tpu.memory_space<vmem>>, vector<1x1x16xf32>
    %656 = vector.shape_cast %655 : vector<1x1x16xf32> to vector<1x16xf32>
    %657 = vector.shape_cast %654 : vector<1x16xf32> to vector<1x1x16xf32>
    tpu.vector_store %arg9[%c1_232, %c1_233, %c0_234], %657 {strides = array<i32>} : memref<2x2x16xf32, #tpu.memory_space<vmem>>, vector<1x1x16xf32>,
    return
  }
}

</mosaic_0001>

<llo_original>
// kernel: tpu_custom_call.1
$region0: #{tpu_custom_call.1}
  #allocation0 [shape = 'u32[]', space=smem, size = 0x4, offset = 0x4, fixed_abs, tag = 'smem constant byte address 0x4 - core index']
  #allocation1 [shape = 'u32[144,128]{1,0:T(1,128)}', space=vmem, size = 0x12000, scoped, tag = 'internal scratch']
  %s0 = inlined_call_operand.vmem [shape: f32[2,32], index: 0, kind: input, shape index: {}]
  %s1 = inlined_call_operand.vmem [shape: f32[32,128], index: 1, kind: input, shape index: {}]
  %s2 = inlined_call_operand.vmem [shape: f32[1,128], index: 2, kind: input, shape index: {}]
  %s3 = inlined_call_operand.vmem [shape: f32[2,32,16], index: 3, kind: input, shape index: {}]
  %s4 = inlined_call_operand.vmem [shape: f32[2,2,32], index: 4, kind: input, shape index: {}]
  %s5 = inlined_call_operand.vmem [shape: f32[2,1,32], index: 5, kind: input, shape index: {}]
  %s6 = inlined_call_operand.vmem [shape: f32[2,1,32,32], index: 6, kind: input, shape index: {}]
  %s7 = inlined_call_operand.vmem [shape: f32[2,1,32], index: 7, kind: input, shape index: {}]
  %s8 = inlined_call_operand.vmem [shape: f32[2,32], index: 8, kind: input, shape index: {}]
  %s9 = inlined_call_operand.hbm [shape: f32[2,2,16], index: 9, kind: output, shape index: {0}]
  %s10 = inlined_call_operand.vmem [shape: f32[2,32,16], index: 10, kind: output, shape index: {1}]
  %s11 = inlined_call_operand.hbm [shape: f32[2,2,32], index: 11, kind: output, shape index: {2}]
  %s12 = inlined_call_operand.hbm [shape: f32[2,1,32], index: 12, kind: output, shape index: {3}]
  %s13 = inlined_call_operand.hbm [shape: f32[2,1,32,32], index: 13, kind: output, shape index: {4}]
  %s14 = inlined_call_operand.hbm [shape: f32[2,1,32], index: 14, kind: output, shape index: {5}]
  %s15 = inlined_call_operand.hbm [shape: f32[2,32], index: 15, kind: output, shape index: {6}]
  %16 = xla_tuple %s9, %s10, %s11, %s12, %s13, %s14, %s15
  %s17 = sld [smem:[#allocation0]]
  $region94: #{tpu_custom_call.1} parent=0
    _
  %s19 = ssub.s32 1, %s17
  %s20 = scalar_select 0, %s19, %s17
  $region1: #{tpu_custom_call.1} parent=0
    #allocation2 [shape = 'u8[2048]{0}', space=vmem, size = 0x800, scoped, tag = 'output window, operand 0, single buffered']
    #allocation3 [shape = 's32[1]{0}', space=sflag, size = 0x4, scoped, tag = 'scoped memory for tpu_custom_call.1']
    #allocation4 [shape = 'u8[2048]{0}', space=vmem, size = 0x800, scoped, tag = 'output window, operand 2, single buffered']
    #allocation5 [shape = 's32[1]{0}', space=sflag, size = 0x4, scoped, tag = 'scoped memory for tpu_custom_call.1']
    #allocation6 [shape = 'u8[1024]{0}', space=vmem, size = 0x400, scoped, tag = 'output window, operand 3, single buffered']
    #allocation7 [shape = 'u8[32768]{0}', space=vmem, size = 0x8000, scoped, tag = 'output window, operand 4, single buffered']
    #allocation8 [shape = 's32[1]{0}', space=sflag, size = 0x4, scoped, tag = 'scoped memory for tpu_custom_call.1']
    #allocation9 [shape = 'u8[1024]{0}', space=vmem, size = 0x400, scoped, tag = 'output window, operand 5, single buffered']
    #allocation10 [shape = 'u8[1024]{0}', space=vmem, size = 0x400, scoped, tag = 'output window, operand 6, single buffered']
    #allocation11 [shape = 's32[1]{0}', space=sflag, size = 0x4, scoped, tag = 'scoped memory for tpu_custom_call.1']
    %21 = vsyncpa [#allocation3], 0
    %22 = vsyncpa [#allocation5], 0
    %23 = vsyncpa [#allocation8], 0
    %24 = vsyncpa [#allocation11], 0
    // Predicated region
    $region2: #{tpu_custom_call.1} parent=1 // pred_check
      _
    $region3: #{tpu_custom_call.1} parent=1 // pred_check_branch
      %26 = sbr.rel (0) target = $region5
    $region4: #{tpu_custom_call.1} parent=1 // pred_region
      _
    $region5: #{tpu_custom_call.1} parent=1 // pred_fallthru
      _
    // Predicated region
    $region6: #{tpu_custom_call.1} parent=1 // pred_check
      _
    $region7: #{tpu_custom_call.1} parent=1 // pred_check_branch
      %28 = sbr.rel (0) target = $region9
    $region8: #{tpu_custom_call.1} parent=1 // pred_region
      _
    $region9: #{tpu_custom_call.1} parent=1 // pred_fallthru
      _
    // Predicated region
    $region10: #{tpu_custom_call.1} parent=1 // pred_check
      _
    $region11: #{tpu_custom_call.1} parent=1 // pred_check_branch
      %30 = sbr.rel (0) target = $region13
    $region12: #{tpu_custom_call.1} parent=1 // pred_region
      _
    $region13: #{tpu_custom_call.1} parent=1 // pred_fallthru
      _
    // Predicated region
    $region14: #{tpu_custom_call.1} parent=1 // pred_check
      _
    $region15: #{tpu_custom_call.1} parent=1 // pred_check_branch
      %32 = sbr.rel (0) target = $region17
    $region16: #{tpu_custom_call.1} parent=1 // pred_region
      _
    $region17: #{tpu_custom_call.1} parent=1 // pred_fallthru
      _
    // Predicated region
    $region18: #{tpu_custom_call.1} parent=1 // pred_check
      _
    $region19: #{tpu_custom_call.1} parent=1 // pred_check_branch
      %34 = sbr.rel (0) target = $region21
    $region20: #{tpu_custom_call.1} parent=1 // pred_region
      _
    $region21: #{tpu_custom_call.1} parent=1 // pred_fallthru
      _
    // Predicated region
    $region22: #{tpu_custom_call.1} parent=1 // pred_check
      _
    $region23: #{tpu_custom_call.1} parent=1 // pred_check_branch
      %36 = sbr.rel (0) target = $region25
    $region24: #{tpu_custom_call.1} parent=1 // pred_region
      _
    $region25: #{tpu_custom_call.1} parent=1 // pred_fallthru
      _
    // Predicated region
    $region26: #{tpu_custom_call.1} parent=1 // pred_check
      _
    $region27: #{tpu_custom_call.1} parent=1 // pred_check_branch
      %38 = sbr.rel (0) target = $region29
    $region28: #{tpu_custom_call.1} parent=1 // pred_region
      _
    $region29: #{tpu_custom_call.1} parent=1 // pred_fallthru
      _
    // Predicated region
    $region30: #{tpu_custom_call.1} parent=1 // pred_check
      _
    $region31: #{tpu_custom_call.1} parent=1 // pred_check_branch
      %40 = sbr.rel (0) target = $region33
    $region32: #{tpu_custom_call.1} parent=1 // pred_region
      _
    $region33: #{tpu_custom_call.1} parent=1 // pred_fallthru
      _
    // Predicated region
    $region34: #{tpu_custom_call.1} parent=1 // pred_check
      _
    $region35: #{tpu_custom_call.1} parent=1 // pred_check_branch
      %42 = sbr.rel (0) target = $region37
    $region36: #{tpu_custom_call.1} parent=1 // pred_region
      _
    $region37: #{tpu_custom_call.1} parent=1 // pred_fallthru
      _
    %v43 = vld [vmem:[%s0] sm:$0x3]
    %v44 = vld [vmem:[%s1] sm:$0xff]
    %v45 = vld [vmem:[%s1 + $0x8] sm:$0xff]
    %v46 = vld [vmem:[%s1 + $0x10] sm:$0xff]
    %v47 = vld [vmem:[%s1 + $0x18] sm:$0xff]
    %v48 = vld [vmem:[%s2] sm:$0x1]
    %v50 = vlaneseq
    %v51 = vshrl.u32 %v50, 7
    %v52 = vsub.s32 0, %v51
    %v53 = vrot.slane %v48, %v52
    %vm55 = vcmask 261120
    %v57 = vsel %vm55, %v43, 0
    %59 = vmatprep.subr.mxu0 0.0
    %60 = vmatpush1.msra.mxu0 %v44
    %61 = vmatprep.subr.mxu0 0.0
    %62 = vmatpush1.msra.mxu0 %v45
    %63 = vmatprep.subr.mxu0 0.0
    %64 = vmatpush1.msra.mxu0 %v46
    %65 = vmatprep.subr.mxu0 0.0
    %66 = vmatpush1.msra.mxu0 %v47
    %67 = vmatprep.subr.mxu0 0.0
    %68 = vmatpush1.msra.mxu0 0.0
    %69 = vmatprep.subr.mxu0 0.0
    %70 = vmatpush1.msra.mxu0 0.0
    %71 = vmatprep.subr.mxu0 0.0
    %72 = vmatpush1.msra.mxu0 0.0
    %73 = vmatprep.subr.mxu0 0.0
    %74 = vmatpush1.msra.mxu0 0.0
    %75 = vmatprep.subr.mxu0 0.0
    %76 = vmatpush1.msra.mxu0 0.0
    %77 = vmatprep.subr.mxu0 0.0
    %78 = vmatpush1.msra.mxu0 0.0
    %79 = vmatprep.subr.mxu0 0.0
    %80 = vmatpush1.msra.mxu0 0.0
    %81 = vmatprep.subr.mxu0 0.0
    %82 = vmatpush1.msra.mxu0 0.0
    %83 = vmatprep.subr.mxu0 0.0
    %84 = vmatpush1.msra.mxu0 0.0
    %85 = vmatprep.subr.mxu0 0.0
    %86 = vmatpush1.msra.mxu0 0.0
    %87 = vmatprep.subr.mxu0 0.0
    %88 = vmatpush1.msra.mxu0 0.0
    %89 = vmatprep.subr.mxu0 0.0
    %90 = vmatpush1.msra.mxu0 0.0
    %91 = vmatprep.subr.mxu0 0.0
    %92 = vmatpush1.msra.mxu0 0.0
    %93 = vmatprep.subr.mxu0 0.0
    %94 = vmatpush1.msra.mxu0 0.0
    %95 = vmatprep.subr.mxu0 0.0
    %96 = vmatpush1.msra.mxu0 0.0
    %97 = vmatprep.subr.mxu0 0.0
    %98 = vmatpush1.msra.mxu0 0.0
    %99 = vmatprep.subr.mxu0 0.0
    %100 = vmatpush1.msra.mxu0 0.0
    %101 = vmatprep.subr.mxu0 0.0
    %102 = vmatpush1.msra.mxu0 0.0
    %103 = vmatprep.subr.mxu0 0.0
    %104 = vmatpush1.msra.mxu0 0.0
    %105 = vmatprep.subr.mxu0 0.0
    %106 = vmatpush1.msra.mxu0 0.0
    %107 = vmatprep.subr.mxu0 0.0
    %108 = vmatpush1.msra.mxu0 0.0
    %109 = vmatprep.subr.mxu0 0.0
    %110 = vmatpush1.msra.mxu0 0.0
    %111 = vmatprep.subr.mxu0 0.0
    %112 = vmatpush1.msra.mxu0 0.0
    %113 = vmatprep.subr.mxu0 0.0
    %114 = vmatpush1.msra.mxu0 0.0
    %115 = vmatprep.subr.mxu0 0.0
    %116 = vmatpush1.msra.mxu0 0.0
    %117 = vmatprep.subr.mxu0 0.0
    %118 = vmatpush1.msra.mxu0 0.0
    %119 = vmatprep.subr.mxu0 0.0
    %120 = vmatpush1.msra.mxu0 0.0
    %121 = vmatprep.subr.mxu0 0.0
    %122 = vmatpush1.msra.mxu0 0.0
    %123 = vmatprep.mubr.f32.mxu0 0.0
    %124 = vmatmul.mubr.f32.gmra.mrb[0].mxu0 %v57
    %v125 = vpop.f32.mrb[0].mxu0
    %v126 = vadd.f32 %v53, %v125
    %v127 = vpop.f32.mrb[0].mxu0
    %128 = vdwg.mxu0
    %v129 = vld [vmem:[%s8] sm:$0x3]
    %v130 = vsub.f32 0.0, %v126
    %v131 = vmul.f32 %v130, 1.442695
    %v132 = vpow.pop %v131
    %v133 = vadd.f32 %v132, 1.0
    %v134 = vrcp.pop %v133
    %v135 = vmul.f32 1.0, %v134
    %v136 = vld [vmem:[%s5] sm:$0x1]
    %v137 = vld [vmem:[%s5 + $0x1] sm:$0x1]
    %v138 = vsub.f32 1.0, %v136
    %v139 = vsub.f32 1.0, %v137
    %v140 = vsub.f32 1.0, %v129
    %v141 = vsub.f32 1.0, %v138
    %v142 = vsub.f32 1.0, %v139
    %v145 = vcombine.low %v141, %v142
    %v147 = vunpack.c.l.s4 1966171168
    %v148 = vunpack.c.0.s8 %v147
    %v149 = vlaneseq
    %v150 = vshrl.u32 %v149, 7
    %v151 = vsub.s32 %v148, %v150
    %v152 = vrot.slane %v145, %v151
    %v154 = vunpack.c.l.s4 1966171168
    %v155 = vunpack.c.0.s8 %v154
    %v156 = vlaneseq
    %v157 = vshrl.u32 %v156, 7
    %v158 = vsub.s32 %v155, %v157
    %v159 = vrot.slane %v152, %v158
    %v161 = vmul.f32 %v140, %v159
    %v162 = vadd.f32 %v129, %v161
    %v163 = vld [vmem:[%s4] sm:$0x1]
    %v164 = vld [vmem:[%s4 + $0x2] sm:$0x1]
    %166 = vset.pattern.permute.xlu0 32
    %167 = vperm.xlu0 %166, %v135
    %v168 = vpop.permute.xlu0 %167
    %v172 = vrot.slane %v164, 7
    %vm173 = vcmask 1041409
    %v174 = vsel %vm173, %v172, %v163
    %v176 = vmul.f32 %v168, %v174
    %v177 = vsub.f32 1.0, %v176
    %v178 = vld [vmem:[%s4 + $0x1] sm:$0x1]
    %v179 = vld [vmem:[%s4 + $0x3] sm:$0x1]
    %180 = vset.pattern.permute.xlu0 33
    %181 = vperm.xlu0 %180, %v135
    %v182 = vpop.permute.xlu0 %181
    %v186 = vrot.slane %v179, 7
    %v187 = vsel %vm173, %v186, %v178
    %v189 = vmul.f32 %v182, %v187
    %v190 = vsub.f32 1.0, %v189
    %v191 = vmul.f32 %v177, %v190
    %v192 = vmul.f32 %v162, %v191
    %vm193 = vcmask 254976
    %194 = vst.msk [vmem:[#allocation10] sm:$0x3] %vm193, %v192
    %v195 = vlaneseq
    %v196 = vshrl.u32 %v195, 7
    %v197 = vadd.s32 %v196, 8
    %v198 = vadd.s32 %v196, 16
    %v199 = vadd.s32 %v196, 24
    %v200 = vlaneseq
    %v201 = vand.u32 %v200, 127
    %vm202 = vcmp.eq.s32.totalorder %v196, %v201
    %vm203 = vcmp.eq.s32.totalorder %v197, %v201
    %vm204 = vcmp.eq.s32.totalorder %v198, %v201
    %vm205 = vcmp.eq.s32.totalorder %v199, %v201
    %vm206 = vcmp.lt.s32.totalorder %v196, %v201
    %vm207 = vcmp.lt.s32.totalorder %v197, %v201
    %vm208 = vcmp.lt.s32.totalorder %v198, %v201
    %vm209 = vcmp.lt.s32.totalorder %v199, %v201
    %v210 = vld [vmem:[%s3] sm:$0xff]
    %v211 = vld [vmem:[%s3 + $0x8] sm:$0xff]
    %v212 = vld [vmem:[%s3 + $0x10] sm:$0xff]
    %v213 = vld [vmem:[%s3 + $0x18] sm:$0xff]
    %v214 = vld [vmem:[%s4] sm:$0x3]
    %v215 = vld [vmem:[%s7] sm:$0x1]
    %v216 = vmul.f32 %v192, 0.999999
    %v217 = vadd.f32 %v216, 1e-06
    %218 = vxpose.xlu0.b32.start [1/16] %v217, 128
    %219 = vxpose.xlu0.b32.cont [2/16] 0.0, 128
    %220 = vxpose.xlu0.b32.cont [3/16] 0.0, 128
    %221 = vxpose.xlu0.b32.cont [4/16] 0.0, 128
    %222 = vxpose.xlu0.b32.cont [5/16] 0.0, 128
    %223 = vxpose.xlu0.b32.cont [6/16] 0.0, 128
    %224 = vxpose.xlu0.b32.cont [7/16] 0.0, 128
    %225 = vxpose.xlu0.b32.cont [8/16] 0.0, 128
    %226 = vxpose.xlu0.b32.cont [9/16] 0.0, 128
    %227 = vxpose.xlu0.b32.cont [10/16] 0.0, 128
    %228 = vxpose.xlu0.b32.cont [11/16] 0.0, 128
    %229 = vxpose.xlu0.b32.cont [12/16] 0.0, 128
    %230 = vxpose.xlu0.b32.cont [13/16] 0.0, 128
    %231 = vxpose.xlu0.b32.cont [14/16] 0.0, 128
    %232 = vxpose.xlu0.b32.cont [15/16] 0.0, 128
    %233 = vxpose.xlu0.b32.end [16/16] 0.0, 128
    %v234 = vpop.trf.xlu0
    %v235 = vpop.trf.xlu0
    %v236 = vpop.trf.xlu0
    %v237 = vpop.trf.xlu0
    %v238 = vpop.trf.xlu0
    %v239 = vpop.trf.xlu0
    %v240 = vpop.trf.xlu0
    %v241 = vpop.trf.xlu0
    %v242 = vpop.trf.xlu0
    %v243 = vpop.trf.xlu0
    %v244 = vpop.trf.xlu0
    %v245 = vpop.trf.xlu0
    %v246 = vpop.trf.xlu0
    %v247 = vpop.trf.xlu0
    %v248 = vpop.trf.xlu0
    %v249 = vpop.trf.xlu0
    %251 = vset.pattern.permute.xlu0 0
    %252 = vperm.xlu0 %251, %v234
    %v253 = vpop.permute.xlu0 %252
    %256 = vset.pattern.permute.xlu0 0
    %257 = vperm.xlu0 %256, %v235
    %v258 = vpop.permute.xlu0 %257
    %261 = vset.pattern.permute.xlu0 0
    %262 = vperm.xlu0 %261, %v236
    %v263 = vpop.permute.xlu0 %262
    %266 = vset.pattern.permute.xlu0 0
    %267 = vperm.xlu0 %266, %v237
    %v268 = vpop.permute.xlu0 %267
    %v270 = vlaneseq
    %v271 = vshrl.u32 %v270, 7
    %v272 = vsub.s32 0, %v271
    %v273 = vrot.slane %v217, %v272
    %vm274 = vcmp.lt.f32.partialorder %v253, %v273
    %vm275 = vcmp.lt.f32.partialorder %v258, %v273
    %vm276 = vcmp.lt.f32.partialorder %v263, %v273
    %vm277 = vcmp.lt.f32.partialorder %v268, %v273
    %vm278 = vcmp.eq.f32.partialorder %v253, %v273
    %vm279 = vcmp.eq.f32.partialorder %v258, %v273
    %vm280 = vcmp.eq.f32.partialorder %v263, %v273
    %vm281 = vcmp.eq.f32.partialorder %v268, %v273
    %vm282 = vmand %vm278, %vm206
    %vm283 = vmand %vm279, %vm207
    %vm284 = vmand %vm280, %vm208
    %vm285 = vmand %vm281, %vm209
    %vm286 = vmor %vm274, %vm282
    %vm287 = vmor %vm275, %vm283
    %vm288 = vmor %vm276, %vm284
    %vm289 = vmor %vm277, %vm285
    %v290 = vsel %vm286, 1.0, 0.0
    %v291 = vsel %vm287, 1.0, 0.0
    %v292 = vsel %vm288, 1.0, 0.0
    %v293 = vsel %vm289, 1.0, 0.0
    %v294 = vlog2.pop %v234
    %v295 = vmul.f32 %v294, 0.6931472
    %v296 = vlog2.pop %v235
    %v297 = vmul.f32 %v296, 0.6931472
    %v298 = vlog2.pop %v236
    %v299 = vmul.f32 %v298, 0.6931472
    %v300 = vlog2.pop %v237
    %v301 = vmul.f32 %v300, 0.6931472
    %303 = vset.pattern.permute.xlu0 0
    %304 = vperm.xlu0 %303, %v295
    %v305 = vpop.permute.xlu0 %304
    %308 = vset.pattern.permute.xlu0 0
    %309 = vperm.xlu0 %308, %v297
    %v310 = vpop.permute.xlu0 %309
    %313 = vset.pattern.permute.xlu0 0
    %314 = vperm.xlu0 %313, %v299
    %v315 = vpop.permute.xlu0 %314
    %318 = vset.pattern.permute.xlu0 0
    %319 = vperm.xlu0 %318, %v301
    %v320 = vpop.permute.xlu0 %319
    %v322 = vmul.f32 %v290, %v305
    %v323 = vmul.f32 %v291, %v310
    %v324 = vmul.f32 %v292, %v315
    %v325 = vmul.f32 %v293, %v320
    %v326 = vsel %vm55, %v322, 0.0
    %v327 = vsel %vm55, %v323, 0.0
    %v328 = vadd.f32 %v326, %v327
    %v329 = vsel %vm55, %v324, 0.0
    %v330 = vadd.f32 %v328, %v329
    %v331 = vsel %vm55, %v325, 0.0
    %v332 = vadd.f32 %v330, %v331
    %v333 = vrot.slane %v332, 4
    %v334 = vadd.f32 %v332, %v333
    %v335 = vrot.slane %v334, 2
    %v336 = vadd.f32 %v334, %v335
    %v337 = vrot.slane %v336, 1
    %v338 = vadd.f32 %v336, %v337
    %v339 = vsub.f32 1.0, %v217
    %v340 = vmul.f32 %v338, 1.442695
    %v341 = vpow.pop %v340
    %v342 = vmul.f32 %v339, %v341
    %344 = vrot.lane.b32.xlu0 %v126, 86
    %v345 = vpop.permute.xlu0 %344
    %vm346 = vcmask 130048
    %v347 = vsel %vm346, %v345, 0
    %v350 = vsel %vm346, %v210, 0
    %v353 = vsel %vm346, %v211, 0
    %v356 = vsel %vm346, %v212, 0
    %v359 = vsel %vm346, %v213, 0
    %361 = vmatprep.subr.mxu0 0.0
    %362 = vmatpush1.xpose.msra.mxu0 %v350
    %363 = vmatprep.subr.mxu0 0.0
    %364 = vmatpush1.xpose.msra.mxu0 %v353
    %365 = vmatprep.subr.mxu0 0.0
    %366 = vmatpush1.xpose.msra.mxu0 %v356
    %367 = vmatprep.subr.mxu0 0.0
    %368 = vmatpush1.xpose.msra.mxu0 %v359
    %369 = vmatprep.subr.mxu0 0.0
    %370 = vmatpush1.xpose.msra.mxu0 0.0
    %371 = vmatprep.subr.mxu0 0.0
    %372 = vmatpush1.xpose.msra.mxu0 0.0
    %373 = vmatprep.subr.mxu0 0.0
    %374 = vmatpush1.xpose.msra.mxu0 0.0
    %375 = vmatprep.subr.mxu0 0.0
    %376 = vmatpush1.xpose.msra.mxu0 0.0
    %377 = vmatprep.subr.mxu0 0.0
    %378 = vmatpush1.xpose.msra.mxu0 0.0
    %379 = vmatprep.subr.mxu0 0.0
    %380 = vmatpush1.xpose.msra.mxu0 0.0
    %381 = vmatprep.subr.mxu0 0.0
    %382 = vmatpush1.xpose.msra.mxu0 0.0
    %383 = vmatprep.subr.mxu0 0.0
    %384 = vmatpush1.xpose.msra.mxu0 0.0
    %385 = vmatprep.subr.mxu0 0.0
    %386 = vmatpush1.xpose.msra.mxu0 0.0
    %387 = vmatprep.subr.mxu0 0.0
    %388 = vmatpush1.xpose.msra.mxu0 0.0
    %389 = vmatprep.subr.mxu0 0.0
    %390 = vmatpush1.xpose.msra.mxu0 0.0
    %391 = vmatprep.subr.mxu0 0.0
    %392 = vmatpush1.xpose.msra.mxu0 0.0
    %393 = vmatprep.subr.mxu0 0.0
    %394 = vmatpush1.xpose.msra.mxu0 0.0
    %395 = vmatprep.subr.mxu0 0.0
    %396 = vmatpush1.xpose.msra.mxu0 0.0
    %397 = vmatprep.subr.mxu0 0.0
    %398 = vmatpush1.xpose.msra.mxu0 0.0
    %399 = vmatprep.subr.mxu0 0.0
    %400 = vmatpush1.xpose.msra.mxu0 0.0
    %401 = vmatprep.subr.mxu0 0.0
    %402 = vmatpush1.xpose.msra.mxu0 0.0
    %403 = vmatprep.subr.mxu0 0.0
    %404 = vmatpush1.xpose.msra.mxu0 0.0
    %405 = vmatprep.subr.mxu0 0.0
    %406 = vmatpush1.xpose.msra.mxu0 0.0
    %407 = vmatprep.subr.mxu0 0.0
    %408 = vmatpush1.xpose.msra.mxu0 0.0
    %409 = vmatprep.subr.mxu0 0.0
    %410 = vmatpush1.xpose.msra.mxu0 0.0
    %411 = vmatprep.subr.mxu0 0.0
    %412 = vmatpush1.xpose.msra.mxu0 0.0
    %413 = vmatprep.subr.mxu0 0.0
    %414 = vmatpush1.xpose.msra.mxu0 0.0
    %415 = vmatprep.subr.mxu0 0.0
    %416 = vmatpush1.xpose.msra.mxu0 0.0
    %417 = vmatprep.subr.mxu0 0.0
    %418 = vmatpush1.xpose.msra.mxu0 0.0
    %419 = vmatprep.subr.mxu0 0.0
    %420 = vmatpush1.xpose.msra.mxu0 0.0
    %421 = vmatprep.subr.mxu0 0.0
    %422 = vmatpush1.xpose.msra.mxu0 0.0
    %423 = vmatprep.subr.mxu0 0.0
    %424 = vmatpush1.xpose.msra.mxu0 0.0
    %425 = vmatprep.mubr.f32.mxu0 0.0
    %426 = vmatmul.mubr.f32.gmra.mrb[0].mxu0 %v347
    %v427 = vpop.f32.mrb[0].mxu0
    %v428 = vadd.f32 0.0, %v427
    %v429 = vpop.f32.mrb[0].mxu0
    %430 = vdwg.mxu0
    %v431 = vmul.f32 %v210, %v210
    %v432 = vmul.f32 %v211, %v211
    %v433 = vmul.f32 %v212, %v212
    %v434 = vmul.f32 %v213, %v213
    %v435 = vsel %vm346, %v431, 0.0
    %436 = vadd.xlane.f32.xlu0 %v435
    %v437 = vpop.xlane.xlu0 %436
    %v438 = vsel %vm346, %v432, 0.0
    %439 = vadd.xlane.f32.xlu0 %v438
    %v440 = vpop.xlane.xlu0 %439
    %v441 = vsel %vm346, %v433, 0.0
    %442 = vadd.xlane.f32.xlu0 %v441
    %v443 = vpop.xlane.xlu0 %442
    %v444 = vsel %vm346, %v434, 0.0
    %445 = vadd.xlane.f32.xlu0 %v444
    %v446 = vpop.xlane.xlu0 %445
    %v447 = vadd.f32 %v437, 1e-06
    %v448 = vadd.f32 %v440, 1e-06
    %v449 = vadd.f32 %v443, 1e-06
    %v450 = vadd.f32 %v446, 1e-06
    %v451 = vrsqrt.pop %v447
    %v452 = vmul.f32 %v447, %v451
    %vm453 = vcmp.eq.f32.partialorder %v447, inf
    %v454 = vsel %vm453, %v447, %v452
    %vm455 = vcmp.eq.f32.partialorder %v447, 0.0
    %v456 = vand.u32 %v447, 2147483648
    %v457 = vsel %vm455, %v456, %v454
    %v458 = vrsqrt.pop %v448
    %v459 = vmul.f32 %v448, %v458
    %vm460 = vcmp.eq.f32.partialorder %v448, inf
    %v461 = vsel %vm460, %v448, %v459
    %vm462 = vcmp.eq.f32.partialorder %v448, 0.0
    %v463 = vand.u32 %v448, 2147483648
    %v464 = vsel %vm462, %v463, %v461
    %v465 = vrsqrt.pop %v449
    %v466 = vmul.f32 %v449, %v465
    %vm467 = vcmp.eq.f32.partialorder %v449, inf
    %v468 = vsel %vm467, %v449, %v466
    %vm469 = vcmp.eq.f32.partialorder %v449, 0.0
    %v470 = vand.u32 %v449, 2147483648
    %v471 = vsel %vm469, %v470, %v468
    %v472 = vrsqrt.pop %v450
    %v473 = vmul.f32 %v450, %v472
    %vm474 = vcmp.eq.f32.partialorder %v450, inf
    %v475 = vsel %vm474, %v450, %v473
    %vm476 = vcmp.eq.f32.partialorder %v450, 0.0
    %v477 = vand.u32 %v450, 2147483648
    %v478 = vsel %vm476, %v477, %v475
    %v479 = vmul.f32 %v126, %v126
    %481 = vrot.lane.b32.xlu0 %v479, 86
    %v482 = vpop.permute.xlu0 %481
    %vm484 = vcmask 122880
    %v485 = vsel %vm484, %v482, 0.0
    %486 = vadd.xlane.f32.xlu0 %v485
    %v487 = vpop.xlane.xlu0 %486
    %v488 = vadd.f32 %v487, 1e-06
    %v489 = vrsqrt.pop %v488
    %v490 = vmul.f32 %v488, %v489
    %vm491 = vcmp.eq.f32.partialorder %v488, inf
    %v492 = vsel %vm491, %v488, %v490
    %vm493 = vcmp.eq.f32.partialorder %v488, 0.0
    %v494 = vand.u32 %v488, 2147483648
    %v495 = vsel %vm493, %v494, %v492
    %496 = vxpose.xlu0.b32.start [1/16] %v457, 128
    %497 = vxpose.xlu0.b32.cont [2/16] %v464, 128
    %498 = vxpose.xlu0.b32.cont [3/16] %v471, 128
    %499 = vxpose.xlu0.b32.cont [4/16] %v478, 128
    %500 = vxpose.xlu0.b32.cont [5/16] 0.0, 128
    %501 = vxpose.xlu0.b32.cont [6/16] 0.0, 128
    %502 = vxpose.xlu0.b32.cont [7/16] 0.0, 128
    %503 = vxpose.xlu0.b32.cont [8/16] 0.0, 128
    %504 = vxpose.xlu0.b32.cont [9/16] 0.0, 128
    %505 = vxpose.xlu0.b32.cont [10/16] 0.0, 128
    %506 = vxpose.xlu0.b32.cont [11/16] 0.0, 128
    %507 = vxpose.xlu0.b32.cont [12/16] 0.0, 128
    %508 = vxpose.xlu0.b32.cont [13/16] 0.0, 128
    %509 = vxpose.xlu0.b32.cont [14/16] 0.0, 128
    %510 = vxpose.xlu0.b32.cont [15/16] 0.0, 128
    %511 = vxpose.xlu0.b32.end [16/16] 0.0, 128
    %v512 = vpop.trf.xlu0
    %v513 = vpop.trf.xlu0
    %v514 = vpop.trf.xlu0
    %v515 = vpop.trf.xlu0
    %v516 = vpop.trf.xlu0
    %v517 = vpop.trf.xlu0
    %v518 = vpop.trf.xlu0
    %v519 = vpop.trf.xlu0
    %v520 = vpop.trf.xlu0
    %v521 = vpop.trf.xlu0
    %v522 = vpop.trf.xlu0
    %v523 = vpop.trf.xlu0
    %v524 = vpop.trf.xlu0
    %v525 = vpop.trf.xlu0
    %v526 = vpop.trf.xlu0
    %v527 = vpop.trf.xlu0
    %v528 = vmul.f32 %v495, %v512
    %v529 = vadd.f32 %v528, 1e-06
    %v530 = vrcp.pop %v529
    %v531 = vmul.f32 %v428, %v530
    %v532 = vmax.f32 %v126, 0.0
    %v533 = vand.u32 2147483647, %v126
    %v534 = vsub.f32 0.0, %v533
    %v535 = vmul.f32 %v534, 1.442695
    %v536 = vpow.pop %v535
    %v537 = vadd.f32 %v536, 1.0
    %v538 = vlog2.pop %v537
    %v539 = vmul.f32 %v538, 0.6931472
    %v540 = vadd.f32 %v532, %v539
    %542 = vset.pattern.permute.xlu0 58
    %543 = vperm.xlu0 %542, %v540
    %v544 = vpop.permute.xlu0 %543
    %v546 = vmul.f32 %v531, %v544
    %vm547 = vcmask 253952
    %v548 = vsel %vm547, %v546, -inf
    %549 = vmax.xlane.f32.xlu0 %v548
    %v550 = vpop.xlane.xlu0 %549
    %v551 = vsub.f32 %v546, %v550
    %v552 = vmul.f32 %v551, 1.442695
    %v553 = vpow.pop %v552
    %v554 = vsel %vm547, %v553, 0.0
    %555 = vadd.xlane.f32.xlu0 %v554
    %v556 = vpop.xlane.xlu0 %555
    %v557 = vrcp.pop %v556
    %v558 = vmul.f32 %v553, %v557
    %559 = vset.pattern.permute.xlu0 34
    %560 = vperm.xlu0 %559, %v135
    %v561 = vpop.permute.xlu0 %560
    %v563 = vmul.f32 %v561, %v342
    %v564 = vsub.f32 1.0, %v135
    %566 = vset.pattern.permute.xlu0 34
    %567 = vperm.xlu0 %566, %v564
    %v568 = vpop.permute.xlu0 %567
    %v570 = vmul.f32 %v568, %v558
    %v571 = vadd.f32 %v563, %v570
    %572 = vset.pattern.permute.xlu0 35
    %573 = vperm.xlu0 %572, %v135
    %v574 = vpop.permute.xlu0 %573
    %v576 = vmul.f32 %v574, %v571
    %577 = vst.msk [vmem:[#allocation6] sm:$0x1] %vm547, %v576
    %578 = vxpose.xlu0.b32.start [1/16] %v576, 128
    %579 = vxpose.xlu0.b32.cont [2/16] 0.0, 128
    %580 = vxpose.xlu0.b32.cont [3/16] 0.0, 128
    %581 = vxpose.xlu0.b32.cont [4/16] 0.0, 128
    %582 = vxpose.xlu0.b32.cont [5/16] 0.0, 128
    %583 = vxpose.xlu0.b32.cont [6/16] 0.0, 128
    %584 = vxpose.xlu0.b32.cont [7/16] 0.0, 128
    %585 = vxpose.xlu0.b32.cont [8/16] 0.0, 128
    %586 = vxpose.xlu0.b32.cont [9/16] 0.0, 128
    %587 = vxpose.xlu0.b32.cont [10/16] 0.0, 128
    %588 = vxpose.xlu0.b32.cont [11/16] 0.0, 128
    %589 = vxpose.xlu0.b32.cont [12/16] 0.0, 128
    %590 = vxpose.xlu0.b32.cont [13/16] 0.0, 128
    %591 = vxpose.xlu0.b32.cont [14/16] 0.0, 128
    %592 = vxpose.xlu0.b32.cont [15/16] 0.0, 128
    %593 = vxpose.xlu0.b32.end [16/16] 0.0, 128
    %v594 = vpop.trf.xlu0
    %v595 = vpop.trf.xlu0
    %v596 = vpop.trf.xlu0
    %v597 = vpop.trf.xlu0
    %v598 = vpop.trf.xlu0
    %v599 = vpop.trf.xlu0
    %v600 = vpop.trf.xlu0
    %v601 = vpop.trf.xlu0
    %v602 = vpop.trf.xlu0
    %v603 = vpop.trf.xlu0
    %v604 = vpop.trf.xlu0
    %v605 = vpop.trf.xlu0
    %v606 = vpop.trf.xlu0
    %v607 = vpop.trf.xlu0
    %v608 = vpop.trf.xlu0
    %v609 = vpop.trf.xlu0
    %611 = vset.pattern.permute.xlu0 0
    %612 = vperm.xlu0 %611, %v594
    %v613 = vpop.permute.xlu0 %612
    %616 = vset.pattern.permute.xlu0 0
    %617 = vperm.xlu0 %616, %v595
    %v618 = vpop.permute.xlu0 %617
    %621 = vset.pattern.permute.xlu0 0
    %622 = vperm.xlu0 %621, %v596
    %v623 = vpop.permute.xlu0 %622
    %626 = vset.pattern.permute.xlu0 0
    %627 = vperm.xlu0 %626, %v597
    %v628 = vpop.permute.xlu0 %627
    %v630 = vlaneseq
    %v631 = vshrl.u32 %v630, 7
    %v632 = vsub.s32 0, %v631
    %v633 = vrot.slane %v135, %v632
    %v634 = vmul.f32 %v613, %v633
    %v635 = vmul.f32 %v618, %v633
    %v636 = vmul.f32 %v623, %v633
    %v637 = vmul.f32 %v628, %v633
    %v638 = vsub.f32 1.0, %v634
    %v639 = vsub.f32 1.0, %v635
    %v640 = vsub.f32 1.0, %v636
    %v641 = vsub.f32 1.0, %v637
    %v642 = vlaneseq
    %v643 = vshrl.u32 %v642, 7
    %v644 = vsub.s32 0, %v643
    %v645 = vrot.slane %v126, %v644
    %v646 = vmul.f32 %v613, %v645
    %v647 = vmul.f32 %v618, %v645
    %v648 = vmul.f32 %v623, %v645
    %v649 = vmul.f32 %v628, %v645
    %v650 = vadd.f32 %v646, 0.0
    %v651 = vadd.f32 %v647, 0.0
    %v652 = vadd.f32 %v648, 0.0
    %v653 = vadd.f32 %v649, 0.0
    %658 = vrot.lane.b32.xlu0 %v638, 112
    %v659 = vpop.permute.xlu0 %658
    %660 = vrot.lane.b32.xlu0 %v639, 112
    %v661 = vpop.permute.xlu0 %660
    %662 = vrot.lane.b32.xlu0 %v640, 112
    %v663 = vpop.permute.xlu0 %662
    %664 = vrot.lane.b32.xlu0 %v641, 112
    %v665 = vpop.permute.xlu0 %664
    %v670 = vmul.f32 %v210, %v659
    %v671 = vmul.f32 %v211, %v661
    %v672 = vmul.f32 %v212, %v663
    %v673 = vmul.f32 %v213, %v665
    %v674 = vadd.f32 %v670, %v650
    %v675 = vadd.f32 %v671, %v651
    %v676 = vadd.f32 %v672, %v652
    %v677 = vadd.f32 %v673, %v653
    %678 = vst.msk [vmem:[%s10] sm:$0xff] %vm346, %v674
    %679 = vst.msk [vmem:[%s10 + $0x8] sm:$0xff] %vm346, %v675
    %680 = vst.msk [vmem:[%s10 + $0x10] sm:$0xff] %vm346, %v676
    %681 = vst.msk [vmem:[%s10 + $0x18] sm:$0xff] %vm346, %v677
    %v682 = vld [vmem:[%s6] sm:$0xff]
    %v683 = vld [vmem:[%s6 + $0x8] sm:$0xff]
    %v684 = vld [vmem:[%s6 + $0x10] sm:$0xff]
    %v685 = vld [vmem:[%s6 + $0x18] sm:$0xff]
    %v686 = vsub.f32 1.0, %v594
    %v687 = vsub.f32 1.0, %v595
    %v688 = vsub.f32 1.0, %v596
    %v689 = vsub.f32 1.0, %v597
    %691 = vset.pattern.permute.xlu0 0
    %692 = vperm.xlu0 %691, %v686
    %v693 = vpop.permute.xlu0 %692
    %696 = vset.pattern.permute.xlu0 0
    %697 = vperm.xlu0 %696, %v687
    %v698 = vpop.permute.xlu0 %697
    %701 = vset.pattern.permute.xlu0 0
    %702 = vperm.xlu0 %701, %v688
    %v703 = vpop.permute.xlu0 %702
    %706 = vset.pattern.permute.xlu0 0
    %707 = vperm.xlu0 %706, %v689
    %v708 = vpop.permute.xlu0 %707
    %v710 = vlaneseq
    %v711 = vshrl.u32 %v710, 7
    %v712 = vsub.s32 0, %v711
    %v713 = vrot.slane %v576, %v712
    %v714 = vsub.f32 %v693, %v713
    %v715 = vsub.f32 %v698, %v713
    %v716 = vsub.f32 %v703, %v713
    %v717 = vsub.f32 %v708, %v713
    %v718 = vmul.f32 %v714, %v682
    %v719 = vmul.f32 %v715, %v683
    %v720 = vmul.f32 %v716, %v684
    %v721 = vmul.f32 %v717, %v685
    %v723 = vlaneseq
    %v724 = vshrl.u32 %v723, 7
    %v725 = vsub.s32 0, %v724
    %v726 = vrot.slane %v215, %v725
    %v728 = vmul.f32 %v613, %v726
    %v729 = vmul.f32 %v618, %v726
    %v730 = vmul.f32 %v623, %v726
    %v731 = vmul.f32 %v628, %v726
    %v732 = vadd.f32 %v718, %v728
    %v733 = vadd.f32 %v719, %v729
    %v734 = vadd.f32 %v720, %v730
    %v735 = vadd.f32 %v721, %v731
    %v736 = vsel %vm202, 0.0, %v732
    %v737 = vsel %vm203, 0.0, %v733
    %v738 = vsel %vm204, 0.0, %v734
    %v739 = vsel %vm205, 0.0, %v735
    %740 = vst.msk [vmem:[#allocation7] sm:$0xff] %vm55, %v736
    %741 = vst.msk [vmem:[#allocation7 + $0x8] sm:$0xff] %vm55, %v737
    %742 = vst.msk [vmem:[#allocation7 + $0x10] sm:$0xff] %vm55, %v738
    %743 = vst.msk [vmem:[#allocation7 + $0x18] sm:$0xff] %vm55, %v739
    %v744 = vsel %vm547, %v576, 0.0
    %745 = vadd.xlane.f32.xlu0 %v744
    %v746 = vpop.xlane.xlu0 %745
    %v747 = vsub.f32 1.0, %v746
    %v748 = vmul.f32 %v747, %v215
    %v749 = vadd.f32 %v748, %v576
    %750 = vst.msk [vmem:[#allocation9] sm:$0x1] %vm547, %v749
    %vm751 = vcmask 311584
    %v752 = vsel %vm751, %v126, -inf
    %753 = vmax.xlane.f32.xlu0 %v752
    %v754 = vpop.xlane.xlu0 %753
    %v755 = vsub.f32 %v126, %v754
    %v756 = vmul.f32 %v755, 1.442695
    %v757 = vpow.pop %v756
    %759 = vrot.lane.b32.xlu0 %v757, 92
    %v760 = vpop.permute.xlu0 %759
    %vm762 = vcmask 16384
    %v763 = vsel %vm762, %v760, 0.0
    %764 = vadd.xlane.f32.xlu0 %v763
    %v765 = vpop.xlane.xlu0 %764
    %v766 = vrcp.pop %v765
    %v767 = vmul.f32 %v757, %v766
    %768 = vrot.lane.b32.xlu0 %v126, 69
    %v769 = vpop.permute.xlu0 %768
    %v770 = vsel %vm346, %v769, 0
    %v773 = vsel %vm346, %v674, 0
    %v776 = vsel %vm346, %v675, 0
    %v779 = vsel %vm346, %v676, 0
    %v782 = vsel %vm346, %v677, 0
    %784 = vmatprep.subr.mxu0 0.0
    %785 = vmatpush1.xpose.msra.mxu0 %v773
    %786 = vmatprep.subr.mxu0 0.0
    %787 = vmatpush1.xpose.msra.mxu0 %v776
    %788 = vmatprep.subr.mxu0 0.0
    %789 = vmatpush1.xpose.msra.mxu0 %v779
    %790 = vmatprep.subr.mxu0 0.0
    %791 = vmatpush1.xpose.msra.mxu0 %v782
    %792 = vmatprep.subr.mxu0 0.0
    %793 = vmatpush1.xpose.msra.mxu0 0.0
    %794 = vmatprep.subr.mxu0 0.0
    %795 = vmatpush1.xpose.msra.mxu0 0.0
    %796 = vmatprep.subr.mxu0 0.0
    %797 = vmatpush1.xpose.msra.mxu0 0.0
    %798 = vmatprep.subr.mxu0 0.0
    %799 = vmatpush1.xpose.msra.mxu0 0.0
    %800 = vmatprep.subr.mxu0 0.0
    %801 = vmatpush1.xpose.msra.mxu0 0.0
    %802 = vmatprep.subr.mxu0 0.0
    %803 = vmatpush1.xpose.msra.mxu0 0.0
    %804 = vmatprep.subr.mxu0 0.0
    %805 = vmatpush1.xpose.msra.mxu0 0.0
    %806 = vmatprep.subr.mxu0 0.0
    %807 = vmatpush1.xpose.msra.mxu0 0.0
    %808 = vmatprep.subr.mxu0 0.0
    %809 = vmatpush1.xpose.msra.mxu0 0.0
    %810 = vmatprep.subr.mxu0 0.0
    %811 = vmatpush1.xpose.msra.mxu0 0.0
    %812 = vmatprep.subr.mxu0 0.0
    %813 = vmatpush1.xpose.msra.mxu0 0.0
    %814 = vmatprep.subr.mxu0 0.0
    %815 = vmatpush1.xpose.msra.mxu0 0.0
    %816 = vmatprep.subr.mxu0 0.0
    %817 = vmatpush1.xpose.msra.mxu0 0.0
    %818 = vmatprep.subr.mxu0 0.0
    %819 = vmatpush1.xpose.msra.mxu0 0.0
    %820 = vmatprep.subr.mxu0 0.0
    %821 = vmatpush1.xpose.msra.mxu0 0.0
    %822 = vmatprep.subr.mxu0 0.0
    %823 = vmatpush1.xpose.msra.mxu0 0.0
    %824 = vmatprep.subr.mxu0 0.0
    %825 = vmatpush1.xpose.msra.mxu0 0.0
    %826 = vmatprep.subr.mxu0 0.0
    %827 = vmatpush1.xpose.msra.mxu0 0.0
    %828 = vmatprep.subr.mxu0 0.0
    %829 = vmatpush1.xpose.msra.mxu0 0.0
    %830 = vmatprep.subr.mxu0 0.0
    %831 = vmatpush1.xpose.msra.mxu0 0.0
    %832 = vmatprep.subr.mxu0 0.0
    %833 = vmatpush1.xpose.msra.mxu0 0.0
    %834 = vmatprep.subr.mxu0 0.0
    %835 = vmatpush1.xpose.msra.mxu0 0.0
    %836 = vmatprep.subr.mxu0 0.0
    %837 = vmatpush1.xpose.msra.mxu0 0.0
    %838 = vmatprep.subr.mxu0 0.0
    %839 = vmatpush1.xpose.msra.mxu0 0.0
    %840 = vmatprep.subr.mxu0 0.0
    %841 = vmatpush1.xpose.msra.mxu0 0.0
    %842 = vmatprep.subr.mxu0 0.0
    %843 = vmatpush1.xpose.msra.mxu0 0.0
    %844 = vmatprep.subr.mxu0 0.0
    %845 = vmatpush1.xpose.msra.mxu0 0.0
    %846 = vmatprep.subr.mxu0 0.0
    %847 = vmatpush1.xpose.msra.mxu0 0.0
    %848 = vmatprep.mubr.f32.mxu0 0.0
    %849 = vmatmul.mubr.f32.gmra.mrb[0].mxu0 %v770
    %v850 = vpop.f32.mrb[0].mxu0
    %v851 = vadd.f32 0.0, %v850
    %v852 = vpop.f32.mrb[0].mxu0
    %853 = vdwg.mxu0
    %v854 = vmul.f32 %v674, %v674
    %v855 = vmul.f32 %v675, %v675
    %v856 = vmul.f32 %v676, %v676
    %v857 = vmul.f32 %v677, %v677
    %v858 = vsel %vm346, %v854, 0.0
    %859 = vadd.xlane.f32.xlu0 %v858
    %v860 = vpop.xlane.xlu0 %859
    %v861 = vsel %vm346, %v855, 0.0
    %862 = vadd.xlane.f32.xlu0 %v861
    %v863 = vpop.xlane.xlu0 %862
    %v864 = vsel %vm346, %v856, 0.0
    %865 = vadd.xlane.f32.xlu0 %v864
    %v866 = vpop.xlane.xlu0 %865
    %v867 = vsel %vm346, %v857, 0.0
    %868 = vadd.xlane.f32.xlu0 %v867
    %v869 = vpop.xlane.xlu0 %868
    %v870 = vadd.f32 %v860, 1e-06
    %v871 = vadd.f32 %v863, 1e-06
    %v872 = vadd.f32 %v866, 1e-06
    %v873 = vadd.f32 %v869, 1e-06
    %v874 = vrsqrt.pop %v870
    %v875 = vmul.f32 %v870, %v874
    %vm876 = vcmp.eq.f32.partialorder %v870, inf
    %v877 = vsel %vm876, %v870, %v875
    %vm878 = vcmp.eq.f32.partialorder %v870, 0.0
    %v879 = vand.u32 %v870, 2147483648
    %v880 = vsel %vm878, %v879, %v877
    %v881 = vrsqrt.pop %v871
    %v882 = vmul.f32 %v871, %v881
    %vm883 = vcmp.eq.f32.partialorder %v871, inf
    %v884 = vsel %vm883, %v871, %v882
    %vm885 = vcmp.eq.f32.partialorder %v871, 0.0
    %v886 = vand.u32 %v871, 2147483648
    %v887 = vsel %vm885, %v886, %v884
    %v888 = vrsqrt.pop %v872
    %v889 = vmul.f32 %v872, %v888
    %vm890 = vcmp.eq.f32.partialorder %v872, inf
    %v891 = vsel %vm890, %v872, %v889
    %vm892 = vcmp.eq.f32.partialorder %v872, 0.0
    %v893 = vand.u32 %v872, 2147483648
    %v894 = vsel %vm892, %v893, %v891
    %v895 = vrsqrt.pop %v873
    %v896 = vmul.f32 %v873, %v895
    %vm897 = vcmp.eq.f32.partialorder %v873, inf
    %v898 = vsel %vm897, %v873, %v896
    %vm899 = vcmp.eq.f32.partialorder %v873, 0.0
    %v900 = vand.u32 %v873, 2147483648
    %v901 = vsel %vm899, %v900, %v898
    %902 = vrot.lane.b32.xlu0 %v479, 69
    %v903 = vpop.permute.xlu0 %902
    %v905 = vsel %vm484, %v903, 0.0
    %906 = vadd.xlane.f32.xlu0 %v905
    %v907 = vpop.xlane.xlu0 %906
    %v908 = vadd.f32 %v907, 1e-06
    %v909 = vrsqrt.pop %v908
    %v910 = vmul.f32 %v908, %v909
    %vm911 = vcmp.eq.f32.partialorder %v908, inf
    %v912 = vsel %vm911, %v908, %v910
    %vm913 = vcmp.eq.f32.partialorder %v908, 0.0
    %v914 = vand.u32 %v908, 2147483648
    %v915 = vsel %vm913, %v914, %v912
    %916 = vxpose.xlu0.b32.start [1/16] %v880, 128
    %917 = vxpose.xlu0.b32.cont [2/16] %v887, 128
    %918 = vxpose.xlu0.b32.cont [3/16] %v894, 128
    %919 = vxpose.xlu0.b32.cont [4/16] %v901, 128
    %920 = vxpose.xlu0.b32.cont [5/16] 0.0, 128
    %921 = vxpose.xlu0.b32.cont [6/16] 0.0, 128
    %922 = vxpose.xlu0.b32.cont [7/16] 0.0, 128
    %923 = vxpose.xlu0.b32.cont [8/16] 0.0, 128
    %924 = vxpose.xlu0.b32.cont [9/16] 0.0, 128
    %925 = vxpose.xlu0.b32.cont [10/16] 0.0, 128
    %926 = vxpose.xlu0.b32.cont [11/16] 0.0, 128
    %927 = vxpose.xlu0.b32.cont [12/16] 0.0, 128
    %928 = vxpose.xlu0.b32.cont [13/16] 0.0, 128
    %929 = vxpose.xlu0.b32.cont [14/16] 0.0, 128
    %930 = vxpose.xlu0.b32.cont [15/16] 0.0, 128
    %931 = vxpose.xlu0.b32.end [16/16] 0.0, 128
    %v932 = vpop.trf.xlu0
    %v933 = vpop.trf.xlu0
    %v934 = vpop.trf.xlu0
    %v935 = vpop.trf.xlu0
    %v936 = vpop.trf.xlu0
    %v937 = vpop.trf.xlu0
    %v938 = vpop.trf.xlu0
    %v939 = vpop.trf.xlu0
    %v940 = vpop.trf.xlu0
    %v941 = vpop.trf.xlu0
    %v942 = vpop.trf.xlu0
    %v943 = vpop.trf.xlu0
    %v944 = vpop.trf.xlu0
    %v945 = vpop.trf.xlu0
    %v946 = vpop.trf.xlu0
    %v947 = vpop.trf.xlu0
    %v948 = vmul.f32 %v915, %v932
    %v949 = vadd.f32 %v948, 1e-06
    %v950 = vrcp.pop %v949
    %v951 = vmul.f32 %v851, %v950
    %952 = vset.pattern.permute.xlu0 91
    %953 = vperm.xlu0 %952, %v540
    %v954 = vpop.permute.xlu0 %953
    %v956 = vmul.f32 %v951, %v954
    %v957 = vsel %vm547, %v956, -inf
    %958 = vmax.xlane.f32.xlu0 %v957
    %v959 = vpop.xlane.xlu0 %958
    %v960 = vsub.f32 %v956, %v959
    %v961 = vmul.f32 %v960, 1.442695
    %v962 = vpow.pop %v961
    %v963 = vsel %vm547, %v962, 0.0
    %964 = vadd.xlane.f32.xlu0 %v963
    %v965 = vpop.xlane.xlu0 %964
    %v966 = vrcp.pop %v965
    %v967 = vmul.f32 %v962, %v966
    %969 = vset.pattern.permute.xlu0 38
    %970 = vperm.xlu0 %969, %v767
    %v971 = vpop.permute.xlu0 %970
    %v973 = vmul.f32 %v971, %v967
    %v975 = vsel %vm55, %v214, 0
    %v978 = vsel %vm55, %v736, 0
    %v981 = vsel %vm55, %v737, 0
    %v984 = vsel %vm55, %v738, 0
    %v987 = vsel %vm55, %v739, 0
    %989 = vmatprep.subr.mxu0 0.0
    %990 = vmatpush1.xpose.msra.mxu0 %v978
    %991 = vmatprep.subr.mxu0 0.0
    %992 = vmatpush1.xpose.msra.mxu0 %v981
    %993 = vmatprep.subr.mxu0 0.0
    %994 = vmatpush1.xpose.msra.mxu0 %v984
    %995 = vmatprep.subr.mxu0 0.0
    %996 = vmatpush1.xpose.msra.mxu0 %v987
    %997 = vmatprep.subr.mxu0 0.0
    %998 = vmatpush1.xpose.msra.mxu0 0.0
    %999 = vmatprep.subr.mxu0 0.0
    %1000 = vmatpush1.xpose.msra.mxu0 0.0
    %1001 = vmatprep.subr.mxu0 0.0
    %1002 = vmatpush1.xpose.msra.mxu0 0.0
    %1003 = vmatprep.subr.mxu0 0.0
    %1004 = vmatpush1.xpose.msra.mxu0 0.0
    %1005 = vmatprep.subr.mxu0 0.0
    %1006 = vmatpush1.xpose.msra.mxu0 0.0
    %1007 = vmatprep.subr.mxu0 0.0
    %1008 = vmatpush1.xpose.msra.mxu0 0.0
    %1009 = vmatprep.subr.mxu0 0.0
    %1010 = vmatpush1.xpose.msra.mxu0 0.0
    %1011 = vmatprep.subr.mxu0 0.0
    %1012 = vmatpush1.xpose.msra.mxu0 0.0
    %1013 = vmatprep.subr.mxu0 0.0
    %1014 = vmatpush1.xpose.msra.mxu0 0.0
    %1015 = vmatprep.subr.mxu0 0.0
    %1016 = vmatpush1.xpose.msra.mxu0 0.0
    %1017 = vmatprep.subr.mxu0 0.0
    %1018 = vmatpush1.xpose.msra.mxu0 0.0
    %1019 = vmatprep.subr.mxu0 0.0
    %1020 = vmatpush1.xpose.msra.mxu0 0.0
    %1021 = vmatprep.subr.mxu0 0.0
    %1022 = vmatpush1.xpose.msra.mxu0 0.0
    %1023 = vmatprep.subr.mxu0 0.0
    %1024 = vmatpush1.xpose.msra.mxu0 0.0
    %1025 = vmatprep.subr.mxu0 0.0
    %1026 = vmatpush1.xpose.msra.mxu0 0.0
    %1027 = vmatprep.subr.mxu0 0.0
    %1028 = vmatpush1.xpose.msra.mxu0 0.0
    %1029 = vmatprep.subr.mxu0 0.0
    %1030 = vmatpush1.xpose.msra.mxu0 0.0
    %1031 = vmatprep.subr.mxu0 0.0
    %1032 = vmatpush1.xpose.msra.mxu0 0.0
    %1033 = vmatprep.subr.mxu0 0.0
    %1034 = vmatpush1.xpose.msra.mxu0 0.0
    %1035 = vmatprep.subr.mxu0 0.0
    %1036 = vmatpush1.xpose.msra.mxu0 0.0
    %1037 = vmatprep.subr.mxu0 0.0
    %1038 = vmatpush1.xpose.msra.mxu0 0.0
    %1039 = vmatprep.subr.mxu0 0.0
    %1040 = vmatpush1.xpose.msra.mxu0 0.0
    %1041 = vmatprep.subr.mxu0 0.0
    %1042 = vmatpush1.xpose.msra.mxu0 0.0
    %1043 = vmatprep.subr.mxu0 0.0
    %1044 = vmatpush1.xpose.msra.mxu0 0.0
    %1045 = vmatprep.subr.mxu0 0.0
    %1046 = vmatpush1.xpose.msra.mxu0 0.0
    %1047 = vmatprep.subr.mxu0 0.0
    %1048 = vmatpush1.xpose.msra.mxu0 0.0
    %1049 = vmatprep.subr.mxu0 0.0
    %1050 = vmatpush1.xpose.msra.mxu0 0.0
    %1051 = vmatprep.subr.mxu0 0.0
    %1052 = vmatpush1.xpose.msra.mxu0 0.0
    %1053 = vmatprep.mubr.f32.mxu0 0.0
    %1054 = vmatmul.mubr.f32.gmra.mrb[0].mxu0 %v975
    %v1055 = vpop.f32.mrb[0].mxu0
    %v1056 = vadd.f32 0.0, %v1055
    %v1057 = vpop.f32.mrb[0].mxu0
    %1058 = vdwg.mxu0
    %1059 = vmatprep.subr.mxu0 0.0
    %1060 = vmatpush1.msra.mxu0 %v736
    %1061 = vmatprep.subr.mxu0 0.0
    %1062 = vmatpush1.msra.mxu0 %v737
    %1063 = vmatprep.subr.mxu0 0.0
    %1064 = vmatpush1.msra.mxu0 %v738
    %1065 = vmatprep.subr.mxu0 0.0
    %1066 = vmatpush1.msra.mxu0 %v739
    %1067 = vmatprep.subr.mxu0 0.0
    %1068 = vmatpush1.msra.mxu0 0.0
    %1069 = vmatprep.subr.mxu0 0.0
    %1070 = vmatpush1.msra.mxu0 0.0
    %1071 = vmatprep.subr.mxu0 0.0
    %1072 = vmatpush1.msra.mxu0 0.0
    %1073 = vmatprep.subr.mxu0 0.0
    %1074 = vmatpush1.msra.mxu0 0.0
    %1075 = vmatprep.subr.mxu0 0.0
    %1076 = vmatpush1.msra.mxu0 0.0
    %1077 = vmatprep.subr.mxu0 0.0
    %1078 = vmatpush1.msra.mxu0 0.0
    %1079 = vmatprep.subr.mxu0 0.0
    %1080 = vmatpush1.msra.mxu0 0.0
    %1081 = vmatprep.subr.mxu0 0.0
    %1082 = vmatpush1.msra.mxu0 0.0
    %1083 = vmatprep.subr.mxu0 0.0
    %1084 = vmatpush1.msra.mxu0 0.0
    %1085 = vmatprep.subr.mxu0 0.0
    %1086 = vmatpush1.msra.mxu0 0.0
    %1087 = vmatprep.subr.mxu0 0.0
    %1088 = vmatpush1.msra.mxu0 0.0
    %1089 = vmatprep.subr.mxu0 0.0
    %1090 = vmatpush1.msra.mxu0 0.0
    %1091 = vmatprep.subr.mxu0 0.0
    %1092 = vmatpush1.msra.mxu0 0.0
    %1093 = vmatprep.subr.mxu0 0.0
    %1094 = vmatpush1.msra.mxu0 0.0
    %1095 = vmatprep.subr.mxu0 0.0
    %1096 = vmatpush1.msra.mxu0 0.0
    %1097 = vmatprep.subr.mxu0 0.0
    %1098 = vmatpush1.msra.mxu0 0.0
    %1099 = vmatprep.subr.mxu0 0.0
    %1100 = vmatpush1.msra.mxu0 0.0
    %1101 = vmatprep.subr.mxu0 0.0
    %1102 = vmatpush1.msra.mxu0 0.0
    %1103 = vmatprep.subr.mxu0 0.0
    %1104 = vmatpush1.msra.mxu0 0.0
    %1105 = vmatprep.subr.mxu0 0.0
    %1106 = vmatpush1.msra.mxu0 0.0
    %1107 = vmatprep.subr.mxu0 0.0
    %1108 = vmatpush1.msra.mxu0 0.0
    %1109 = vmatprep.subr.mxu0 0.0
    %1110 = vmatpush1.msra.mxu0 0.0
    %1111 = vmatprep.subr.mxu0 0.0
    %1112 = vmatpush1.msra.mxu0 0.0
    %1113 = vmatprep.subr.mxu0 0.0
    %1114 = vmatpush1.msra.mxu0 0.0
    %1115 = vmatprep.subr.mxu0 0.0
    %1116 = vmatpush1.msra.mxu0 0.0
    %1117 = vmatprep.subr.mxu0 0.0
    %1118 = vmatpush1.msra.mxu0 0.0
    %1119 = vmatprep.subr.mxu0 0.0
    %1120 = vmatpush1.msra.mxu0 0.0
    %1121 = vmatprep.subr.mxu0 0.0
    %1122 = vmatpush1.msra.mxu0 0.0
    %1123 = vmatprep.mubr.f32.mxu0 0.0
    %1124 = vmatmul.mubr.f32.gmra.mrb[0].mxu0 %v975
    %v1125 = vpop.f32.mrb[0].mxu0
    %v1126 = vadd.f32 0.0, %v1125
    %v1127 = vpop.f32.mrb[0].mxu0
    %1128 = vdwg.mxu0
    %1129 = vset.pattern.permute.xlu0 37
    %1130 = vperm.xlu0 %1129, %v767
    %v1131 = vpop.permute.xlu0 %1130
    %v1133 = vmul.f32 %v1131, %v1056
    %v1134 = vadd.f32 %v973, %v1133
    %1135 = vset.pattern.permute.xlu0 36
    %1136 = vperm.xlu0 %1135, %v767
    %v1137 = vpop.permute.xlu0 %1136
    %v1139 = vmul.f32 %v1137, %v1126
    %v1140 = vadd.f32 %v1134, %v1139
    %1141 = vst.msk [vmem:[#allocation4] sm:$0x1] %vm547, %v1140
    %v1143 = vsel %vm55, %v1140, 0
    %1145 = vmatprep.subr.mxu0 0.0
    %1146 = vmatpush1.msra.mxu0 %v674
    %1147 = vmatprep.subr.mxu0 0.0
    %1148 = vmatpush1.msra.mxu0 %v675
    %1149 = vmatprep.subr.mxu0 0.0
    %1150 = vmatpush1.msra.mxu0 %v676
    %1151 = vmatprep.subr.mxu0 0.0
    %1152 = vmatpush1.msra.mxu0 %v677
    %1153 = vmatprep.subr.mxu0 0.0
    %1154 = vmatpush1.msra.mxu0 0.0
    %1155 = vmatprep.subr.mxu0 0.0
    %1156 = vmatpush1.msra.mxu0 0.0
    %1157 = vmatprep.subr.mxu0 0.0
    %1158 = vmatpush1.msra.mxu0 0.0
    %1159 = vmatprep.subr.mxu0 0.0
    %1160 = vmatpush1.msra.mxu0 0.0
    %1161 = vmatprep.subr.mxu0 0.0
    %1162 = vmatpush1.msra.mxu0 0.0
    %1163 = vmatprep.subr.mxu0 0.0
    %1164 = vmatpush1.msra.mxu0 0.0
    %1165 = vmatprep.subr.mxu0 0.0
    %1166 = vmatpush1.msra.mxu0 0.0
    %1167 = vmatprep.subr.mxu0 0.0
    %1168 = vmatpush1.msra.mxu0 0.0
    %1169 = vmatprep.subr.mxu0 0.0
    %1170 = vmatpush1.msra.mxu0 0.0
    %1171 = vmatprep.subr.mxu0 0.0
    %1172 = vmatpush1.msra.mxu0 0.0
    %1173 = vmatprep.subr.mxu0 0.0
    %1174 = vmatpush1.msra.mxu0 0.0
    %1175 = vmatprep.subr.mxu0 0.0
    %1176 = vmatpush1.msra.mxu0 0.0
    %1177 = vmatprep.subr.mxu0 0.0
    %1178 = vmatpush1.msra.mxu0 0.0
    %1179 = vmatprep.subr.mxu0 0.0
    %1180 = vmatpush1.msra.mxu0 0.0
    %1181 = vmatprep.subr.mxu0 0.0
    %1182 = vmatpush1.msra.mxu0 0.0
    %1183 = vmatprep.subr.mxu0 0.0
    %1184 = vmatpush1.msra.mxu0 0.0
    %1185 = vmatprep.subr.mxu0 0.0
    %1186 = vmatpush1.msra.mxu0 0.0
    %1187 = vmatprep.subr.mxu0 0.0
    %1188 = vmatpush1.msra.mxu0 0.0
    %1189 = vmatprep.subr.mxu0 0.0
    %1190 = vmatpush1.msra.mxu0 0.0
    %1191 = vmatprep.subr.mxu0 0.0
    %1192 = vmatpush1.msra.mxu0 0.0
    %1193 = vmatprep.subr.mxu0 0.0
    %1194 = vmatpush1.msra.mxu0 0.0
    %1195 = vmatprep.subr.mxu0 0.0
    %1196 = vmatpush1.msra.mxu0 0.0
    %1197 = vmatprep.subr.mxu0 0.0
    %1198 = vmatpush1.msra.mxu0 0.0
    %1199 = vmatprep.subr.mxu0 0.0
    %1200 = vmatpush1.msra.mxu0 0.0
    %1201 = vmatprep.subr.mxu0 0.0
    %1202 = vmatpush1.msra.mxu0 0.0
    %1203 = vmatprep.subr.mxu0 0.0
    %1204 = vmatpush1.msra.mxu0 0.0
    %1205 = vmatprep.subr.mxu0 0.0
    %1206 = vmatpush1.msra.mxu0 0.0
    %1207 = vmatprep.subr.mxu0 0.0
    %1208 = vmatpush1.msra.mxu0 0.0
    %1209 = vmatprep.mubr.f32.mxu0 0.0
    %1210 = vmatmul.mubr.f32.gmra.mrb[0].mxu0 %v1143
    %v1211 = vpop.f32.mrb[0].mxu0
    %v1212 = vadd.f32 0.0, %v1211
    %v1213 = vpop.f32.mrb[0].mxu0
    %1214 = vdwg.mxu0
    %1215 = vst.msk [vmem:[#allocation2] sm:$0x1] %vm484, %v1212
    %vm1216 = vcmask 336184
    %v1217 = vsel %vm1216, %v126, -inf
    %1218 = vmax.xlane.f32.xlu0 %v1217
    %v1219 = vpop.xlane.xlu0 %1218
    %v1220 = vsub.f32 %v126, %v1219
    %v1221 = vmul.f32 %v1220, 1.442695
    %v1222 = vpow.pop %v1221
    %1224 = vrot.lane.b32.xlu0 %v1222, 89
    %v1225 = vpop.permute.xlu0 %1224
    %v1227 = vsel %vm762, %v1225, 0.0
    %1228 = vadd.xlane.f32.xlu0 %v1227
    %v1229 = vpop.xlane.xlu0 %1228
    %v1230 = vrcp.pop %v1229
    %v1231 = vmul.f32 %v1222, %v1230
    %1232 = vrot.lane.b32.xlu0 %v126, 53
    %v1233 = vpop.permute.xlu0 %1232
    %v1234 = vsel %vm346, %v1233, 0
    %1236 = vmatprep.subr.mxu0 0.0
    %1237 = vmatpush1.xpose.msra.mxu0 %v773
    %1238 = vmatprep.subr.mxu0 0.0
    %1239 = vmatpush1.xpose.msra.mxu0 %v776
    %1240 = vmatprep.subr.mxu0 0.0
    %1241 = vmatpush1.xpose.msra.mxu0 %v779
    %1242 = vmatprep.subr.mxu0 0.0
    %1243 = vmatpush1.xpose.msra.mxu0 %v782
    %1244 = vmatprep.subr.mxu0 0.0
    %1245 = vmatpush1.xpose.msra.mxu0 0.0
    %1246 = vmatprep.subr.mxu0 0.0
    %1247 = vmatpush1.xpose.msra.mxu0 0.0
    %1248 = vmatprep.subr.mxu0 0.0
    %1249 = vmatpush1.xpose.msra.mxu0 0.0
    %1250 = vmatprep.subr.mxu0 0.0
    %1251 = vmatpush1.xpose.msra.mxu0 0.0
    %1252 = vmatprep.subr.mxu0 0.0
    %1253 = vmatpush1.xpose.msra.mxu0 0.0
    %1254 = vmatprep.subr.mxu0 0.0
    %1255 = vmatpush1.xpose.msra.mxu0 0.0
    %1256 = vmatprep.subr.mxu0 0.0
    %1257 = vmatpush1.xpose.msra.mxu0 0.0
    %1258 = vmatprep.subr.mxu0 0.0
    %1259 = vmatpush1.xpose.msra.mxu0 0.0
    %1260 = vmatprep.subr.mxu0 0.0
    %1261 = vmatpush1.xpose.msra.mxu0 0.0
    %1262 = vmatprep.subr.mxu0 0.0
    %1263 = vmatpush1.xpose.msra.mxu0 0.0
    %1264 = vmatprep.subr.mxu0 0.0
    %1265 = vmatpush1.xpose.msra.mxu0 0.0
    %1266 = vmatprep.subr.mxu0 0.0
    %1267 = vmatpush1.xpose.msra.mxu0 0.0
    %1268 = vmatprep.subr.mxu0 0.0
    %1269 = vmatpush1.xpose.msra.mxu0 0.0
    %1270 = vmatprep.subr.mxu0 0.0
    %1271 = vmatpush1.xpose.msra.mxu0 0.0
    %1272 = vmatprep.subr.mxu0 0.0
    %1273 = vmatpush1.xpose.msra.mxu0 0.0
    %1274 = vmatprep.subr.mxu0 0.0
    %1275 = vmatpush1.xpose.msra.mxu0 0.0
    %1276 = vmatprep.subr.mxu0 0.0
    %1277 = vmatpush1.xpose.msra.mxu0 0.0
    %1278 = vmatprep.subr.mxu0 0.0
    %1279 = vmatpush1.xpose.msra.mxu0 0.0
    %1280 = vmatprep.subr.mxu0 0.0
    %1281 = vmatpush1.xpose.msra.mxu0 0.0
    %1282 = vmatprep.subr.mxu0 0.0
    %1283 = vmatpush1.xpose.msra.mxu0 0.0
    %1284 = vmatprep.subr.mxu0 0.0
    %1285 = vmatpush1.xpose.msra.mxu0 0.0
    %1286 = vmatprep.subr.mxu0 0.0
    %1287 = vmatpush1.xpose.msra.mxu0 0.0
    %1288 = vmatprep.subr.mxu0 0.0
    %1289 = vmatpush1.xpose.msra.mxu0 0.0
    %1290 = vmatprep.subr.mxu0 0.0
    %1291 = vmatpush1.xpose.msra.mxu0 0.0
    %1292 = vmatprep.subr.mxu0 0.0
    %1293 = vmatpush1.xpose.msra.mxu0 0.0
    %1294 = vmatprep.subr.mxu0 0.0
    %1295 = vmatpush1.xpose.msra.mxu0 0.0
    %1296 = vmatprep.subr.mxu0 0.0
    %1297 = vmatpush1.xpose.msra.mxu0 0.0
    %1298 = vmatprep.subr.mxu0 0.0
    %1299 = vmatpush1.xpose.msra.mxu0 0.0
    %1300 = vmatprep.mubr.f32.mxu0 0.0
    %1301 = vmatmul.mubr.f32.gmra.mrb[0].mxu0 %v1234
    %v1302 = vpop.f32.mrb[0].mxu0
    %v1303 = vadd.f32 0.0, %v1302
    %v1304 = vpop.f32.mrb[0].mxu0
    %1305 = vdwg.mxu0
    %1306 = vrot.lane.b32.xlu0 %v479, 53
    %v1307 = vpop.permute.xlu0 %1306
    %v1309 = vsel %vm484, %v1307, 0.0
    %1310 = vadd.xlane.f32.xlu0 %v1309
    %v1311 = vpop.xlane.xlu0 %1310
    %v1312 = vadd.f32 %v1311, 1e-06
    %v1313 = vrsqrt.pop %v1312
    %v1314 = vmul.f32 %v1312, %v1313
    %vm1315 = vcmp.eq.f32.partialorder %v1312, inf
    %v1316 = vsel %vm1315, %v1312, %v1314
    %vm1317 = vcmp.eq.f32.partialorder %v1312, 0.0
    %v1318 = vand.u32 %v1312, 2147483648
    %v1319 = vsel %vm1317, %v1318, %v1316
    %v1320 = vmul.f32 %v1319, %v932
    %v1321 = vadd.f32 %v1320, 1e-06
    %v1322 = vrcp.pop %v1321
    %v1323 = vmul.f32 %v1303, %v1322
    %1324 = vset.pattern.permute.xlu0 92
    %1325 = vperm.xlu0 %1324, %v540
    %v1326 = vpop.permute.xlu0 %1325
    %v1328 = vmul.f32 %v1323, %v1326
    %v1329 = vsel %vm547, %v1328, -inf
    %1330 = vmax.xlane.f32.xlu0 %v1329
    %v1331 = vpop.xlane.xlu0 %1330
    %v1332 = vsub.f32 %v1328, %v1331
    %v1333 = vmul.f32 %v1332, 1.442695
    %v1334 = vpow.pop %v1333
    %v1335 = vsel %vm547, %v1334, 0.0
    %1336 = vadd.xlane.f32.xlu0 %v1335
    %v1337 = vpop.xlane.xlu0 %1336
    %v1338 = vrcp.pop %v1337
    %v1339 = vmul.f32 %v1334, %v1338
    %1341 = vset.pattern.permute.xlu0 41
    %1342 = vperm.xlu0 %1341, %v1231
    %v1343 = vpop.permute.xlu0 %1342
    %v1345 = vmul.f32 %v1343, %v1339
    %v1346 = vrot.slane %v214, 1
    %v1347 = vsel %vm55, %v1346, 0
    %1349 = vmatprep.subr.mxu0 0.0
    %1350 = vmatpush1.xpose.msra.mxu0 %v978
    %1351 = vmatprep.subr.mxu0 0.0
    %1352 = vmatpush1.xpose.msra.mxu0 %v981
    %1353 = vmatprep.subr.mxu0 0.0
    %1354 = vmatpush1.xpose.msra.mxu0 %v984
    %1355 = vmatprep.subr.mxu0 0.0
    %1356 = vmatpush1.xpose.msra.mxu0 %v987
    %1357 = vmatprep.subr.mxu0 0.0
    %1358 = vmatpush1.xpose.msra.mxu0 0.0
    %1359 = vmatprep.subr.mxu0 0.0
    %1360 = vmatpush1.xpose.msra.mxu0 0.0
    %1361 = vmatprep.subr.mxu0 0.0
    %1362 = vmatpush1.xpose.msra.mxu0 0.0
    %1363 = vmatprep.subr.mxu0 0.0
    %1364 = vmatpush1.xpose.msra.mxu0 0.0
    %1365 = vmatprep.subr.mxu0 0.0
    %1366 = vmatpush1.xpose.msra.mxu0 0.0
    %1367 = vmatprep.subr.mxu0 0.0
    %1368 = vmatpush1.xpose.msra.mxu0 0.0
    %1369 = vmatprep.subr.mxu0 0.0
    %1370 = vmatpush1.xpose.msra.mxu0 0.0
    %1371 = vmatprep.subr.mxu0 0.0
    %1372 = vmatpush1.xpose.msra.mxu0 0.0
    %1373 = vmatprep.subr.mxu0 0.0
    %1374 = vmatpush1.xpose.msra.mxu0 0.0
    %1375 = vmatprep.subr.mxu0 0.0
    %1376 = vmatpush1.xpose.msra.mxu0 0.0
    %1377 = vmatprep.subr.mxu0 0.0
    %1378 = vmatpush1.xpose.msra.mxu0 0.0
    %1379 = vmatprep.subr.mxu0 0.0
    %1380 = vmatpush1.xpose.msra.mxu0 0.0
    %1381 = vmatprep.subr.mxu0 0.0
    %1382 = vmatpush1.xpose.msra.mxu0 0.0
    %1383 = vmatprep.subr.mxu0 0.0
    %1384 = vmatpush1.xpose.msra.mxu0 0.0
    %1385 = vmatprep.subr.mxu0 0.0
    %1386 = vmatpush1.xpose.msra.mxu0 0.0
    %1387 = vmatprep.subr.mxu0 0.0
    %1388 = vmatpush1.xpose.msra.mxu0 0.0
    %1389 = vmatprep.subr.mxu0 0.0
    %1390 = vmatpush1.xpose.msra.mxu0 0.0
    %1391 = vmatprep.subr.mxu0 0.0
    %1392 = vmatpush1.xpose.msra.mxu0 0.0
    %1393 = vmatprep.subr.mxu0 0.0
    %1394 = vmatpush1.xpose.msra.mxu0 0.0
    %1395 = vmatprep.subr.mxu0 0.0
    %1396 = vmatpush1.xpose.msra.mxu0 0.0
    %1397 = vmatprep.subr.mxu0 0.0
    %1398 = vmatpush1.xpose.msra.mxu0 0.0
    %1399 = vmatprep.subr.mxu0 0.0
    %1400 = vmatpush1.xpose.msra.mxu0 0.0
    %1401 = vmatprep.subr.mxu0 0.0
    %1402 = vmatpush1.xpose.msra.mxu0 0.0
    %1403 = vmatprep.subr.mxu0 0.0
    %1404 = vmatpush1.xpose.msra.mxu0 0.0
    %1405 = vmatprep.subr.mxu0 0.0
    %1406 = vmatpush1.xpose.msra.mxu0 0.0
    %1407 = vmatprep.subr.mxu0 0.0
    %1408 = vmatpush1.xpose.msra.mxu0 0.0
    %1409 = vmatprep.subr.mxu0 0.0
    %1410 = vmatpush1.xpose.msra.mxu0 0.0
    %1411 = vmatprep.subr.mxu0 0.0
    %1412 = vmatpush1.xpose.msra.mxu0 0.0
    %1413 = vmatprep.mubr.f32.mxu0 0.0
    %1414 = vmatmul.mubr.f32.gmra.mrb[0].mxu0 %v1347
    %v1415 = vpop.f32.mrb[0].mxu0
    %v1416 = vadd.f32 0.0, %v1415
    %v1417 = vpop.f32.mrb[0].mxu0
    %1418 = vdwg.mxu0
    %1419 = vmatprep.subr.mxu0 0.0
    %1420 = vmatpush1.msra.mxu0 %v736
    %1421 = vmatprep.subr.mxu0 0.0
    %1422 = vmatpush1.msra.mxu0 %v737
    %1423 = vmatprep.subr.mxu0 0.0
    %1424 = vmatpush1.msra.mxu0 %v738
    %1425 = vmatprep.subr.mxu0 0.0
    %1426 = vmatpush1.msra.mxu0 %v739
    %1427 = vmatprep.subr.mxu0 0.0
    %1428 = vmatpush1.msra.mxu0 0.0
    %1429 = vmatprep.subr.mxu0 0.0
    %1430 = vmatpush1.msra.mxu0 0.0
    %1431 = vmatprep.subr.mxu0 0.0
    %1432 = vmatpush1.msra.mxu0 0.0
    %1433 = vmatprep.subr.mxu0 0.0
    %1434 = vmatpush1.msra.mxu0 0.0
    %1435 = vmatprep.subr.mxu0 0.0
    %1436 = vmatpush1.msra.mxu0 0.0
    %1437 = vmatprep.subr.mxu0 0.0
    %1438 = vmatpush1.msra.mxu0 0.0
    %1439 = vmatprep.subr.mxu0 0.0
    %1440 = vmatpush1.msra.mxu0 0.0
    %1441 = vmatprep.subr.mxu0 0.0
    %1442 = vmatpush1.msra.mxu0 0.0
    %1443 = vmatprep.subr.mxu0 0.0
    %1444 = vmatpush1.msra.mxu0 0.0
    %1445 = vmatprep.subr.mxu0 0.0
    %1446 = vmatpush1.msra.mxu0 0.0
    %1447 = vmatprep.subr.mxu0 0.0
    %1448 = vmatpush1.msra.mxu0 0.0
    %1449 = vmatprep.subr.mxu0 0.0
    %1450 = vmatpush1.msra.mxu0 0.0
    %1451 = vmatprep.subr.mxu0 0.0
    %1452 = vmatpush1.msra.mxu0 0.0
    %1453 = vmatprep.subr.mxu0 0.0
    %1454 = vmatpush1.msra.mxu0 0.0
    %1455 = vmatprep.subr.mxu0 0.0
    %1456 = vmatpush1.msra.mxu0 0.0
    %1457 = vmatprep.subr.mxu0 0.0
    %1458 = vmatpush1.msra.mxu0 0.0
    %1459 = vmatprep.subr.mxu0 0.0
    %1460 = vmatpush1.msra.mxu0 0.0
    %1461 = vmatprep.subr.mxu0 0.0
    %1462 = vmatpush1.msra.mxu0 0.0
    %1463 = vmatprep.subr.mxu0 0.0
    %1464 = vmatpush1.msra.mxu0 0.0
    %1465 = vmatprep.subr.mxu0 0.0
    %1466 = vmatpush1.msra.mxu0 0.0
    %1467 = vmatprep.subr.mxu0 0.0
    %1468 = vmatpush1.msra.mxu0 0.0
    %1469 = vmatprep.subr.mxu0 0.0
    %1470 = vmatpush1.msra.mxu0 0.0
    %1471 = vmatprep.subr.mxu0 0.0
    %1472 = vmatpush1.msra.mxu0 0.0
    %1473 = vmatprep.subr.mxu0 0.0
    %1474 = vmatpush1.msra.mxu0 0.0
    %1475 = vmatprep.subr.mxu0 0.0
    %1476 = vmatpush1.msra.mxu0 0.0
    %1477 = vmatprep.subr.mxu0 0.0
    %1478 = vmatpush1.msra.mxu0 0.0
    %1479 = vmatprep.subr.mxu0 0.0
    %1480 = vmatpush1.msra.mxu0 0.0
    %1481 = vmatprep.subr.mxu0 0.0
    %1482 = vmatpush1.msra.mxu0 0.0
    %1483 = vmatprep.mubr.f32.mxu0 0.0
    %1484 = vmatmul.mubr.f32.gmra.mrb[0].mxu0 %v1347
    %v1485 = vpop.f32.mrb[0].mxu0
    %v1486 = vadd.f32 0.0, %v1485
    %v1487 = vpop.f32.mrb[0].mxu0
    %1488 = vdwg.mxu0
    %1489 = vset.pattern.permute.xlu0 40
    %1490 = vperm.xlu0 %1489, %v1231
    %v1491 = vpop.permute.xlu0 %1490
    %v1493 = vmul.f32 %v1491, %v1416
    %v1494 = vadd.f32 %v1345, %v1493
    %1495 = vset.pattern.permute.xlu0 39
    %1496 = vperm.xlu0 %1495, %v1231
    %v1497 = vpop.permute.xlu0 %1496
    %v1499 = vmul.f32 %v1497, %v1486
    %v1500 = vadd.f32 %v1494, %v1499
    %1501 = vst.msk [vmem:[#allocation4 + $0x1] sm:$0x1] %vm547, %v1500
    %v1503 = vsel %vm55, %v1500, 0
    %1505 = vmatprep.subr.mxu0 0.0
    %1506 = vmatpush1.msra.mxu0 %v674
    %1507 = vmatprep.subr.mxu0 0.0
    %1508 = vmatpush1.msra.mxu0 %v675
    %1509 = vmatprep.subr.mxu0 0.0
    %1510 = vmatpush1.msra.mxu0 %v676
    %1511 = vmatprep.subr.mxu0 0.0
    %1512 = vmatpush1.msra.mxu0 %v677
    %1513 = vmatprep.subr.mxu0 0.0
    %1514 = vmatpush1.msra.mxu0 0.0
    %1515 = vmatprep.subr.mxu0 0.0
    %1516 = vmatpush1.msra.mxu0 0.0
    %1517 = vmatprep.subr.mxu0 0.0
    %1518 = vmatpush1.msra.mxu0 0.0
    %1519 = vmatprep.subr.mxu0 0.0
    %1520 = vmatpush1.msra.mxu0 0.0
    %1521 = vmatprep.subr.mxu0 0.0
    %1522 = vmatpush1.msra.mxu0 0.0
    %1523 = vmatprep.subr.mxu0 0.0
    %1524 = vmatpush1.msra.mxu0 0.0
    %1525 = vmatprep.subr.mxu0 0.0
    %1526 = vmatpush1.msra.mxu0 0.0
    %1527 = vmatprep.subr.mxu0 0.0
    %1528 = vmatpush1.msra.mxu0 0.0
    %1529 = vmatprep.subr.mxu0 0.0
    %1530 = vmatpush1.msra.mxu0 0.0
    %1531 = vmatprep.subr.mxu0 0.0
    %1532 = vmatpush1.msra.mxu0 0.0
    %1533 = vmatprep.subr.mxu0 0.0
    %1534 = vmatpush1.msra.mxu0 0.0
    %1535 = vmatprep.subr.mxu0 0.0
    %1536 = vmatpush1.msra.mxu0 0.0
    %1537 = vmatprep.subr.mxu0 0.0
    %1538 = vmatpush1.msra.mxu0 0.0
    %1539 = vmatprep.subr.mxu0 0.0
    %1540 = vmatpush1.msra.mxu0 0.0
    %1541 = vmatprep.subr.mxu0 0.0
    %1542 = vmatpush1.msra.mxu0 0.0
    %1543 = vmatprep.subr.mxu0 0.0
    %1544 = vmatpush1.msra.mxu0 0.0
    %1545 = vmatprep.subr.mxu0 0.0
    %1546 = vmatpush1.msra.mxu0 0.0
    %1547 = vmatprep.subr.mxu0 0.0
    %1548 = vmatpush1.msra.mxu0 0.0
    %1549 = vmatprep.subr.mxu0 0.0
    %1550 = vmatpush1.msra.mxu0 0.0
    %1551 = vmatprep.subr.mxu0 0.0
    %1552 = vmatpush1.msra.mxu0 0.0
    %1553 = vmatprep.subr.mxu0 0.0
    %1554 = vmatpush1.msra.mxu0 0.0
    %1555 = vmatprep.subr.mxu0 0.0
    %1556 = vmatpush1.msra.mxu0 0.0
    %1557 = vmatprep.subr.mxu0 0.0
    %1558 = vmatpush1.msra.mxu0 0.0
    %1559 = vmatprep.subr.mxu0 0.0
    %1560 = vmatpush1.msra.mxu0 0.0
    %1561 = vmatprep.subr.mxu0 0.0
    %1562 = vmatpush1.msra.mxu0 0.0
    %1563 = vmatprep.subr.mxu0 0.0
    %1564 = vmatpush1.msra.mxu0 0.0
    %1565 = vmatprep.subr.mxu0 0.0
    %1566 = vmatpush1.msra.mxu0 0.0
    %1567 = vmatprep.subr.mxu0 0.0
    %1568 = vmatpush1.msra.mxu0 0.0
    %1569 = vmatprep.mubr.f32.mxu0 0.0
    %1570 = vmatmul.mubr.f32.gmra.mrb[0].mxu0 %v1503
    %v1571 = vpop.f32.mrb[0].mxu0
    %v1572 = vadd.f32 0.0, %v1571
    %v1573 = vpop.f32.mrb[0].mxu0
    %1574 = vdwg.mxu0
    %1575 = vst.msk [vmem:[#allocation2 + $0x1] sm:$0x1] %vm484, %v1572
    %s1576 = scalar_lea.vmem %s3, 32
    %v1577 = vld [vmem:[%s1576] sm:$0xff]
    %v1578 = vld [vmem:[%s1576 + $0x8] sm:$0xff]
    %v1579 = vld [vmem:[%s1576 + $0x10] sm:$0xff]
    %v1580 = vld [vmem:[%s1576 + $0x18] sm:$0xff]
    %s1581 = scalar_lea.vmem %s4, 2
    %v1582 = vld [vmem:[%s1581] sm:$0x3]
    %s1583 = scalar_lea.vmem %s7, 1
    %v1584 = vld [vmem:[%s1583] sm:$0x1]
    %v1586 = vrot.slane %v217, 1
    %1588 = vxpose.xlu0.b32.start [1/16] %v1586, 128
    %1589 = vxpose.xlu0.b32.cont [2/16] 0.0, 128
    %1590 = vxpose.xlu0.b32.cont [3/16] 0.0, 128
    %1591 = vxpose.xlu0.b32.cont [4/16] 0.0, 128
    %1592 = vxpose.xlu0.b32.cont [5/16] 0.0, 128
    %1593 = vxpose.xlu0.b32.cont [6/16] 0.0, 128
    %1594 = vxpose.xlu0.b32.cont [7/16] 0.0, 128
    %1595 = vxpose.xlu0.b32.cont [8/16] 0.0, 128
    %1596 = vxpose.xlu0.b32.cont [9/16] 0.0, 128
    %1597 = vxpose.xlu0.b32.cont [10/16] 0.0, 128
    %1598 = vxpose.xlu0.b32.cont [11/16] 0.0, 128
    %1599 = vxpose.xlu0.b32.cont [12/16] 0.0, 128
    %1600 = vxpose.xlu0.b32.cont [13/16] 0.0, 128
    %1601 = vxpose.xlu0.b32.cont [14/16] 0.0, 128
    %1602 = vxpose.xlu0.b32.cont [15/16] 0.0, 128
    %1603 = vxpose.xlu0.b32.end [16/16] 0.0, 128
    %v1604 = vpop.trf.xlu0
    %v1605 = vpop.trf.xlu0
    %v1606 = vpop.trf.xlu0
    %v1607 = vpop.trf.xlu0
    %v1608 = vpop.trf.xlu0
    %v1609 = vpop.trf.xlu0
    %v1610 = vpop.trf.xlu0
    %v1611 = vpop.trf.xlu0
    %v1612 = vpop.trf.xlu0
    %v1613 = vpop.trf.xlu0
    %v1614 = vpop.trf.xlu0
    %v1615 = vpop.trf.xlu0
    %v1616 = vpop.trf.xlu0
    %v1617 = vpop.trf.xlu0
    %v1618 = vpop.trf.xlu0
    %v1619 = vpop.trf.xlu0
    %1621 = vset.pattern.permute.xlu0 0
    %1622 = vperm.xlu0 %1621, %v1604
    %v1623 = vpop.permute.xlu0 %1622
    %1626 = vset.pattern.permute.xlu0 0
    %1627 = vperm.xlu0 %1626, %v1605
    %v1628 = vpop.permute.xlu0 %1627
    %1631 = vset.pattern.permute.xlu0 0
    %1632 = vperm.xlu0 %1631, %v1606
    %v1633 = vpop.permute.xlu0 %1632
    %1636 = vset.pattern.permute.xlu0 0
    %1637 = vperm.xlu0 %1636, %v1607
    %v1638 = vpop.permute.xlu0 %1637
    %v1640 = vlaneseq
    %v1641 = vshrl.u32 %v1640, 7
    %v1642 = vsub.s32 1, %v1641
    %v1643 = vrot.slane %v217, %v1642
    %vm1644 = vcmp.lt.f32.partialorder %v1623, %v1643
    %vm1645 = vcmp.lt.f32.partialorder %v1628, %v1643
    %vm1646 = vcmp.lt.f32.partialorder %v1633, %v1643
    %vm1647 = vcmp.lt.f32.partialorder %v1638, %v1643
    %vm1648 = vcmp.eq.f32.partialorder %v1623, %v1643
    %vm1649 = vcmp.eq.f32.partialorder %v1628, %v1643
    %vm1650 = vcmp.eq.f32.partialorder %v1633, %v1643
    %vm1651 = vcmp.eq.f32.partialorder %v1638, %v1643
    %vm1652 = vmand %vm1648, %vm206
    %vm1653 = vmand %vm1649, %vm207
    %vm1654 = vmand %vm1650, %vm208
    %vm1655 = vmand %vm1651, %vm209
    %vm1656 = vmor %vm1644, %vm1652
    %vm1657 = vmor %vm1645, %vm1653
    %vm1658 = vmor %vm1646, %vm1654
    %vm1659 = vmor %vm1647, %vm1655
    %v1660 = vsel %vm1656, 1.0, 0.0
    %v1661 = vsel %vm1657, 1.0, 0.0
    %v1662 = vsel %vm1658, 1.0, 0.0
    %v1663 = vsel %vm1659, 1.0, 0.0
    %v1664 = vlog2.pop %v1604
    %v1665 = vmul.f32 %v1664, 0.6931472
    %v1666 = vlog2.pop %v1605
    %v1667 = vmul.f32 %v1666, 0.6931472
    %v1668 = vlog2.pop %v1606
    %v1669 = vmul.f32 %v1668, 0.6931472
    %v1670 = vlog2.pop %v1607
    %v1671 = vmul.f32 %v1670, 0.6931472
    %1673 = vset.pattern.permute.xlu0 0
    %1674 = vperm.xlu0 %1673, %v1665
    %v1675 = vpop.permute.xlu0 %1674
    %1678 = vset.pattern.permute.xlu0 0
    %1679 = vperm.xlu0 %1678, %v1667
    %v1680 = vpop.permute.xlu0 %1679
    %1683 = vset.pattern.permute.xlu0 0
    %1684 = vperm.xlu0 %1683, %v1669
    %v1685 = vpop.permute.xlu0 %1684
    %1688 = vset.pattern.permute.xlu0 0
    %1689 = vperm.xlu0 %1688, %v1671
    %v1690 = vpop.permute.xlu0 %1689
    %v1692 = vmul.f32 %v1660, %v1675
    %v1693 = vmul.f32 %v1661, %v1680
    %v1694 = vmul.f32 %v1662, %v1685
    %v1695 = vmul.f32 %v1663, %v1690
    %v1696 = vsel %vm55, %v1692, 0.0
    %v1697 = vsel %vm55, %v1693, 0.0
    %v1698 = vadd.f32 %v1696, %v1697
    %v1699 = vsel %vm55, %v1694, 0.0
    %v1700 = vadd.f32 %v1698, %v1699
    %v1701 = vsel %vm55, %v1695, 0.0
    %v1702 = vadd.f32 %v1700, %v1701
    %v1703 = vrot.slane %v1702, 4
    %v1704 = vadd.f32 %v1702, %v1703
    %v1705 = vrot.slane %v1704, 2
    %v1706 = vadd.f32 %v1704, %v1705
    %v1707 = vrot.slane %v1706, 1
    %v1708 = vadd.f32 %v1706, %v1707
    %v1709 = vmul.f32 %v1708, 1.442695
    %v1710 = vpow.pop %v1709
    %v1711 = vmul.f32 %v339, %v1710
    %v1712 = vrot.slane %v126, 1
    %1713 = vrot.lane.b32.xlu0 %v1712, 86
    %v1714 = vpop.permute.xlu0 %1713
    %v1715 = vsel %vm346, %v1714, 0
    %v1718 = vsel %vm346, %v1577, 0
    %v1721 = vsel %vm346, %v1578, 0
    %v1724 = vsel %vm346, %v1579, 0
    %v1727 = vsel %vm346, %v1580, 0
    %1729 = vmatprep.subr.mxu0 0.0
    %1730 = vmatpush1.xpose.msra.mxu0 %v1718
    %1731 = vmatprep.subr.mxu0 0.0
    %1732 = vmatpush1.xpose.msra.mxu0 %v1721
    %1733 = vmatprep.subr.mxu0 0.0
    %1734 = vmatpush1.xpose.msra.mxu0 %v1724
    %1735 = vmatprep.subr.mxu0 0.0
    %1736 = vmatpush1.xpose.msra.mxu0 %v1727
    %1737 = vmatprep.subr.mxu0 0.0
    %1738 = vmatpush1.xpose.msra.mxu0 0.0
    %1739 = vmatprep.subr.mxu0 0.0
    %1740 = vmatpush1.xpose.msra.mxu0 0.0
    %1741 = vmatprep.subr.mxu0 0.0
    %1742 = vmatpush1.xpose.msra.mxu0 0.0
    %1743 = vmatprep.subr.mxu0 0.0
    %1744 = vmatpush1.xpose.msra.mxu0 0.0
    %1745 = vmatprep.subr.mxu0 0.0
    %1746 = vmatpush1.xpose.msra.mxu0 0.0
    %1747 = vmatprep.subr.mxu0 0.0
    %1748 = vmatpush1.xpose.msra.mxu0 0.0
    %1749 = vmatprep.subr.mxu0 0.0
    %1750 = vmatpush1.xpose.msra.mxu0 0.0
    %1751 = vmatprep.subr.mxu0 0.0
    %1752 = vmatpush1.xpose.msra.mxu0 0.0
    %1753 = vmatprep.subr.mxu0 0.0
    %1754 = vmatpush1.xpose.msra.mxu0 0.0
    %1755 = vmatprep.subr.mxu0 0.0
    %1756 = vmatpush1.xpose.msra.mxu0 0.0
    %1757 = vmatprep.subr.mxu0 0.0
    %1758 = vmatpush1.xpose.msra.mxu0 0.0
    %1759 = vmatprep.subr.mxu0 0.0
    %1760 = vmatpush1.xpose.msra.mxu0 0.0
    %1761 = vmatprep.subr.mxu0 0.0
    %1762 = vmatpush1.xpose.msra.mxu0 0.0
    %1763 = vmatprep.subr.mxu0 0.0
    %1764 = vmatpush1.xpose.msra.mxu0 0.0
    %1765 = vmatprep.subr.mxu0 0.0
    %1766 = vmatpush1.xpose.msra.mxu0 0.0
    %1767 = vmatprep.subr.mxu0 0.0
    %1768 = vmatpush1.xpose.msra.mxu0 0.0
    %1769 = vmatprep.subr.mxu0 0.0
    %1770 = vmatpush1.xpose.msra.mxu0 0.0
    %1771 = vmatprep.subr.mxu0 0.0
    %1772 = vmatpush1.xpose.msra.mxu0 0.0
    %1773 = vmatprep.subr.mxu0 0.0
    %1774 = vmatpush1.xpose.msra.mxu0 0.0
    %1775 = vmatprep.subr.mxu0 0.0
    %1776 = vmatpush1.xpose.msra.mxu0 0.0
    %1777 = vmatprep.subr.mxu0 0.0
    %1778 = vmatpush1.xpose.msra.mxu0 0.0
    %1779 = vmatprep.subr.mxu0 0.0
    %1780 = vmatpush1.xpose.msra.mxu0 0.0
    %1781 = vmatprep.subr.mxu0 0.0
    %1782 = vmatpush1.xpose.msra.mxu0 0.0
    %1783 = vmatprep.subr.mxu0 0.0
    %1784 = vmatpush1.xpose.msra.mxu0 0.0
    %1785 = vmatprep.subr.mxu0 0.0
    %1786 = vmatpush1.xpose.msra.mxu0 0.0
    %1787 = vmatprep.subr.mxu0 0.0
    %1788 = vmatpush1.xpose.msra.mxu0 0.0
    %1789 = vmatprep.subr.mxu0 0.0
    %1790 = vmatpush1.xpose.msra.mxu0 0.0
    %1791 = vmatprep.subr.mxu0 0.0
    %1792 = vmatpush1.xpose.msra.mxu0 0.0
    %1793 = vmatprep.mubr.f32.mxu0 0.0
    %1794 = vmatmul.mubr.f32.gmra.mrb[0].mxu0 %v1715
    %v1795 = vpop.f32.mrb[0].mxu0
    %v1796 = vadd.f32 0.0, %v1795
    %v1797 = vpop.f32.mrb[0].mxu0
    %1798 = vdwg.mxu0
    %v1799 = vmul.f32 %v1577, %v1577
    %v1800 = vmul.f32 %v1578, %v1578
    %v1801 = vmul.f32 %v1579, %v1579
    %v1802 = vmul.f32 %v1580, %v1580
    %v1803 = vsel %vm346, %v1799, 0.0
    %1804 = vadd.xlane.f32.xlu0 %v1803
    %v1805 = vpop.xlane.xlu0 %1804
    %v1806 = vsel %vm346, %v1800, 0.0
    %1807 = vadd.xlane.f32.xlu0 %v1806
    %v1808 = vpop.xlane.xlu0 %1807
    %v1809 = vsel %vm346, %v1801, 0.0
    %1810 = vadd.xlane.f32.xlu0 %v1809
    %v1811 = vpop.xlane.xlu0 %1810
    %v1812 = vsel %vm346, %v1802, 0.0
    %1813 = vadd.xlane.f32.xlu0 %v1812
    %v1814 = vpop.xlane.xlu0 %1813
    %v1815 = vadd.f32 %v1805, 1e-06
    %v1816 = vadd.f32 %v1808, 1e-06
    %v1817 = vadd.f32 %v1811, 1e-06
    %v1818 = vadd.f32 %v1814, 1e-06
    %v1819 = vrsqrt.pop %v1815
    %v1820 = vmul.f32 %v1815, %v1819
    %vm1821 = vcmp.eq.f32.partialorder %v1815, inf
    %v1822 = vsel %vm1821, %v1815, %v1820
    %vm1823 = vcmp.eq.f32.partialorder %v1815, 0.0
    %v1824 = vand.u32 %v1815, 2147483648
    %v1825 = vsel %vm1823, %v1824, %v1822
    %v1826 = vrsqrt.pop %v1816
    %v1827 = vmul.f32 %v1816, %v1826
    %vm1828 = vcmp.eq.f32.partialorder %v1816, inf
    %v1829 = vsel %vm1828, %v1816, %v1827
    %vm1830 = vcmp.eq.f32.partialorder %v1816, 0.0
    %v1831 = vand.u32 %v1816, 2147483648
    %v1832 = vsel %vm1830, %v1831, %v1829
    %v1833 = vrsqrt.pop %v1817
    %v1834 = vmul.f32 %v1817, %v1833
    %vm1835 = vcmp.eq.f32.partialorder %v1817, inf
    %v1836 = vsel %vm1835, %v1817, %v1834
    %vm1837 = vcmp.eq.f32.partialorder %v1817, 0.0
    %v1838 = vand.u32 %v1817, 2147483648
    %v1839 = vsel %vm1837, %v1838, %v1836
    %v1840 = vrsqrt.pop %v1818
    %v1841 = vmul.f32 %v1818, %v1840
    %vm1842 = vcmp.eq.f32.partialorder %v1818, inf
    %v1843 = vsel %vm1842, %v1818, %v1841
    %vm1844 = vcmp.eq.f32.partialorder %v1818, 0.0
    %v1845 = vand.u32 %v1818, 2147483648
    %v1846 = vsel %vm1844, %v1845, %v1843
    %vm1847 = vcmask 123905
    %v1848 = vsel %vm1847, %v482, 0.0
    %1849 = vadd.xlane.f32.xlu0 %v1848
    %v1850 = vpop.xlane.xlu0 %1849
    %v1851 = vadd.f32 %v1850, 1e-06
    %v1852 = vrsqrt.pop %v1851
    %v1853 = vmul.f32 %v1851, %v1852
    %vm1854 = vcmp.eq.f32.partialorder %v1851, inf
    %v1855 = vsel %vm1854, %v1851, %v1853
    %vm1856 = vcmp.eq.f32.partialorder %v1851, 0.0
    %v1857 = vand.u32 %v1851, 2147483648
    %v1858 = vsel %vm1856, %v1857, %v1855
    %1859 = vxpose.xlu0.b32.start [1/16] %v1825, 128
    %1860 = vxpose.xlu0.b32.cont [2/16] %v1832, 128
    %1861 = vxpose.xlu0.b32.cont [3/16] %v1839, 128
    %1862 = vxpose.xlu0.b32.cont [4/16] %v1846, 128
    %1863 = vxpose.xlu0.b32.cont [5/16] 0.0, 128
    %1864 = vxpose.xlu0.b32.cont [6/16] 0.0, 128
    %1865 = vxpose.xlu0.b32.cont [7/16] 0.0, 128
    %1866 = vxpose.xlu0.b32.cont [8/16] 0.0, 128
    %1867 = vxpose.xlu0.b32.cont [9/16] 0.0, 128
    %1868 = vxpose.xlu0.b32.cont [10/16] 0.0, 128
    %1869 = vxpose.xlu0.b32.cont [11/16] 0.0, 128
    %1870 = vxpose.xlu0.b32.cont [12/16] 0.0, 128
    %1871 = vxpose.xlu0.b32.cont [13/16] 0.0, 128
    %1872 = vxpose.xlu0.b32.cont [14/16] 0.0, 128
    %1873 = vxpose.xlu0.b32.cont [15/16] 0.0, 128
    %1874 = vxpose.xlu0.b32.end [16/16] 0.0, 128
    %v1875 = vpop.trf.xlu0
    %v1876 = vpop.trf.xlu0
    %v1877 = vpop.trf.xlu0
    %v1878 = vpop.trf.xlu0
    %v1879 = vpop.trf.xlu0
    %v1880 = vpop.trf.xlu0
    %v1881 = vpop.trf.xlu0
    %v1882 = vpop.trf.xlu0
    %v1883 = vpop.trf.xlu0
    %v1884 = vpop.trf.xlu0
    %v1885 = vpop.trf.xlu0
    %v1886 = vpop.trf.xlu0
    %v1887 = vpop.trf.xlu0
    %v1888 = vpop.trf.xlu0
    %v1889 = vpop.trf.xlu0
    %v1890 = vpop.trf.xlu0
    %v1892 = vrot.slane %v1875, 7
    %v1894 = vmul.f32 %v1858, %v1892
    %v1895 = vadd.f32 %v1894, 1e-06
    %v1897 = vrot.slane %v1895, 1
    %v1899 = vrcp.pop %v1897
    %v1900 = vmul.f32 %v1796, %v1899
    %v1901 = vrot.slane %v544, 1
    %v1903 = vmul.f32 %v1900, %v1901
    %v1904 = vsel %vm547, %v1903, -inf
    %1905 = vmax.xlane.f32.xlu0 %v1904
    %v1906 = vpop.xlane.xlu0 %1905
    %v1907 = vsub.f32 %v1903, %v1906
    %v1908 = vmul.f32 %v1907, 1.442695
    %v1909 = vpow.pop %v1908
    %v1910 = vsel %vm547, %v1909, 0.0
    %1911 = vadd.xlane.f32.xlu0 %v1910
    %v1912 = vpop.xlane.xlu0 %1911
    %v1913 = vrcp.pop %v1912
    %v1914 = vmul.f32 %v1909, %v1913
    %v1915 = vmul.f32 %v561, %v1711
    %v1917 = vrot.slane %v1914, 7
    %v1919 = vmul.f32 %v568, %v1917
    %v1920 = vadd.f32 %v1915, %v1919
    %v1921 = vmul.f32 %v574, %v1920
    %s1922 = scalar_lea.vmem [#allocation6], 1
    %vm1923 = vcmask 254977
    %1924 = vst.msk [vmem:[%s1922 - $0x1] sm:$0x2] %vm1923, %v1921
    %v1926 = vrot.slane %v1921, 1
    %1928 = vxpose.xlu0.b32.start [1/16] %v1926, 128
    %1929 = vxpose.xlu0.b32.cont [2/16] 0.0, 128
    %1930 = vxpose.xlu0.b32.cont [3/16] 0.0, 128
    %1931 = vxpose.xlu0.b32.cont [4/16] 0.0, 128
    %1932 = vxpose.xlu0.b32.cont [5/16] 0.0, 128
    %1933 = vxpose.xlu0.b32.cont [6/16] 0.0, 128
    %1934 = vxpose.xlu0.b32.cont [7/16] 0.0, 128
    %1935 = vxpose.xlu0.b32.cont [8/16] 0.0, 128
    %1936 = vxpose.xlu0.b32.cont [9/16] 0.0, 128
    %1937 = vxpose.xlu0.b32.cont [10/16] 0.0, 128
    %1938 = vxpose.xlu0.b32.cont [11/16] 0.0, 128
    %1939 = vxpose.xlu0.b32.cont [12/16] 0.0, 128
    %1940 = vxpose.xlu0.b32.cont [13/16] 0.0, 128
    %1941 = vxpose.xlu0.b32.cont [14/16] 0.0, 128
    %1942 = vxpose.xlu0.b32.cont [15/16] 0.0, 128
    %1943 = vxpose.xlu0.b32.end [16/16] 0.0, 128
    %v1944 = vpop.trf.xlu0
    %v1945 = vpop.trf.xlu0
    %v1946 = vpop.trf.xlu0
    %v1947 = vpop.trf.xlu0
    %v1948 = vpop.trf.xlu0
    %v1949 = vpop.trf.xlu0
    %v1950 = vpop.trf.xlu0
    %v1951 = vpop.trf.xlu0
    %v1952 = vpop.trf.xlu0
    %v1953 = vpop.trf.xlu0
    %v1954 = vpop.trf.xlu0
    %v1955 = vpop.trf.xlu0
    %v1956 = vpop.trf.xlu0
    %v1957 = vpop.trf.xlu0
    %v1958 = vpop.trf.xlu0
    %v1959 = vpop.trf.xlu0
    %1961 = vset.pattern.permute.xlu0 0
    %1962 = vperm.xlu0 %1961, %v1944
    %v1963 = vpop.permute.xlu0 %1962
    %1966 = vset.pattern.permute.xlu0 0
    %1967 = vperm.xlu0 %1966, %v1945
    %v1968 = vpop.permute.xlu0 %1967
    %1971 = vset.pattern.permute.xlu0 0
    %1972 = vperm.xlu0 %1971, %v1946
    %v1973 = vpop.permute.xlu0 %1972
    %1976 = vset.pattern.permute.xlu0 0
    %1977 = vperm.xlu0 %1976, %v1947
    %v1978 = vpop.permute.xlu0 %1977
    %v1980 = vlaneseq
    %v1981 = vshrl.u32 %v1980, 7
    %v1982 = vsub.s32 1, %v1981
    %v1983 = vrot.slane %v135, %v1982
    %v1984 = vmul.f32 %v1963, %v1983
    %v1985 = vmul.f32 %v1968, %v1983
    %v1986 = vmul.f32 %v1973, %v1983
    %v1987 = vmul.f32 %v1978, %v1983
    %v1988 = vsub.f32 1.0, %v1984
    %v1989 = vsub.f32 1.0, %v1985
    %v1990 = vsub.f32 1.0, %v1986
    %v1991 = vsub.f32 1.0, %v1987
    %v1992 = vlaneseq
    %v1993 = vshrl.u32 %v1992, 7
    %v1994 = vsub.s32 1, %v1993
    %v1995 = vrot.slane %v126, %v1994
    %v1996 = vmul.f32 %v1963, %v1995
    %v1997 = vmul.f32 %v1968, %v1995
    %v1998 = vmul.f32 %v1973, %v1995
    %v1999 = vmul.f32 %v1978, %v1995
    %v2000 = vadd.f32 %v1996, 0.0
    %v2001 = vadd.f32 %v1997, 0.0
    %v2002 = vadd.f32 %v1998, 0.0
    %v2003 = vadd.f32 %v1999, 0.0
    %2008 = vrot.lane.b32.xlu0 %v1988, 112
    %v2009 = vpop.permute.xlu0 %2008
    %2010 = vrot.lane.b32.xlu0 %v1989, 112
    %v2011 = vpop.permute.xlu0 %2010
    %2012 = vrot.lane.b32.xlu0 %v1990, 112
    %v2013 = vpop.permute.xlu0 %2012
    %2014 = vrot.lane.b32.xlu0 %v1991, 112
    %v2015 = vpop.permute.xlu0 %2014
    %v2020 = vmul.f32 %v1577, %v2009
    %v2021 = vmul.f32 %v1578, %v2011
    %v2022 = vmul.f32 %v1579, %v2013
    %v2023 = vmul.f32 %v1580, %v2015
    %v2024 = vadd.f32 %v2020, %v2000
    %v2025 = vadd.f32 %v2021, %v2001
    %v2026 = vadd.f32 %v2022, %v2002
    %v2027 = vadd.f32 %v2023, %v2003
    %s2028 = scalar_lea.vmem %s10, 32
    %2029 = vst.msk [vmem:[%s2028] sm:$0xff] %vm346, %v2024
    %2030 = vst.msk [vmem:[%s2028 + $0x8] sm:$0xff] %vm346, %v2025
    %2031 = vst.msk [vmem:[%s2028 + $0x10] sm:$0xff] %vm346, %v2026
    %2032 = vst.msk [vmem:[%s2028 + $0x18] sm:$0xff] %vm346, %v2027
    %s2033 = scalar_lea.vmem %s6, 32
    %v2034 = vld [vmem:[%s2033] sm:$0xff]
    %v2035 = vld [vmem:[%s2033 + $0x8] sm:$0xff]
    %v2036 = vld [vmem:[%s2033 + $0x10] sm:$0xff]
    %v2037 = vld [vmem:[%s2033 + $0x18] sm:$0xff]
    %v2038 = vsub.f32 1.0, %v1944
    %v2039 = vsub.f32 1.0, %v1945
    %v2040 = vsub.f32 1.0, %v1946
    %v2041 = vsub.f32 1.0, %v1947
    %2043 = vset.pattern.permute.xlu0 0
    %2044 = vperm.xlu0 %2043, %v2038
    %v2045 = vpop.permute.xlu0 %2044
    %2048 = vset.pattern.permute.xlu0 0
    %2049 = vperm.xlu0 %2048, %v2039
    %v2050 = vpop.permute.xlu0 %2049
    %2053 = vset.pattern.permute.xlu0 0
    %2054 = vperm.xlu0 %2053, %v2040
    %v2055 = vpop.permute.xlu0 %2054
    %2058 = vset.pattern.permute.xlu0 0
    %2059 = vperm.xlu0 %2058, %v2041
    %v2060 = vpop.permute.xlu0 %2059
    %v2062 = vlaneseq
    %v2063 = vshrl.u32 %v2062, 7
    %v2064 = vsub.s32 1, %v2063
    %v2065 = vrot.slane %v1921, %v2064
    %v2066 = vsub.f32 %v2045, %v2065
    %v2067 = vsub.f32 %v2050, %v2065
    %v2068 = vsub.f32 %v2055, %v2065
    %v2069 = vsub.f32 %v2060, %v2065
    %v2070 = vmul.f32 %v2066, %v2034
    %v2071 = vmul.f32 %v2067, %v2035
    %v2072 = vmul.f32 %v2068, %v2036
    %v2073 = vmul.f32 %v2069, %v2037
    %v2075 = vlaneseq
    %v2076 = vshrl.u32 %v2075, 7
    %v2077 = vsub.s32 0, %v2076
    %v2078 = vrot.slane %v1584, %v2077
    %v2080 = vmul.f32 %v1963, %v2078
    %v2081 = vmul.f32 %v1968, %v2078
    %v2082 = vmul.f32 %v1973, %v2078
    %v2083 = vmul.f32 %v1978, %v2078
    %v2084 = vadd.f32 %v2070, %v2080
    %v2085 = vadd.f32 %v2071, %v2081
    %v2086 = vadd.f32 %v2072, %v2082
    %v2087 = vadd.f32 %v2073, %v2083
    %v2088 = vsel %vm202, 0.0, %v2084
    %v2089 = vsel %vm203, 0.0, %v2085
    %v2090 = vsel %vm204, 0.0, %v2086
    %v2091 = vsel %vm205, 0.0, %v2087
    %s2092 = scalar_lea.vmem [#allocation7], 32
    %2093 = vst.msk [vmem:[%s2092] sm:$0xff] %vm55, %v2088
    %2094 = vst.msk [vmem:[%s2092 + $0x8] sm:$0xff] %vm55, %v2089
    %2095 = vst.msk [vmem:[%s2092 + $0x10] sm:$0xff] %vm55, %v2090
    %2096 = vst.msk [vmem:[%s2092 + $0x18] sm:$0xff] %vm55, %v2091
    %v2097 = vsel %vm1923, %v1921, 0.0
    %2098 = vadd.xlane.f32.xlu0 %v2097
    %v2099 = vpop.xlane.xlu0 %2098
    %v2100 = vsub.f32 1.0, %v2099
    %v2101 = vmul.f32 %v2100, %v2078
    %v2102 = vadd.f32 %v2101, %v1921
    %s2103 = scalar_lea.vmem [#allocation9], 1
    %2104 = vst.msk [vmem:[%s2103 - $0x1] sm:$0x2] %vm1923, %v2102
    %vm2105 = vcmask 312609
    %v2106 = vsel %vm2105, %v126, -inf
    %2107 = vmax.xlane.f32.xlu0 %v2106
    %v2108 = vpop.xlane.xlu0 %2107
    %v2109 = vsub.f32 %v126, %v2108
    %v2110 = vmul.f32 %v2109, 1.442695
    %v2111 = vpow.pop %v2110
    %2113 = vrot.lane.b32.xlu0 %v2111, 92
    %v2114 = vpop.permute.xlu0 %2113
    %vm2116 = vcmask 17409
    %v2117 = vsel %vm2116, %v2114, 0.0
    %2118 = vadd.xlane.f32.xlu0 %v2117
    %v2119 = vpop.xlane.xlu0 %2118
    %v2120 = vrcp.pop %v2119
    %v2121 = vmul.f32 %v2111, %v2120
    %2122 = vrot.lane.b32.xlu0 %v1712, 69
    %v2123 = vpop.permute.xlu0 %2122
    %v2124 = vsel %vm346, %v2123, 0
    %v2127 = vsel %vm346, %v2024, 0
    %v2130 = vsel %vm346, %v2025, 0
    %v2133 = vsel %vm346, %v2026, 0
    %v2136 = vsel %vm346, %v2027, 0
    %2138 = vmatprep.subr.mxu0 0.0
    %2139 = vmatpush1.xpose.msra.mxu0 %v2127
    %2140 = vmatprep.subr.mxu0 0.0
    %2141 = vmatpush1.xpose.msra.mxu0 %v2130
    %2142 = vmatprep.subr.mxu0 0.0
    %2143 = vmatpush1.xpose.msra.mxu0 %v2133
    %2144 = vmatprep.subr.mxu0 0.0
    %2145 = vmatpush1.xpose.msra.mxu0 %v2136
    %2146 = vmatprep.subr.mxu0 0.0
    %2147 = vmatpush1.xpose.msra.mxu0 0.0
    %2148 = vmatprep.subr.mxu0 0.0
    %2149 = vmatpush1.xpose.msra.mxu0 0.0
    %2150 = vmatprep.subr.mxu0 0.0
    %2151 = vmatpush1.xpose.msra.mxu0 0.0
    %2152 = vmatprep.subr.mxu0 0.0
    %2153 = vmatpush1.xpose.msra.mxu0 0.0
    %2154 = vmatprep.subr.mxu0 0.0
    %2155 = vmatpush1.xpose.msra.mxu0 0.0
    %2156 = vmatprep.subr.mxu0 0.0
    %2157 = vmatpush1.xpose.msra.mxu0 0.0
    %2158 = vmatprep.subr.mxu0 0.0
    %2159 = vmatpush1.xpose.msra.mxu0 0.0
    %2160 = vmatprep.subr.mxu0 0.0
    %2161 = vmatpush1.xpose.msra.mxu0 0.0
    %2162 = vmatprep.subr.mxu0 0.0
    %2163 = vmatpush1.xpose.msra.mxu0 0.0
    %2164 = vmatprep.subr.mxu0 0.0
    %2165 = vmatpush1.xpose.msra.mxu0 0.0
    %2166 = vmatprep.subr.mxu0 0.0
    %2167 = vmatpush1.xpose.msra.mxu0 0.0
    %2168 = vmatprep.subr.mxu0 0.0
    %2169 = vmatpush1.xpose.msra.mxu0 0.0
    %2170 = vmatprep.subr.mxu0 0.0
    %2171 = vmatpush1.xpose.msra.mxu0 0.0
    %2172 = vmatprep.subr.mxu0 0.0
    %2173 = vmatpush1.xpose.msra.mxu0 0.0
    %2174 = vmatprep.subr.mxu0 0.0
    %2175 = vmatpush1.xpose.msra.mxu0 0.0
    %2176 = vmatprep.subr.mxu0 0.0
    %2177 = vmatpush1.xpose.msra.mxu0 0.0
    %2178 = vmatprep.subr.mxu0 0.0
    %2179 = vmatpush1.xpose.msra.mxu0 0.0
    %2180 = vmatprep.subr.mxu0 0.0
    %2181 = vmatpush1.xpose.msra.mxu0 0.0
    %2182 = vmatprep.subr.mxu0 0.0
    %2183 = vmatpush1.xpose.msra.mxu0 0.0
    %2184 = vmatprep.subr.mxu0 0.0
    %2185 = vmatpush1.xpose.msra.mxu0 0.0
    %2186 = vmatprep.subr.mxu0 0.0
    %2187 = vmatpush1.xpose.msra.mxu0 0.0
    %2188 = vmatprep.subr.mxu0 0.0
    %2189 = vmatpush1.xpose.msra.mxu0 0.0
    %2190 = vmatprep.subr.mxu0 0.0
    %2191 = vmatpush1.xpose.msra.mxu0 0.0
    %2192 = vmatprep.subr.mxu0 0.0
    %2193 = vmatpush1.xpose.msra.mxu0 0.0
    %2194 = vmatprep.subr.mxu0 0.0
    %2195 = vmatpush1.xpose.msra.mxu0 0.0
    %2196 = vmatprep.subr.mxu0 0.0
    %2197 = vmatpush1.xpose.msra.mxu0 0.0
    %2198 = vmatprep.subr.mxu0 0.0
    %2199 = vmatpush1.xpose.msra.mxu0 0.0
    %2200 = vmatprep.subr.mxu0 0.0
    %2201 = vmatpush1.xpose.msra.mxu0 0.0
    %2202 = vmatprep.mubr.f32.mxu0 0.0
    %2203 = vmatmul.mubr.f32.gmra.mrb[0].mxu0 %v2124
    %v2204 = vpop.f32.mrb[0].mxu0
    %v2205 = vadd.f32 0.0, %v2204
    %v2206 = vpop.f32.mrb[0].mxu0
    %2207 = vdwg.mxu0
    %v2208 = vmul.f32 %v2024, %v2024
    %v2209 = vmul.f32 %v2025, %v2025
    %v2210 = vmul.f32 %v2026, %v2026
    %v2211 = vmul.f32 %v2027, %v2027
    %v2212 = vsel %vm346, %v2208, 0.0
    %2213 = vadd.xlane.f32.xlu0 %v2212
    %v2214 = vpop.xlane.xlu0 %2213
    %v2215 = vsel %vm346, %v2209, 0.0
    %2216 = vadd.xlane.f32.xlu0 %v2215
    %v2217 = vpop.xlane.xlu0 %2216
    %v2218 = vsel %vm346, %v2210, 0.0
    %2219 = vadd.xlane.f32.xlu0 %v2218
    %v2220 = vpop.xlane.xlu0 %2219
    %v2221 = vsel %vm346, %v2211, 0.0
    %2222 = vadd.xlane.f32.xlu0 %v2221
    %v2223 = vpop.xlane.xlu0 %2222
    %v2224 = vadd.f32 %v2214, 1e-06
    %v2225 = vadd.f32 %v2217, 1e-06
    %v2226 = vadd.f32 %v2220, 1e-06
    %v2227 = vadd.f32 %v2223, 1e-06
    %v2228 = vrsqrt.pop %v2224
    %v2229 = vmul.f32 %v2224, %v2228
    %vm2230 = vcmp.eq.f32.partialorder %v2224, inf
    %v2231 = vsel %vm2230, %v2224, %v2229
    %vm2232 = vcmp.eq.f32.partialorder %v2224, 0.0
    %v2233 = vand.u32 %v2224, 2147483648
    %v2234 = vsel %vm2232, %v2233, %v2231
    %v2235 = vrsqrt.pop %v2225
    %v2236 = vmul.f32 %v2225, %v2235
    %vm2237 = vcmp.eq.f32.partialorder %v2225, inf
    %v2238 = vsel %vm2237, %v2225, %v2236
    %vm2239 = vcmp.eq.f32.partialorder %v2225, 0.0
    %v2240 = vand.u32 %v2225, 2147483648
    %v2241 = vsel %vm2239, %v2240, %v2238
    %v2242 = vrsqrt.pop %v2226
    %v2243 = vmul.f32 %v2226, %v2242
    %vm2244 = vcmp.eq.f32.partialorder %v2226, inf
    %v2245 = vsel %vm2244, %v2226, %v2243
    %vm2246 = vcmp.eq.f32.partialorder %v2226, 0.0
    %v2247 = vand.u32 %v2226, 2147483648
    %v2248 = vsel %vm2246, %v2247, %v2245
    %v2249 = vrsqrt.pop %v2227
    %v2250 = vmul.f32 %v2227, %v2249
    %vm2251 = vcmp.eq.f32.partialorder %v2227, inf
    %v2252 = vsel %vm2251, %v2227, %v2250
    %vm2253 = vcmp.eq.f32.partialorder %v2227, 0.0
    %v2254 = vand.u32 %v2227, 2147483648
    %v2255 = vsel %vm2253, %v2254, %v2252
    %v2256 = vsel %vm1847, %v903, 0.0
    %2257 = vadd.xlane.f32.xlu0 %v2256
    %v2258 = vpop.xlane.xlu0 %2257
    %v2259 = vadd.f32 %v2258, 1e-06
    %v2260 = vrsqrt.pop %v2259
    %v2261 = vmul.f32 %v2259, %v2260
    %vm2262 = vcmp.eq.f32.partialorder %v2259, inf
    %v2263 = vsel %vm2262, %v2259, %v2261
    %vm2264 = vcmp.eq.f32.partialorder %v2259, 0.0
    %v2265 = vand.u32 %v2259, 2147483648
    %v2266 = vsel %vm2264, %v2265, %v2263
    %2267 = vxpose.xlu0.b32.start [1/16] %v2234, 128
    %2268 = vxpose.xlu0.b32.cont [2/16] %v2241, 128
    %2269 = vxpose.xlu0.b32.cont [3/16] %v2248, 128
    %2270 = vxpose.xlu0.b32.cont [4/16] %v2255, 128
    %2271 = vxpose.xlu0.b32.cont [5/16] 0.0, 128
    %2272 = vxpose.xlu0.b32.cont [6/16] 0.0, 128
    %2273 = vxpose.xlu0.b32.cont [7/16] 0.0, 128
    %2274 = vxpose.xlu0.b32.cont [8/16] 0.0, 128
    %2275 = vxpose.xlu0.b32.cont [9/16] 0.0, 128
    %2276 = vxpose.xlu0.b32.cont [10/16] 0.0, 128
    %2277 = vxpose.xlu0.b32.cont [11/16] 0.0, 128
    %2278 = vxpose.xlu0.b32.cont [12/16] 0.0, 128
    %2279 = vxpose.xlu0.b32.cont [13/16] 0.0, 128
    %2280 = vxpose.xlu0.b32.cont [14/16] 0.0, 128
    %2281 = vxpose.xlu0.b32.cont [15/16] 0.0, 128
    %2282 = vxpose.xlu0.b32.end [16/16] 0.0, 128
    %v2283 = vpop.trf.xlu0
    %v2284 = vpop.trf.xlu0
    %v2285 = vpop.trf.xlu0
    %v2286 = vpop.trf.xlu0
    %v2287 = vpop.trf.xlu0
    %v2288 = vpop.trf.xlu0
    %v2289 = vpop.trf.xlu0
    %v2290 = vpop.trf.xlu0
    %v2291 = vpop.trf.xlu0
    %v2292 = vpop.trf.xlu0
    %v2293 = vpop.trf.xlu0
    %v2294 = vpop.trf.xlu0
    %v2295 = vpop.trf.xlu0
    %v2296 = vpop.trf.xlu0
    %v2297 = vpop.trf.xlu0
    %v2298 = vpop.trf.xlu0
    %v2300 = vrot.slane %v2283, 7
    %v2302 = vmul.f32 %v2266, %v2300
    %v2303 = vadd.f32 %v2302, 1e-06
    %v2305 = vrot.slane %v2303, 1
    %v2307 = vrcp.pop %v2305
    %v2308 = vmul.f32 %v2205, %v2307
    %v2309 = vrot.slane %v954, 1
    %v2311 = vmul.f32 %v2308, %v2309
    %v2312 = vsel %vm547, %v2311, -inf
    %2313 = vmax.xlane.f32.xlu0 %v2312
    %v2314 = vpop.xlane.xlu0 %2313
    %v2315 = vsub.f32 %v2311, %v2314
    %v2316 = vmul.f32 %v2315, 1.442695
    %v2317 = vpow.pop %v2316
    %v2318 = vsel %vm547, %v2317, 0.0
    %2319 = vadd.xlane.f32.xlu0 %v2318
    %v2320 = vpop.xlane.xlu0 %2319
    %v2321 = vrcp.pop %v2320
    %v2322 = vmul.f32 %v2317, %v2321
    %2324 = vset.pattern.permute.xlu0 38
    %2325 = vperm.xlu0 %2324, %v2121
    %v2326 = vpop.permute.xlu0 %2325
    %v2329 = vrot.slane %v2322, 7
    %v2331 = vmul.f32 %v2326, %v2329
    %v2333 = vsel %vm55, %v1582, 0
    %v2336 = vsel %vm55, %v2088, 0
    %v2339 = vsel %vm55, %v2089, 0
    %v2342 = vsel %vm55, %v2090, 0
    %v2345 = vsel %vm55, %v2091, 0
    %2347 = vmatprep.subr.mxu0 0.0
    %2348 = vmatpush1.xpose.msra.mxu0 %v2336
    %2349 = vmatprep.subr.mxu0 0.0
    %2350 = vmatpush1.xpose.msra.mxu0 %v2339
    %2351 = vmatprep.subr.mxu0 0.0
    %2352 = vmatpush1.xpose.msra.mxu0 %v2342
    %2353 = vmatprep.subr.mxu0 0.0
    %2354 = vmatpush1.xpose.msra.mxu0 %v2345
    %2355 = vmatprep.subr.mxu0 0.0
    %2356 = vmatpush1.xpose.msra.mxu0 0.0
    %2357 = vmatprep.subr.mxu0 0.0
    %2358 = vmatpush1.xpose.msra.mxu0 0.0
    %2359 = vmatprep.subr.mxu0 0.0
    %2360 = vmatpush1.xpose.msra.mxu0 0.0
    %2361 = vmatprep.subr.mxu0 0.0
    %2362 = vmatpush1.xpose.msra.mxu0 0.0
    %2363 = vmatprep.subr.mxu0 0.0
    %2364 = vmatpush1.xpose.msra.mxu0 0.0
    %2365 = vmatprep.subr.mxu0 0.0
    %2366 = vmatpush1.xpose.msra.mxu0 0.0
    %2367 = vmatprep.subr.mxu0 0.0
    %2368 = vmatpush1.xpose.msra.mxu0 0.0
    %2369 = vmatprep.subr.mxu0 0.0
    %2370 = vmatpush1.xpose.msra.mxu0 0.0
    %2371 = vmatprep.subr.mxu0 0.0
    %2372 = vmatpush1.xpose.msra.mxu0 0.0
    %2373 = vmatprep.subr.mxu0 0.0
    %2374 = vmatpush1.xpose.msra.mxu0 0.0
    %2375 = vmatprep.subr.mxu0 0.0
    %2376 = vmatpush1.xpose.msra.mxu0 0.0
    %2377 = vmatprep.subr.mxu0 0.0
    %2378 = vmatpush1.xpose.msra.mxu0 0.0
    %2379 = vmatprep.subr.mxu0 0.0
    %2380 = vmatpush1.xpose.msra.mxu0 0.0
    %2381 = vmatprep.subr.mxu0 0.0
    %2382 = vmatpush1.xpose.msra.mxu0 0.0
    %2383 = vmatprep.subr.mxu0 0.0
    %2384 = vmatpush1.xpose.msra.mxu0 0.0
    %2385 = vmatprep.subr.mxu0 0.0
    %2386 = vmatpush1.xpose.msra.mxu0 0.0
    %2387 = vmatprep.subr.mxu0 0.0
    %2388 = vmatpush1.xpose.msra.mxu0 0.0
    %2389 = vmatprep.subr.mxu0 0.0
    %2390 = vmatpush1.xpose.msra.mxu0 0.0
    %2391 = vmatprep.subr.mxu0 0.0
    %2392 = vmatpush1.xpose.msra.mxu0 0.0
    %2393 = vmatprep.subr.mxu0 0.0
    %2394 = vmatpush1.xpose.msra.mxu0 0.0
    %2395 = vmatprep.subr.mxu0 0.0
    %2396 = vmatpush1.xpose.msra.mxu0 0.0
    %2397 = vmatprep.subr.mxu0 0.0
    %2398 = vmatpush1.xpose.msra.mxu0 0.0
    %2399 = vmatprep.subr.mxu0 0.0
    %2400 = vmatpush1.xpose.msra.mxu0 0.0
    %2401 = vmatprep.subr.mxu0 0.0
    %2402 = vmatpush1.xpose.msra.mxu0 0.0
    %2403 = vmatprep.subr.mxu0 0.0
    %2404 = vmatpush1.xpose.msra.mxu0 0.0
    %2405 = vmatprep.subr.mxu0 0.0
    %2406 = vmatpush1.xpose.msra.mxu0 0.0
    %2407 = vmatprep.subr.mxu0 0.0
    %2408 = vmatpush1.xpose.msra.mxu0 0.0
    %2409 = vmatprep.subr.mxu0 0.0
    %2410 = vmatpush1.xpose.msra.mxu0 0.0
    %2411 = vmatprep.mubr.f32.mxu0 0.0
    %2412 = vmatmul.mubr.f32.gmra.mrb[0].mxu0 %v2333
    %v2413 = vpop.f32.mrb[0].mxu0
    %v2414 = vadd.f32 0.0, %v2413
    %v2415 = vpop.f32.mrb[0].mxu0
    %2416 = vdwg.mxu0
    %2417 = vmatprep.subr.mxu0 0.0
    %2418 = vmatpush1.msra.mxu0 %v2088
    %2419 = vmatprep.subr.mxu0 0.0
    %2420 = vmatpush1.msra.mxu0 %v2089
    %2421 = vmatprep.subr.mxu0 0.0
    %2422 = vmatpush1.msra.mxu0 %v2090
    %2423 = vmatprep.subr.mxu0 0.0
    %2424 = vmatpush1.msra.mxu0 %v2091
    %2425 = vmatprep.subr.mxu0 0.0
    %2426 = vmatpush1.msra.mxu0 0.0
    %2427 = vmatprep.subr.mxu0 0.0
    %2428 = vmatpush1.msra.mxu0 0.0
    %2429 = vmatprep.subr.mxu0 0.0
    %2430 = vmatpush1.msra.mxu0 0.0
    %2431 = vmatprep.subr.mxu0 0.0
    %2432 = vmatpush1.msra.mxu0 0.0
    %2433 = vmatprep.subr.mxu0 0.0
    %2434 = vmatpush1.msra.mxu0 0.0
    %2435 = vmatprep.subr.mxu0 0.0
    %2436 = vmatpush1.msra.mxu0 0.0
    %2437 = vmatprep.subr.mxu0 0.0
    %2438 = vmatpush1.msra.mxu0 0.0
    %2439 = vmatprep.subr.mxu0 0.0
    %2440 = vmatpush1.msra.mxu0 0.0
    %2441 = vmatprep.subr.mxu0 0.0
    %2442 = vmatpush1.msra.mxu0 0.0
    %2443 = vmatprep.subr.mxu0 0.0
    %2444 = vmatpush1.msra.mxu0 0.0
    %2445 = vmatprep.subr.mxu0 0.0
    %2446 = vmatpush1.msra.mxu0 0.0
    %2447 = vmatprep.subr.mxu0 0.0
    %2448 = vmatpush1.msra.mxu0 0.0
    %2449 = vmatprep.subr.mxu0 0.0
    %2450 = vmatpush1.msra.mxu0 0.0
    %2451 = vmatprep.subr.mxu0 0.0
    %2452 = vmatpush1.msra.mxu0 0.0
    %2453 = vmatprep.subr.mxu0 0.0
    %2454 = vmatpush1.msra.mxu0 0.0
    %2455 = vmatprep.subr.mxu0 0.0
    %2456 = vmatpush1.msra.mxu0 0.0
    %2457 = vmatprep.subr.mxu0 0.0
    %2458 = vmatpush1.msra.mxu0 0.0
    %2459 = vmatprep.subr.mxu0 0.0
    %2460 = vmatpush1.msra.mxu0 0.0
    %2461 = vmatprep.subr.mxu0 0.0
    %2462 = vmatpush1.msra.mxu0 0.0
    %2463 = vmatprep.subr.mxu0 0.0
    %2464 = vmatpush1.msra.mxu0 0.0
    %2465 = vmatprep.subr.mxu0 0.0
    %2466 = vmatpush1.msra.mxu0 0.0
    %2467 = vmatprep.subr.mxu0 0.0
    %2468 = vmatpush1.msra.mxu0 0.0
    %2469 = vmatprep.subr.mxu0 0.0
    %2470 = vmatpush1.msra.mxu0 0.0
    %2471 = vmatprep.subr.mxu0 0.0
    %2472 = vmatpush1.msra.mxu0 0.0
    %2473 = vmatprep.subr.mxu0 0.0
    %2474 = vmatpush1.msra.mxu0 0.0
    %2475 = vmatprep.subr.mxu0 0.0
    %2476 = vmatpush1.msra.mxu0 0.0
    %2477 = vmatprep.subr.mxu0 0.0
    %2478 = vmatpush1.msra.mxu0 0.0
    %2479 = vmatprep.subr.mxu0 0.0
    %2480 = vmatpush1.msra.mxu0 0.0
    %2481 = vmatprep.mubr.f32.mxu0 0.0
    %2482 = vmatmul.mubr.f32.gmra.mrb[0].mxu0 %v2333
    %v2483 = vpop.f32.mrb[0].mxu0
    %v2484 = vadd.f32 0.0, %v2483
    %v2485 = vpop.f32.mrb[0].mxu0
    %2486 = vdwg.mxu0
    %2487 = vset.pattern.permute.xlu0 37
    %2488 = vperm.xlu0 %2487, %v2121
    %v2489 = vpop.permute.xlu0 %2488
    %v2492 = vrot.slane %v2414, 7
    %v2494 = vmul.f32 %v2489, %v2492
    %v2495 = vadd.f32 %v2331, %v2494
    %2496 = vset.pattern.permute.xlu0 36
    %2497 = vperm.xlu0 %2496, %v2121
    %v2498 = vpop.permute.xlu0 %2497
    %v2501 = vrot.slane %v2484, 7
    %v2503 = vmul.f32 %v2498, %v2501
    %v2504 = vadd.f32 %v2495, %v2503
    %s2505 = scalar_lea.vmem [#allocation4], 2
    %2506 = vst.msk [vmem:[%s2505 - $0x1] sm:$0x2] %vm1923, %v2504
    %v2508 = vrot.slane %v2504, 1
    %v2509 = vsel %vm55, %v2508, 0
    %2511 = vmatprep.subr.mxu0 0.0
    %2512 = vmatpush1.msra.mxu0 %v2024
    %2513 = vmatprep.subr.mxu0 0.0
    %2514 = vmatpush1.msra.mxu0 %v2025
    %2515 = vmatprep.subr.mxu0 0.0
    %2516 = vmatpush1.msra.mxu0 %v2026
    %2517 = vmatprep.subr.mxu0 0.0
    %2518 = vmatpush1.msra.mxu0 %v2027
    %2519 = vmatprep.subr.mxu0 0.0
    %2520 = vmatpush1.msra.mxu0 0.0
    %2521 = vmatprep.subr.mxu0 0.0
    %2522 = vmatpush1.msra.mxu0 0.0
    %2523 = vmatprep.subr.mxu0 0.0
    %2524 = vmatpush1.msra.mxu0 0.0
    %2525 = vmatprep.subr.mxu0 0.0
    %2526 = vmatpush1.msra.mxu0 0.0
    %2527 = vmatprep.subr.mxu0 0.0
    %2528 = vmatpush1.msra.mxu0 0.0
    %2529 = vmatprep.subr.mxu0 0.0
    %2530 = vmatpush1.msra.mxu0 0.0
    %2531 = vmatprep.subr.mxu0 0.0
    %2532 = vmatpush1.msra.mxu0 0.0
    %2533 = vmatprep.subr.mxu0 0.0
    %2534 = vmatpush1.msra.mxu0 0.0
    %2535 = vmatprep.subr.mxu0 0.0
    %2536 = vmatpush1.msra.mxu0 0.0
    %2537 = vmatprep.subr.mxu0 0.0
    %2538 = vmatpush1.msra.mxu0 0.0
    %2539 = vmatprep.subr.mxu0 0.0
    %2540 = vmatpush1.msra.mxu0 0.0
    %2541 = vmatprep.subr.mxu0 0.0
    %2542 = vmatpush1.msra.mxu0 0.0
    %2543 = vmatprep.subr.mxu0 0.0
    %2544 = vmatpush1.msra.mxu0 0.0
    %2545 = vmatprep.subr.mxu0 0.0
    %2546 = vmatpush1.msra.mxu0 0.0
    %2547 = vmatprep.subr.mxu0 0.0
    %2548 = vmatpush1.msra.mxu0 0.0
    %2549 = vmatprep.subr.mxu0 0.0
    %2550 = vmatpush1.msra.mxu0 0.0
    %2551 = vmatprep.subr.mxu0 0.0
    %2552 = vmatpush1.msra.mxu0 0.0
    %2553 = vmatprep.subr.mxu0 0.0
    %2554 = vmatpush1.msra.mxu0 0.0
    %2555 = vmatprep.subr.mxu0 0.0
    %2556 = vmatpush1.msra.mxu0 0.0
    %2557 = vmatprep.subr.mxu0 0.0
    %2558 = vmatpush1.msra.mxu0 0.0
    %2559 = vmatprep.subr.mxu0 0.0
    %2560 = vmatpush1.msra.mxu0 0.0
    %2561 = vmatprep.subr.mxu0 0.0
    %2562 = vmatpush1.msra.mxu0 0.0
    %2563 = vmatprep.subr.mxu0 0.0
    %2564 = vmatpush1.msra.mxu0 0.0
    %2565 = vmatprep.subr.mxu0 0.0
    %2566 = vmatpush1.msra.mxu0 0.0
    %2567 = vmatprep.subr.mxu0 0.0
    %2568 = vmatpush1.msra.mxu0 0.0
    %2569 = vmatprep.subr.mxu0 0.0
    %2570 = vmatpush1.msra.mxu0 0.0
    %2571 = vmatprep.subr.mxu0 0.0
    %2572 = vmatpush1.msra.mxu0 0.0
    %2573 = vmatprep.subr.mxu0 0.0
    %2574 = vmatpush1.msra.mxu0 0.0
    %2575 = vmatprep.mubr.f32.mxu0 0.0
    %2576 = vmatmul.mubr.f32.gmra.mrb[0].mxu0 %v2509
    %v2577 = vpop.f32.mrb[0].mxu0
    %v2578 = vadd.f32 0.0, %v2577
    %v2579 = vpop.f32.mrb[0].mxu0
    %2580 = vdwg.mxu0
    %s2581 = scalar_lea.vmem [#allocation2], 2
    %2582 = vst.msk [vmem:[%s2581] sm:$0x1] %vm484, %v2578
    %vm2583 = vcmask 337209
    %v2584 = vsel %vm2583, %v126, -inf
    %2585 = vmax.xlane.f32.xlu0 %v2584
    %v2586 = vpop.xlane.xlu0 %2585
    %v2587 = vsub.f32 %v126, %v2586
    %v2588 = vmul.f32 %v2587, 1.442695
    %v2589 = vpow.pop %v2588
    %2591 = vrot.lane.b32.xlu0 %v2589, 89
    %v2592 = vpop.permute.xlu0 %2591
    %v2594 = vsel %vm2116, %v2592, 0.0
    %2595 = vadd.xlane.f32.xlu0 %v2594
    %v2596 = vpop.xlane.xlu0 %2595
    %v2597 = vrcp.pop %v2596
    %v2598 = vmul.f32 %v2589, %v2597
    %2599 = vrot.lane.b32.xlu0 %v1712, 53
    %v2600 = vpop.permute.xlu0 %2599
    %v2601 = vsel %vm346, %v2600, 0
    %2603 = vmatprep.subr.mxu0 0.0
    %2604 = vmatpush1.xpose.msra.mxu0 %v2127
    %2605 = vmatprep.subr.mxu0 0.0
    %2606 = vmatpush1.xpose.msra.mxu0 %v2130
    %2607 = vmatprep.subr.mxu0 0.0
    %2608 = vmatpush1.xpose.msra.mxu0 %v2133
    %2609 = vmatprep.subr.mxu0 0.0
    %2610 = vmatpush1.xpose.msra.mxu0 %v2136
    %2611 = vmatprep.subr.mxu0 0.0
    %2612 = vmatpush1.xpose.msra.mxu0 0.0
    %2613 = vmatprep.subr.mxu0 0.0
    %2614 = vmatpush1.xpose.msra.mxu0 0.0
    %2615 = vmatprep.subr.mxu0 0.0
    %2616 = vmatpush1.xpose.msra.mxu0 0.0
    %2617 = vmatprep.subr.mxu0 0.0
    %2618 = vmatpush1.xpose.msra.mxu0 0.0
    %2619 = vmatprep.subr.mxu0 0.0
    %2620 = vmatpush1.xpose.msra.mxu0 0.0
    %2621 = vmatprep.subr.mxu0 0.0
    %2622 = vmatpush1.xpose.msra.mxu0 0.0
    %2623 = vmatprep.subr.mxu0 0.0
    %2624 = vmatpush1.xpose.msra.mxu0 0.0
    %2625 = vmatprep.subr.mxu0 0.0
    %2626 = vmatpush1.xpose.msra.mxu0 0.0
    %2627 = vmatprep.subr.mxu0 0.0
    %2628 = vmatpush1.xpose.msra.mxu0 0.0
    %2629 = vmatprep.subr.mxu0 0.0
    %2630 = vmatpush1.xpose.msra.mxu0 0.0
    %2631 = vmatprep.subr.mxu0 0.0
    %2632 = vmatpush1.xpose.msra.mxu0 0.0
    %2633 = vmatprep.subr.mxu0 0.0
    %2634 = vmatpush1.xpose.msra.mxu0 0.0
    %2635 = vmatprep.subr.mxu0 0.0
    %2636 = vmatpush1.xpose.msra.mxu0 0.0
    %2637 = vmatprep.subr.mxu0 0.0
    %2638 = vmatpush1.xpose.msra.mxu0 0.0
    %2639 = vmatprep.subr.mxu0 0.0
    %2640 = vmatpush1.xpose.msra.mxu0 0.0
    %2641 = vmatprep.subr.mxu0 0.0
    %2642 = vmatpush1.xpose.msra.mxu0 0.0
    %2643 = vmatprep.subr.mxu0 0.0
    %2644 = vmatpush1.xpose.msra.mxu0 0.0
    %2645 = vmatprep.subr.mxu0 0.0
    %2646 = vmatpush1.xpose.msra.mxu0 0.0
    %2647 = vmatprep.subr.mxu0 0.0
    %2648 = vmatpush1.xpose.msra.mxu0 0.0
    %2649 = vmatprep.subr.mxu0 0.0
    %2650 = vmatpush1.xpose.msra.mxu0 0.0
    %2651 = vmatprep.subr.mxu0 0.0
    %2652 = vmatpush1.xpose.msra.mxu0 0.0
    %2653 = vmatprep.subr.mxu0 0.0
    %2654 = vmatpush1.xpose.msra.mxu0 0.0
    %2655 = vmatprep.subr.mxu0 0.0
    %2656 = vmatpush1.xpose.msra.mxu0 0.0
    %2657 = vmatprep.subr.mxu0 0.0
    %2658 = vmatpush1.xpose.msra.mxu0 0.0
    %2659 = vmatprep.subr.mxu0 0.0
    %2660 = vmatpush1.xpose.msra.mxu0 0.0
    %2661 = vmatprep.subr.mxu0 0.0
    %2662 = vmatpush1.xpose.msra.mxu0 0.0
    %2663 = vmatprep.subr.mxu0 0.0
    %2664 = vmatpush1.xpose.msra.mxu0 0.0
    %2665 = vmatprep.subr.mxu0 0.0
    %2666 = vmatpush1.xpose.msra.mxu0 0.0
    %2667 = vmatprep.mubr.f32.mxu0 0.0
    %2668 = vmatmul.mubr.f32.gmra.mrb[0].mxu0 %v2601
    %v2669 = vpop.f32.mrb[0].mxu0
    %v2670 = vadd.f32 0.0, %v2669
    %v2671 = vpop.f32.mrb[0].mxu0
    %2672 = vdwg.mxu0
    %v2673 = vsel %vm1847, %v1307, 0.0
    %2674 = vadd.xlane.f32.xlu0 %v2673
    %v2675 = vpop.xlane.xlu0 %2674
    %v2676 = vadd.f32 %v2675, 1e-06
    %v2677 = vrsqrt.pop %v2676
    %v2678 = vmul.f32 %v2676, %v2677
    %vm2679 = vcmp.eq.f32.partialorder %v2676, inf
    %v2680 = vsel %vm2679, %v2676, %v2678
    %vm2681 = vcmp.eq.f32.partialorder %v2676, 0.0
    %v2682 = vand.u32 %v2676, 2147483648
    %v2683 = vsel %vm2681, %v2682, %v2680
    %v2684 = vmul.f32 %v2683, %v2300
    %v2685 = vadd.f32 %v2684, 1e-06
    %v2687 = vrot.slane %v2685, 1
    %v2689 = vrcp.pop %v2687
    %v2690 = vmul.f32 %v2670, %v2689
    %v2691 = vrot.slane %v1326, 1
    %v2693 = vmul.f32 %v2690, %v2691
    %v2694 = vsel %vm547, %v2693, -inf
    %2695 = vmax.xlane.f32.xlu0 %v2694
    %v2696 = vpop.xlane.xlu0 %2695
    %v2697 = vsub.f32 %v2693, %v2696
    %v2698 = vmul.f32 %v2697, 1.442695
    %v2699 = vpow.pop %v2698
    %v2700 = vsel %vm547, %v2699, 0.0
    %2701 = vadd.xlane.f32.xlu0 %v2700
    %v2702 = vpop.xlane.xlu0 %2701
    %v2703 = vrcp.pop %v2702
    %v2704 = vmul.f32 %v2699, %v2703
    %2706 = vset.pattern.permute.xlu0 41
    %2707 = vperm.xlu0 %2706, %v2598
    %v2708 = vpop.permute.xlu0 %2707
    %v2711 = vrot.slane %v2704, 7
    %v2713 = vmul.f32 %v2708, %v2711
    %v2714 = vrot.slane %v1582, 1
    %v2715 = vsel %vm55, %v2714, 0
    %2717 = vmatprep.subr.mxu0 0.0
    %2718 = vmatpush1.xpose.msra.mxu0 %v2336
    %2719 = vmatprep.subr.mxu0 0.0
    %2720 = vmatpush1.xpose.msra.mxu0 %v2339
    %2721 = vmatprep.subr.mxu0 0.0
    %2722 = vmatpush1.xpose.msra.mxu0 %v2342
    %2723 = vmatprep.subr.mxu0 0.0
    %2724 = vmatpush1.xpose.msra.mxu0 %v2345
    %2725 = vmatprep.subr.mxu0 0.0
    %2726 = vmatpush1.xpose.msra.mxu0 0.0
    %2727 = vmatprep.subr.mxu0 0.0
    %2728 = vmatpush1.xpose.msra.mxu0 0.0
    %2729 = vmatprep.subr.mxu0 0.0
    %2730 = vmatpush1.xpose.msra.mxu0 0.0
    %2731 = vmatprep.subr.mxu0 0.0
    %2732 = vmatpush1.xpose.msra.mxu0 0.0
    %2733 = vmatprep.subr.mxu0 0.0
    %2734 = vmatpush1.xpose.msra.mxu0 0.0
    %2735 = vmatprep.subr.mxu0 0.0
    %2736 = vmatpush1.xpose.msra.mxu0 0.0
    %2737 = vmatprep.subr.mxu0 0.0
    %2738 = vmatpush1.xpose.msra.mxu0 0.0
    %2739 = vmatprep.subr.mxu0 0.0
    %2740 = vmatpush1.xpose.msra.mxu0 0.0
    %2741 = vmatprep.subr.mxu0 0.0
    %2742 = vmatpush1.xpose.msra.mxu0 0.0
    %2743 = vmatprep.subr.mxu0 0.0
    %2744 = vmatpush1.xpose.msra.mxu0 0.0
    %2745 = vmatprep.subr.mxu0 0.0
    %2746 = vmatpush1.xpose.msra.mxu0 0.0
    %2747 = vmatprep.subr.mxu0 0.0
    %2748 = vmatpush1.xpose.msra.mxu0 0.0
    %2749 = vmatprep.subr.mxu0 0.0
    %2750 = vmatpush1.xpose.msra.mxu0 0.0
    %2751 = vmatprep.subr.mxu0 0.0
    %2752 = vmatpush1.xpose.msra.mxu0 0.0
    %2753 = vmatprep.subr.mxu0 0.0
    %2754 = vmatpush1.xpose.msra.mxu0 0.0
    %2755 = vmatprep.subr.mxu0 0.0
    %2756 = vmatpush1.xpose.msra.mxu0 0.0
    %2757 = vmatprep.subr.mxu0 0.0
    %2758 = vmatpush1.xpose.msra.mxu0 0.0
    %2759 = vmatprep.subr.mxu0 0.0
    %2760 = vmatpush1.xpose.msra.mxu0 0.0
    %2761 = vmatprep.subr.mxu0 0.0
    %2762 = vmatpush1.xpose.msra.mxu0 0.0
    %2763 = vmatprep.subr.mxu0 0.0
    %2764 = vmatpush1.xpose.msra.mxu0 0.0
    %2765 = vmatprep.subr.mxu0 0.0
    %2766 = vmatpush1.xpose.msra.mxu0 0.0
    %2767 = vmatprep.subr.mxu0 0.0
    %2768 = vmatpush1.xpose.msra.mxu0 0.0
    %2769 = vmatprep.subr.mxu0 0.0
    %2770 = vmatpush1.xpose.msra.mxu0 0.0
    %2771 = vmatprep.subr.mxu0 0.0
    %2772 = vmatpush1.xpose.msra.mxu0 0.0
    %2773 = vmatprep.subr.mxu0 0.0
    %2774 = vmatpush1.xpose.msra.mxu0 0.0
    %2775 = vmatprep.subr.mxu0 0.0
    %2776 = vmatpush1.xpose.msra.mxu0 0.0
    %2777 = vmatprep.subr.mxu0 0.0
    %2778 = vmatpush1.xpose.msra.mxu0 0.0
    %2779 = vmatprep.subr.mxu0 0.0
    %2780 = vmatpush1.xpose.msra.mxu0 0.0
    %2781 = vmatprep.mubr.f32.mxu0 0.0
    %2782 = vmatmul.mubr.f32.gmra.mrb[0].mxu0 %v2715
    %v2783 = vpop.f32.mrb[0].mxu0
    %v2784 = vadd.f32 0.0, %v2783
    %v2785 = vpop.f32.mrb[0].mxu0
    %2786 = vdwg.mxu0
    %2787 = vmatprep.subr.mxu0 0.0
    %2788 = vmatpush1.msra.mxu0 %v2088
    %2789 = vmatprep.subr.mxu0 0.0
    %2790 = vmatpush1.msra.mxu0 %v2089
    %2791 = vmatprep.subr.mxu0 0.0
    %2792 = vmatpush1.msra.mxu0 %v2090
    %2793 = vmatprep.subr.mxu0 0.0
    %2794 = vmatpush1.msra.mxu0 %v2091
    %2795 = vmatprep.subr.mxu0 0.0
    %2796 = vmatpush1.msra.mxu0 0.0
    %2797 = vmatprep.subr.mxu0 0.0
    %2798 = vmatpush1.msra.mxu0 0.0
    %2799 = vmatprep.subr.mxu0 0.0
    %2800 = vmatpush1.msra.mxu0 0.0
    %2801 = vmatprep.subr.mxu0 0.0
    %2802 = vmatpush1.msra.mxu0 0.0
    %2803 = vmatprep.subr.mxu0 0.0
    %2804 = vmatpush1.msra.mxu0 0.0
    %2805 = vmatprep.subr.mxu0 0.0
    %2806 = vmatpush1.msra.mxu0 0.0
    %2807 = vmatprep.subr.mxu0 0.0
    %2808 = vmatpush1.msra.mxu0 0.0
    %2809 = vmatprep.subr.mxu0 0.0
    %2810 = vmatpush1.msra.mxu0 0.0
    %2811 = vmatprep.subr.mxu0 0.0
    %2812 = vmatpush1.msra.mxu0 0.0
    %2813 = vmatprep.subr.mxu0 0.0
    %2814 = vmatpush1.msra.mxu0 0.0
    %2815 = vmatprep.subr.mxu0 0.0
    %2816 = vmatpush1.msra.mxu0 0.0
    %2817 = vmatprep.subr.mxu0 0.0
    %2818 = vmatpush1.msra.mxu0 0.0
    %2819 = vmatprep.subr.mxu0 0.0
    %2820 = vmatpush1.msra.mxu0 0.0
    %2821 = vmatprep.subr.mxu0 0.0
    %2822 = vmatpush1.msra.mxu0 0.0
    %2823 = vmatprep.subr.mxu0 0.0
    %2824 = vmatpush1.msra.mxu0 0.0
    %2825 = vmatprep.subr.mxu0 0.0
    %2826 = vmatpush1.msra.mxu0 0.0
    %2827 = vmatprep.subr.mxu0 0.0
    %2828 = vmatpush1.msra.mxu0 0.0
    %2829 = vmatprep.subr.mxu0 0.0
    %2830 = vmatpush1.msra.mxu0 0.0
    %2831 = vmatprep.subr.mxu0 0.0
    %2832 = vmatpush1.msra.mxu0 0.0
    %2833 = vmatprep.subr.mxu0 0.0
    %2834 = vmatpush1.msra.mxu0 0.0
    %2835 = vmatprep.subr.mxu0 0.0
    %2836 = vmatpush1.msra.mxu0 0.0
    %2837 = vmatprep.subr.mxu0 0.0
    %2838 = vmatpush1.msra.mxu0 0.0
    %2839 = vmatprep.subr.mxu0 0.0
    %2840 = vmatpush1.msra.mxu0 0.0
    %2841 = vmatprep.subr.mxu0 0.0
    %2842 = vmatpush1.msra.mxu0 0.0
    %2843 = vmatprep.subr.mxu0 0.0
    %2844 = vmatpush1.msra.mxu0 0.0
    %2845 = vmatprep.subr.mxu0 0.0
    %2846 = vmatpush1.msra.mxu0 0.0
    %2847 = vmatprep.subr.mxu0 0.0
    %2848 = vmatpush1.msra.mxu0 0.0
    %2849 = vmatprep.subr.mxu0 0.0
    %2850 = vmatpush1.msra.mxu0 0.0
    %2851 = vmatprep.mubr.f32.mxu0 0.0
    %2852 = vmatmul.mubr.f32.gmra.mrb[0].mxu0 %v2715
    %v2853 = vpop.f32.mrb[0].mxu0
    %v2854 = vadd.f32 0.0, %v2853
    %v2855 = vpop.f32.mrb[0].mxu0
    %2856 = vdwg.mxu0
    %2857 = vset.pattern.permute.xlu0 40
    %2858 = vperm.xlu0 %2857, %v2598
    %v2859 = vpop.permute.xlu0 %2858
    %v2862 = vrot.slane %v2784, 7
    %v2864 = vmul.f32 %v2859, %v2862
    %v2865 = vadd.f32 %v2713, %v2864
    %2866 = vset.pattern.permute.xlu0 39
    %2867 = vperm.xlu0 %2866, %v2598
    %v2868 = vpop.permute.xlu0 %2867
    %v2871 = vrot.slane %v2854, 7
    %v2873 = vmul.f32 %v2868, %v2871
    %v2874 = vadd.f32 %v2865, %v2873
    %2875 = vst.msk [vmem:[%s2505] sm:$0x2] %vm1923, %v2874
    %v2877 = vrot.slane %v2874, 1
    %v2878 = vsel %vm55, %v2877, 0
    %2880 = vmatprep.subr.mxu0 0.0
    %2881 = vmatpush1.msra.mxu0 %v2024
    %2882 = vmatprep.subr.mxu0 0.0
    %2883 = vmatpush1.msra.mxu0 %v2025
    %2884 = vmatprep.subr.mxu0 0.0
    %2885 = vmatpush1.msra.mxu0 %v2026
    %2886 = vmatprep.subr.mxu0 0.0
    %2887 = vmatpush1.msra.mxu0 %v2027
    %2888 = vmatprep.subr.mxu0 0.0
    %2889 = vmatpush1.msra.mxu0 0.0
    %2890 = vmatprep.subr.mxu0 0.0
    %2891 = vmatpush1.msra.mxu0 0.0
    %2892 = vmatprep.subr.mxu0 0.0
    %2893 = vmatpush1.msra.mxu0 0.0
    %2894 = vmatprep.subr.mxu0 0.0
    %2895 = vmatpush1.msra.mxu0 0.0
    %2896 = vmatprep.subr.mxu0 0.0
    %2897 = vmatpush1.msra.mxu0 0.0
    %2898 = vmatprep.subr.mxu0 0.0
    %2899 = vmatpush1.msra.mxu0 0.0
    %2900 = vmatprep.subr.mxu0 0.0
    %2901 = vmatpush1.msra.mxu0 0.0
    %2902 = vmatprep.subr.mxu0 0.0
    %2903 = vmatpush1.msra.mxu0 0.0
    %2904 = vmatprep.subr.mxu0 0.0
    %2905 = vmatpush1.msra.mxu0 0.0
    %2906 = vmatprep.subr.mxu0 0.0
    %2907 = vmatpush1.msra.mxu0 0.0
    %2908 = vmatprep.subr.mxu0 0.0
    %2909 = vmatpush1.msra.mxu0 0.0
    %2910 = vmatprep.subr.mxu0 0.0
    %2911 = vmatpush1.msra.mxu0 0.0
    %2912 = vmatprep.subr.mxu0 0.0
    %2913 = vmatpush1.msra.mxu0 0.0
    %2914 = vmatprep.subr.mxu0 0.0
    %2915 = vmatpush1.msra.mxu0 0.0
    %2916 = vmatprep.subr.mxu0 0.0
    %2917 = vmatpush1.msra.mxu0 0.0
    %2918 = vmatprep.subr.mxu0 0.0
    %2919 = vmatpush1.msra.mxu0 0.0
    %2920 = vmatprep.subr.mxu0 0.0
    %2921 = vmatpush1.msra.mxu0 0.0
    %2922 = vmatprep.subr.mxu0 0.0
    %2923 = vmatpush1.msra.mxu0 0.0
    %2924 = vmatprep.subr.mxu0 0.0
    %2925 = vmatpush1.msra.mxu0 0.0
    %2926 = vmatprep.subr.mxu0 0.0
    %2927 = vmatpush1.msra.mxu0 0.0
    %2928 = vmatprep.subr.mxu0 0.0
    %2929 = vmatpush1.msra.mxu0 0.0
    %2930 = vmatprep.subr.mxu0 0.0
    %2931 = vmatpush1.msra.mxu0 0.0
    %2932 = vmatprep.subr.mxu0 0.0
    %2933 = vmatpush1.msra.mxu0 0.0
    %2934 = vmatprep.subr.mxu0 0.0
    %2935 = vmatpush1.msra.mxu0 0.0
    %2936 = vmatprep.subr.mxu0 0.0
    %2937 = vmatpush1.msra.mxu0 0.0
    %2938 = vmatprep.subr.mxu0 0.0
    %2939 = vmatpush1.msra.mxu0 0.0
    %2940 = vmatprep.subr.mxu0 0.0
    %2941 = vmatpush1.msra.mxu0 0.0
    %2942 = vmatprep.subr.mxu0 0.0
    %2943 = vmatpush1.msra.mxu0 0.0
    %2944 = vmatprep.mubr.f32.mxu0 0.0
    %2945 = vmatmul.mubr.f32.gmra.mrb[0].mxu0 %v2878
    %v2946 = vpop.f32.mrb[0].mxu0
    %v2947 = vadd.f32 0.0, %v2946
    %v2948 = vpop.f32.mrb[0].mxu0
    %2949 = vdwg.mxu0
    %2950 = vst.msk [vmem:[%s2581 + $0x1] sm:$0x1] %vm484, %v2947
    // Predicated region
    $region38: #{tpu_custom_call.1} parent=1 // pred_check
      _
    $region39: #{tpu_custom_call.1} parent=1 // pred_check_branch
      %2952 = sbr.rel (0) target = $region41
    $region40: #{tpu_custom_call.1} parent=1 // pred_region
      %s2954 = ssub.s32 64, 64
      %2955 = vsyncadd [#allocation3], %s2954
      %s2956 = sshll.u32 [#allocation2], 4
      %s2957 = int_to_ptr.vmem [resolvable:$true] %s2956
      %2962 = dma.vmem_to_hbm [thread:$0]  %s2957, 64, %s9, [#allocation3], 32, 32, 2
    $region41: #{tpu_custom_call.1} parent=1 // pred_fallthru
      _
    // Predicated region
    $region42: #{tpu_custom_call.1} parent=1 // pred_check
      _
    $region43: #{tpu_custom_call.1} parent=1 // pred_check_branch
      %2964 = sbr.rel (0) target = $region45
    $region44: #{tpu_custom_call.1} parent=1 // pred_region
      _
    $region45: #{tpu_custom_call.1} parent=1 // pred_fallthru
      _
    // Predicated region
    $region46: #{tpu_custom_call.1} parent=1 // pred_check
      _
    $region47: #{tpu_custom_call.1} parent=1 // pred_check_branch
      %2966 = sbr.rel (0) target = $region49
    $region48: #{tpu_custom_call.1} parent=1 // pred_region
      %s2968 = ssub.s32 64, 64
      %2969 = vsyncadd [#allocation5], %s2968
      %s2970 = sshll.u32 [#allocation4], 4
      %s2971 = int_to_ptr.vmem [resolvable:$true] %s2970
      %2976 = dma.vmem_to_hbm [thread:$0]  %s2971, 64, %s11, [#allocation5], 32, 32, 2
    $region49: #{tpu_custom_call.1} parent=1 // pred_fallthru
      _
    // Predicated region
    $region50: #{tpu_custom_call.1} parent=1 // pred_check
      _
    $region51: #{tpu_custom_call.1} parent=1 // pred_check_branch
      %2978 = sbr.rel (0) target = $region53
    $region52: #{tpu_custom_call.1} parent=1 // pred_region
      %s2980 = ssub.s32 32, 32
      %2981 = vsyncadd [#allocation5], %s2980
      %s2982 = sshll.u32 [#allocation6], 4
      %s2983 = int_to_ptr.vmem [resolvable:$true] %s2982
      %2988 = dma.vmem_to_hbm [thread:$0]  %s2983, 32, %s12, [#allocation5], 16, 16, 1
    $region53: #{tpu_custom_call.1} parent=1 // pred_fallthru
      _
    // Predicated region
    $region54: #{tpu_custom_call.1} parent=1 // pred_check
      _
    $region55: #{tpu_custom_call.1} parent=1 // pred_check_branch
      %2990 = sbr.rel (0) target = $region57
    $region56: #{tpu_custom_call.1} parent=1 // pred_region
      %s2992 = ssub.s32 1024, 1024
      %2993 = vsyncadd [#allocation8], %s2992
      %s2994 = sshll.u32 [#allocation7], 4
      %s2995 = int_to_ptr.vmem [resolvable:$true] %s2994
      %3000 = dma.vmem_to_hbm [thread:$0]  %s2995, 1024, %s13, [#allocation8], 128, 128, 8
    $region57: #{tpu_custom_call.1} parent=1 // pred_fallthru
      _
    // Predicated region
    $region58: #{tpu_custom_call.1} parent=1 // pred_check
      _
    $region59: #{tpu_custom_call.1} parent=1 // pred_check_branch
      %3002 = sbr.rel (0) target = $region61
    $region60: #{tpu_custom_call.1} parent=1 // pred_region
      %s3004 = ssub.s32 32, 32
      %3005 = vsyncadd [#allocation8], %s3004
      %s3006 = sshll.u32 [#allocation9], 4
      %s3007 = int_to_ptr.vmem [resolvable:$true] %s3006
      %3012 = dma.vmem_to_hbm [thread:$0]  %s3007, 32, %s14, [#allocation8], 16, 16, 1
    $region61: #{tpu_custom_call.1} parent=1 // pred_fallthru
      _
    // Predicated region
    $region62: #{tpu_custom_call.1} parent=1 // pred_check
      _
    $region63: #{tpu_custom_call.1} parent=1 // pred_check_branch
      %3014 = sbr.rel (0) target = $region65
    $region64: #{tpu_custom_call.1} parent=1 // pred_region
      %s3016 = ssub.s32 32, 32
      %3017 = vsyncadd [#allocation11], %s3016
      %s3019 = sshll.u32 [#allocation10], 4
      %s3020 = int_to_ptr.vmem [resolvable:$true] %s3019
      %3022 = dma.vmem_to_hbm [thread:$0]  %s3020, 32, %s15, [#allocation11]
    $region65: #{tpu_custom_call.1} parent=1 // pred_fallthru
      _
    // Predicated region
    $region66: #{tpu_custom_call.1} parent=1 // pred_check
      _
    $region67: #{tpu_custom_call.1} parent=1 // pred_check_branch
      %3024 = sbr.rel (0) target = $region69
    $region68: #{tpu_custom_call.1} parent=1 // pred_region
      %3025 = dma.done [#allocation3], 64
    $region69: #{tpu_custom_call.1} parent=1 // pred_fallthru
      _
    // Predicated region
    $region70: #{tpu_custom_call.1} parent=1 // pred_check
      _
    $region71: #{tpu_custom_call.1} parent=1 // pred_check_branch
      %3027 = sbr.rel (0) target = $region73
    $region72: #{tpu_custom_call.1} parent=1 // pred_region
      _
    $region73: #{tpu_custom_call.1} parent=1 // pred_fallthru
      _
    // Predicated region
    $region74: #{tpu_custom_call.1} parent=1 // pred_check
      _
    $region75: #{tpu_custom_call.1} parent=1 // pred_check_branch
      %3029 = sbr.rel (0) target = $region77
    $region76: #{tpu_custom_call.1} parent=1 // pred_region
      %3030 = dma.done [#allocation5], 64
    $region77: #{tpu_custom_call.1} parent=1 // pred_fallthru
      _
    // Predicated region
    $region78: #{tpu_custom_call.1} parent=1 // pred_check
      _
    $region79: #{tpu_custom_call.1} parent=1 // pred_check_branch
      %3032 = sbr.rel (0) target = $region81
    $region80: #{tpu_custom_call.1} parent=1 // pred_region
      %3033 = dma.done [#allocation5], 32
    $region81: #{tpu_custom_call.1} parent=1 // pred_fallthru
      _
    // Predicated region
    $region82: #{tpu_custom_call.1} parent=1 // pred_check
      _
    $region83: #{tpu_custom_call.1} parent=1 // pred_check_branch
      %3035 = sbr.rel (0) target = $region85
    $region84: #{tpu_custom_call.1} parent=1 // pred_region
      %3036 = dma.done [#allocation8], 1024
    $region85: #{tpu_custom_call.1} parent=1 // pred_fallthru
      _
    // Predicated region
    $region86: #{tpu_custom_call.1} parent=1 // pred_check
      _
    $region87: #{tpu_custom_call.1} parent=1 // pred_check_branch
      %3038 = sbr.rel (0) target = $region89
    $region88: #{tpu_custom_call.1} parent=1 // pred_region
      %3039 = dma.done [#allocation8], 32
    $region89: #{tpu_custom_call.1} parent=1 // pred_fallthru
      _
    // Predicated region
    $region90: #{tpu_custom_call.1} parent=1 // pred_check
      _
    $region91: #{tpu_custom_call.1} parent=1 // pred_check_branch
      %3041 = sbr.rel (0) target = $region93
    $region92: #{tpu_custom_call.1} parent=1 // pred_region
      %3042 = dma.done [#allocation11], 32
    $region93: #{tpu_custom_call.1} parent=1 // pred_fallthru
      _
    %3043 = vsyncpa [#allocation3], 1
    %3044 = vsyncpa [#allocation5], 1
    %3045 = vsyncpa [#allocation8], 1
    %3046 = vsyncpa [#allocation11], 1

</llo_original>
